<compile_context>
chip_gen: v7x
topology: tpu7x:2x2x1
jax: 0.10.0
libtpu: 0.0.40
codegen_flags: <defaults>
</compile_context>

<pallas_src>
import jax
import jax.numpy as jnp
from jax import lax
from jax.experimental import pallas as pl
from jax.experimental.pallas import tpu as pltpu

K_TAPS = 17
PAD = (K_TAPS - 1) // 2
BN_EPS = 1e-5
SPATIAL_LANES = 128  # spatial embedding (dim -> 3) zero-padded to a full lane tile


def nmp_block_kernel(
    x_ref, mask_ref,
    w1_ref, c1_ref,                      # conv1 (k=1) with BN1 folded
    w2_ref, c2_ref,                      # conv2 (k=17) as (K*D, D), BN2 folded
    ws_ref, bs_ref,                      # spatial embedding, padded to 128 lanes
    wm_ref, bm_ref,                      # message Linear
    wic_r_ref, wic_z_ref, wic_n_ref,     # GRU W_ih, x_conv half, per gate
    win_r_ref, win_z_ref, win_n_ref,     # GRU W_ih, x_nmp half, per gate
    whh_r_ref, whh_z_ref, whh_n_ref,     # GRU W_hh, per gate
    bi_r_ref, bi_z_ref, bi_n_ref,
    bh_r_ref, bh_z_ref, bh_n_ref,
    o_ref,
):
    f32 = jnp.float32
    bf16 = jnp.bfloat16
    Bb, N, D = x_ref.shape
    M = Bb * N

    # Node-wise work runs on a flattened (Bb*N, D) slab.
    x = x_ref[...].reshape(M, D)                 # f32
    xb = x.astype(bf16)

    # ---- BasicBlock: conv1 (k=1, BN1 folded) -> relu
    y = jnp.dot(xb, w1_ref[...], preferred_element_type=f32) + c1_ref[...]
    y = jnp.maximum(y, 0.0)                      # (M, D) f32

    # ---- conv2 (k=17, BN2 folded) as ONE im2col matmul.
    # Shifted copies come from pltpu.roll (XLU) + iota edge masks; masks also
    # prevent taps from crossing batch boundaries of the flattened slab.
    seq_pos = lax.broadcasted_iota(jnp.int32, (Bb, N, D), 1).reshape(M, D)
    pieces = []
    for k in range(K_TAPS):
        t = k - PAD                               # output row n reads y[n + t]
        if t == 0:
            shifted = y
        else:
            # == jnp.roll(y, PAD - k, axis=0): shifted[r] = y[(r + t) % M]
            shifted = pltpu.roll(y, (PAD - k) % M, axis=0)
        valid = (seq_pos + t >= 0) & (seq_pos + t < N)
        pieces.append(jnp.where(valid, shifted, 0.0))
    col = jnp.concatenate(pieces, axis=1).astype(bf16)          # (M, K*D)
    y2 = jnp.dot(col, w2_ref[...], preferred_element_type=f32) + c2_ref[...]
    x_conv = jnp.maximum(y2 + x, 0.0)                           # residual + relu

    # ---- spatial embedding -> Gaussian adjacency
    s = jnp.dot(xb, ws_ref[...], preferred_element_type=f32) + bs_ref[...]  # (M, 128)
    sb = s.astype(bf16).reshape(Bb, N, SPATIAL_LANES)
    gram = lax.dot_general(sb, sb, (((2,), (2,)), ((0,), (0,))),
                           preferred_element_type=f32)          # (Bb, N, N)
    # row/col squared norms = Gram diagonal (iota mask) -> no sublane<->lane transpose
    eye = (lax.broadcasted_iota(jnp.int32, (N, N), 0) ==
           lax.broadcasted_iota(jnp.int32, (N, N), 1)).astype(f32)
    gdiag = gram * eye
    row_sq = jnp.sum(gdiag, axis=2, keepdims=True)              # (Bb, N, 1)
    col_sq = jnp.sum(gdiag, axis=1, keepdims=True)              # (Bb, 1, N)
    dist = jnp.maximum(row_sq + col_sq - 2.0 * gram, 0.0)       # (Bb, N, N)
    adj = jnp.exp(-dist) * mask_ref[...].astype(f32)            # (Bb, N, N)

    # ---- message passing: x_nmp = A @ relu(Linear(x))
    msg = jnp.maximum(
        jnp.dot(xb, wm_ref[...], preferred_element_type=f32) + bm_ref[...], 0.0)
    x_nmp = lax.dot_general(adj.astype(bf16), msg.astype(bf16).reshape(Bb, N, D),
                            (((2,), (1,)), ((0,), (0,))),
                            preferred_element_type=f32).reshape(M, D)

    # ---- GRU update: hidden = x, input = [x_conv, x_nmp] (weights pre-split,
    # so no lane concat and no lane slicing at D offsets inside the kernel).
    xc = x_conv.astype(bf16)
    xn = x_nmp.astype(bf16)

    def gate_in(wc_ref, wn_ref, b_ref):
        return (jnp.dot(xc, wc_ref[...], preferred_element_type=f32)
                + jnp.dot(xn, wn_ref[...], preferred_element_type=f32)
                + b_ref[...])

    def gate_h(wh_ref, b_ref):
        return jnp.dot(xb, wh_ref[...], preferred_element_type=f32) + b_ref[...]

    r = jax.nn.sigmoid(gate_in(wic_r_ref, win_r_ref, bi_r_ref)
                       + gate_h(whh_r_ref, bh_r_ref))
    z = jax.nn.sigmoid(gate_in(wic_z_ref, win_z_ref, bi_z_ref)
                       + gate_h(whh_z_ref, bh_z_ref))
    n = jnp.tanh(gate_in(wic_n_ref, win_n_ref, bi_n_ref)
                 + r * gate_h(whh_n_ref, bh_n_ref))
    h_new = (1.0 - z) * n + z * x

    o_ref[...] = h_new.reshape(Bb, N, D).astype(o_ref.dtype)


def make_params(dim, key):
    """Deterministic f32 parameters matching the PyTorch module structure."""
    ks = list(jax.random.split(key, 20))
    f32 = jnp.float32

    def rnd(k, shape, scale=0.1):
        return (scale * jax.random.normal(k, shape)).astype(f32)

    p = {}
    p["w1"] = rnd(ks[0], (dim, dim))                 # conv1 (k=1), (D_in, D_out)
    p["g1"] = 1.0 + rnd(ks[1], (1, dim), 0.05)
    p["b1"] = rnd(ks[2], (1, dim))
    p["m1"] = rnd(ks[3], (1, dim))
    p["v1"] = 1.0 + jnp.abs(rnd(ks[4], (1, dim), 0.2))
    p["w2"] = rnd(ks[5], (K_TAPS, dim, dim), 0.05)   # conv2 (k=17), (K, D_in, D_out)
    p["g2"] = 1.0 + rnd(ks[6], (1, dim), 0.05)
    p["b2"] = rnd(ks[7], (1, dim))
    p["m2"] = rnd(ks[8], (1, dim))
    p["v2"] = 1.0 + jnp.abs(rnd(ks[9], (1, dim), 0.2))
    p["ws"] = rnd(ks[10], (dim, 3))                  # spatial embedding Linear(dim, 3)
    p["bs"] = rnd(ks[11], (1, 3))
    p["wm"] = rnd(ks[12], (dim, dim))                # message Linear(dim, dim)
    p["bm"] = rnd(ks[13], (1, dim))
    p["wi"] = rnd(ks[14], (2 * dim, 3 * dim))        # GRUCell W_ih^T, gates [r|z|n]
    p["bi"] = rnd(ks[15], (1, 3 * dim))
    p["wh"] = rnd(ks[16], (dim, 3 * dim))            # GRUCell W_hh^T
    p["bh"] = rnd(ks[17], (1, 3 * dim))
    return p


def prepare_params(p, dim):
    """Trace-time (free) parameter prep: fold eval-mode BN into the conv
    weights, flatten conv2 for the im2col dot, pad the 3-wide spatial
    embedding to 128 lanes, split GRU weights per gate / per input half, and
    cast every MXU weight operand to bfloat16."""
    f32, bf16 = jnp.float32, jnp.bfloat16
    D = dim

    inv1 = p["g1"] * lax.rsqrt(p["v1"] + BN_EPS)                   # (1, D)
    w1 = (p["w1"] * inv1).astype(bf16)
    c1 = (p["b1"] - p["m1"] * inv1).astype(f32)

    inv2 = p["g2"] * lax.rsqrt(p["v2"] + BN_EPS)                   # (1, D)
    w2 = (p["w2"] * inv2.reshape(1, 1, D)).reshape(K_TAPS * D, D).astype(bf16)
    c2 = (p["b2"] - p["m2"] * inv2).astype(f32)

    ws = jnp.zeros((D, SPATIAL_LANES), f32).at[:, :3].set(p["ws"]).astype(bf16)
    bs = jnp.zeros((1, SPATIAL_LANES), f32).at[:, :3].set(p["bs"])

    wm = p["wm"].astype(bf16)
    bm = p["bm"].astype(f32)

    wic, win = p["wi"][:D, :], p["wi"][D:, :]          # x_conv / x_nmp halves

    def gates(w):                                      # (D, 3D) -> 3 x (D, D) bf16
        return [w[:, g * D:(g + 1) * D].astype(bf16) for g in range(3)]

    wic_r, wic_z, wic_n = gates(wic)
    win_r, win_z, win_n = gates(win)
    whh_r, whh_z, whh_n = gates(p["wh"])
    bi_r, bi_z, bi_n = [p["bi"][:, g * D:(g + 1) * D].astype(f32) for g in range(3)]
    bh_r, bh_z, bh_n = [p["bh"][:, g * D:(g + 1) * D].astype(f32) for g in range(3)]

    return [w1, c1, w2, c2, ws, bs, wm, bm,
            wic_r, wic_z, wic_n, win_r, win_z, win_n,
            whh_r, whh_z, whh_n,
            bi_r, bi_z, bi_n, bh_r, bh_z, bh_n]


def _pick_batch_block(batch):
    for bb in (4, 2, 1):
        if batch % bb == 0:
            return bb
    return 1


@jax.jit
def conv_nmp_block(x, mask, params):
    B, N, D = x.shape
    Bb = _pick_batch_block(B)
    plist = prepare_params(params, D)

    def param_spec(p):
        return pl.BlockSpec(p.shape, lambda g: (0, 0))    # all params are 2D, replicated

    in_specs = (
        [pl.BlockSpec((Bb, N, D), lambda g: (g, 0, 0)),   # x
         pl.BlockSpec((Bb, N, N), lambda g: (g, 0, 0))]   # mask (bf16 -> half the DMA bytes)
        + [param_spec(p) for p in plist]
    )
    out_spec = pl.BlockSpec((Bb, N, D), lambda g: (g, 0, 0))

    # NOTE: for large N the (N, N) adjacency should additionally be row-tiled
    # (extra grid axis over N blocks) to stay inside v7x's 64 MiB VMEM; at the
    # shapes used here the per-step working set is tiny.
    return pl.pallas_call(
        nmp_block_kernel,
        out_shape=jax.ShapeDtypeStruct((B, N, D), jnp.float32),
        grid=(B // Bb,),
        in_specs=in_specs,
        out_specs=out_spec,
        compiler_params=pltpu.CompilerParams(
            dimension_semantics=("parallel",),
            vmem_limit_bytes=64 * 1024 * 1024),
    )(x.astype(jnp.float32), mask.astype(jnp.bfloat16), *plist)


if __name__ == "__main__":
    B, N, D = 2, 16, 32
    key = jax.random.PRNGKey(0)
    kx, kmask, kparam = jax.random.split(key, 3)

    x = jax.random.normal(kx, (B, N, D), dtype=jnp.float32)
    mask = (jax.random.uniform(kmask, (B, N, N)) > 0.3).astype(jnp.float32)
    params = make_params(D, kparam)

    out = conv_nmp_block(x, mask, params)
    jax.block_until_ready(out)
    assert out.shape == (B, N, D)
    assert bool(jnp.all(jnp.isfinite(out)))
    print("KERNEL_OK")
</pallas_src>

<mosaic_0001>
module attributes {stable_mosaic.version = 11 : i64} {
  func.func @nmp_block_kernel(%arg0: i32, %arg1: memref<2x16x32xf32, #tpu.memory_space<vmem>>, %arg2: memref<2x16x16xbf16, #tpu.memory_space<vmem>>, %arg3: memref<32x32xbf16, #tpu.memory_space<vmem>>, %arg4: memref<1x32xf32, #tpu.memory_space<vmem>>, %arg5: memref<544x32xbf16, #tpu.memory_space<vmem>>, %arg6: memref<1x32xf32, #tpu.memory_space<vmem>>, %arg7: memref<32x128xbf16, #tpu.memory_space<vmem>>, %arg8: memref<1x128xf32, #tpu.memory_space<vmem>>, %arg9: memref<32x32xbf16, #tpu.memory_space<vmem>>, %arg10: memref<1x32xf32, #tpu.memory_space<vmem>>, %arg11: memref<32x32xbf16, #tpu.memory_space<vmem>>, %arg12: memref<32x32xbf16, #tpu.memory_space<vmem>>, %arg13: memref<32x32xbf16, #tpu.memory_space<vmem>>, %arg14: memref<32x32xbf16, #tpu.memory_space<vmem>>, %arg15: memref<32x32xbf16, #tpu.memory_space<vmem>>, %arg16: memref<32x32xbf16, #tpu.memory_space<vmem>>, %arg17: memref<32x32xbf16, #tpu.memory_space<vmem>>, %arg18: memref<32x32xbf16, #tpu.memory_space<vmem>>, %arg19: memref<32x32xbf16, #tpu.memory_space<vmem>>, %arg20: memref<1x32xf32, #tpu.memory_space<vmem>>, %arg21: memref<1x32xf32, #tpu.memory_space<vmem>>, %arg22: memref<1x32xf32, #tpu.memory_space<vmem>>, %arg23: memref<1x32xf32, #tpu.memory_space<vmem>>, %arg24: memref<1x32xf32, #tpu.memory_space<vmem>>, %arg25: memref<1x32xf32, #tpu.memory_space<vmem>>, %arg26: memref<2x16x32xf32, #tpu.memory_space<vmem>>) attributes {dimension_semantics = [#tpu.dimension_semantics<parallel>], iteration_bounds = array<i64: 1>, scalar_prefetch = 0 : i64, scratch_operands = 0 : i64, tpu.core_type = #tpu.core_type<tc>, window_params = [{transform_indices = @transform_0, window_bounds = array<i64: 2, 16, 32>}, {transform_indices = @transform_1, window_bounds = array<i64: 2, 16, 16>}, {pipeline_mode = #tpu.pipeline_mode<synchronous>, transform_indices = @transform_2, window_bounds = array<i64: 32, 32>}, {pipeline_mode = #tpu.pipeline_mode<synchronous>, transform_indices = @transform_3, window_bounds = array<i64: 1, 32>}, {pipeline_mode = #tpu.pipeline_mode<synchronous>, transform_indices = @transform_4, window_bounds = array<i64: 544, 32>}, {pipeline_mode = #tpu.pipeline_mode<synchronous>, transform_indices = @transform_5, window_bounds = array<i64: 1, 32>}, {pipeline_mode = #tpu.pipeline_mode<synchronous>, transform_indices = @transform_6, window_bounds = array<i64: 32, 128>}, {pipeline_mode = #tpu.pipeline_mode<synchronous>, transform_indices = @transform_7, window_bounds = array<i64: 1, 128>}, {pipeline_mode = #tpu.pipeline_mode<synchronous>, transform_indices = @transform_8, window_bounds = array<i64: 32, 32>}, {pipeline_mode = #tpu.pipeline_mode<synchronous>, transform_indices = @transform_9, window_bounds = array<i64: 1, 32>}, {pipeline_mode = #tpu.pipeline_mode<synchronous>, transform_indices = @transform_10, window_bounds = array<i64: 32, 32>}, {pipeline_mode = #tpu.pipeline_mode<synchronous>, transform_indices = @transform_11, window_bounds = array<i64: 32, 32>}, {pipeline_mode = #tpu.pipeline_mode<synchronous>, transform_indices = @transform_12, window_bounds = array<i64: 32, 32>}, {pipeline_mode = #tpu.pipeline_mode<synchronous>, transform_indices = @transform_13, window_bounds = array<i64: 32, 32>}, {pipeline_mode = #tpu.pipeline_mode<synchronous>, transform_indices = @transform_14, window_bounds = array<i64: 32, 32>}, {pipeline_mode = #tpu.pipeline_mode<synchronous>, transform_indices = @transform_15, window_bounds = array<i64: 32, 32>}, {pipeline_mode = #tpu.pipeline_mode<synchronous>, transform_indices = @transform_16, window_bounds = array<i64: 32, 32>}, {pipeline_mode = #tpu.pipeline_mode<synchronous>, transform_indices = @transform_17, window_bounds = array<i64: 32, 32>}, {pipeline_mode = #tpu.pipeline_mode<synchronous>, transform_indices = @transform_18, window_bounds = array<i64: 32, 32>}, {pipeline_mode = #tpu.pipeline_mode<synchronous>, transform_indices = @transform_19, window_bounds = array<i64: 1, 32>}, {pipeline_mode = #tpu.pipeline_mode<synchronous>, transform_indices = @transform_20, window_bounds = array<i64: 1, 32>}, {pipeline_mode = #tpu.pipeline_mode<synchronous>, transform_indices = @transform_21, window_bounds = array<i64: 1, 32>}, {pipeline_mode = #tpu.pipeline_mode<synchronous>, transform_indices = @transform_22, window_bounds = array<i64: 1, 32>}, {pipeline_mode = #tpu.pipeline_mode<synchronous>, transform_indices = @transform_23, window_bounds = array<i64: 1, 32>}, {pipeline_mode = #tpu.pipeline_mode<synchronous>, transform_indices = @transform_24, window_bounds = array<i64: 1, 32>}, {transform_indices = @transform_25, window_bounds = array<i64: 2, 16, 32>}]} {
    %c0 = arith.constant 0 : index
    %c0_0 = arith.constant 0 : index
    %c0_1 = arith.constant 0 : index
    %0 = vector.load %arg1[%c0, %c0_0, %c0_1] : memref<2x16x32xf32, #tpu.memory_space<vmem>>, vector<2x16x32xf32>
    %1 = vector.shape_cast %0 : vector<2x16x32xf32> to vector<32x32xf32>
    %2 = arith.truncf %1 : vector<32x32xf32> to vector<32x32xbf16>
    %c0_2 = arith.constant 0 : index
    %c0_3 = arith.constant 0 : index
    %3 = vector.load %arg3[%c0_2, %c0_3] : memref<32x32xbf16, #tpu.memory_space<vmem>>, vector<32x32xbf16>
    %cst = arith.constant dense<0.000000e+00> : vector<32x32xf32>
    %4 = tpu.matmul %2, %3, %cst {dimension_numbers = #tpu.dot_dimension_numbers<[1], [0], [0], [1], [0, 0, 1, 1], [], []>} : vector<32x32xbf16>, vector<32x32xbf16>, vector<32x32xf32> -> vector<32x32xf32>
    %c0_4 = arith.constant 0 : index
    %c0_5 = arith.constant 0 : index
    %5 = vector.load %arg4[%c0_4, %c0_5] : memref<1x32xf32, #tpu.memory_space<vmem>>, vector<1x32xf32>
    %6 = vector.broadcast %5 : vector<1x32xf32> to vector<32x32xf32>
    %7 = arith.addf %4, %6 : vector<32x32xf32>
    %cst_6 = arith.constant 0.000000e+00 : f32
    %8 = vector.broadcast %cst_6 : f32 to vector<32x32xf32>
    %9 = arith.maximumf %7, %8 : vector<32x32xf32>
    %10 = tpu.iota {dimensions = array<i32: 1>} : vector<2x16x32xi32>
    %11 = vector.shape_cast %10 : vector<2x16x32xi32> to vector<32x32xi32>
    %c8_i32 = arith.constant 8 : i32
    %12 = tpu.dynamic_rotate %9 by %c8_i32 dim 0 : vector<32x32xf32>, i32 -> vector<32x32xf32>
    %c-8_i32 = arith.constant -8 : i32
    %13 = vector.broadcast %c-8_i32 : i32 to vector<32x32xi32>
    %14 = arith.addi %11, %13 : vector<32x32xi32>
    %c0_i32 = arith.constant 0 : i32
    %15 = vector.broadcast %c0_i32 : i32 to vector<32x32xi32>
    %16 = arith.cmpi sge, %14, %15 : vector<32x32xi32>
    %c-8_i32_7 = arith.constant -8 : i32
    %17 = vector.broadcast %c-8_i32_7 : i32 to vector<32x32xi32>
    %18 = arith.addi %11, %17 : vector<32x32xi32>
    %c16_i32 = arith.constant 16 : i32
    %19 = vector.broadcast %c16_i32 : i32 to vector<32x32xi32>
    %20 = arith.cmpi slt, %18, %19 : vector<32x32xi32>
    %21 = arith.andi %16, %20 : vector<32x32xi1>
    %cst_8 = arith.constant 0.000000e+00 : f32
    %22 = vector.broadcast %cst_8 : f32 to vector<32x32xf32>
    %23 = arith.select %21, %12, %22 : vector<32x32xi1>, vector<32x32xf32>
    %c7_i32 = arith.constant 7 : i32
    %24 = tpu.dynamic_rotate %9 by %c7_i32 dim 0 : vector<32x32xf32>, i32 -> vector<32x32xf32>
    %c-7_i32 = arith.constant -7 : i32
    %25 = vector.broadcast %c-7_i32 : i32 to vector<32x32xi32>
    %26 = arith.addi %11, %25 : vector<32x32xi32>
    %c0_i32_9 = arith.constant 0 : i32
    %27 = vector.broadcast %c0_i32_9 : i32 to vector<32x32xi32>
    %28 = arith.cmpi sge, %26, %27 : vector<32x32xi32>
    %c-7_i32_10 = arith.constant -7 : i32
    %29 = vector.broadcast %c-7_i32_10 : i32 to vector<32x32xi32>
    %30 = arith.addi %11, %29 : vector<32x32xi32>
    %c16_i32_11 = arith.constant 16 : i32
    %31 = vector.broadcast %c16_i32_11 : i32 to vector<32x32xi32>
    %32 = arith.cmpi slt, %30, %31 : vector<32x32xi32>
    %33 = arith.andi %28, %32 : vector<32x32xi1>
    %cst_12 = arith.constant 0.000000e+00 : f32
    %34 = vector.broadcast %cst_12 : f32 to vector<32x32xf32>
    %35 = arith.select %33, %24, %34 : vector<32x32xi1>, vector<32x32xf32>
    %c6_i32 = arith.constant 6 : i32
    %36 = tpu.dynamic_rotate %9 by %c6_i32 dim 0 : vector<32x32xf32>, i32 -> vector<32x32xf32>
    %c-6_i32 = arith.constant -6 : i32
    %37 = vector.broadcast %c-6_i32 : i32 to vector<32x32xi32>
    %38 = arith.addi %11, %37 : vector<32x32xi32>
    %c0_i32_13 = arith.constant 0 : i32
    %39 = vector.broadcast %c0_i32_13 : i32 to vector<32x32xi32>
    %40 = arith.cmpi sge, %38, %39 : vector<32x32xi32>
    %c-6_i32_14 = arith.constant -6 : i32
    %41 = vector.broadcast %c-6_i32_14 : i32 to vector<32x32xi32>
    %42 = arith.addi %11, %41 : vector<32x32xi32>
    %c16_i32_15 = arith.constant 16 : i32
    %43 = vector.broadcast %c16_i32_15 : i32 to vector<32x32xi32>
    %44 = arith.cmpi slt, %42, %43 : vector<32x32xi32>
    %45 = arith.andi %40, %44 : vector<32x32xi1>
    %cst_16 = arith.constant 0.000000e+00 : f32
    %46 = vector.broadcast %cst_16 : f32 to vector<32x32xf32>
    %47 = arith.select %45, %36, %46 : vector<32x32xi1>, vector<32x32xf32>
    %c5_i32 = arith.constant 5 : i32
    %48 = tpu.dynamic_rotate %9 by %c5_i32 dim 0 : vector<32x32xf32>, i32 -> vector<32x32xf32>
    %c-5_i32 = arith.constant -5 : i32
    %49 = vector.broadcast %c-5_i32 : i32 to vector<32x32xi32>
    %50 = arith.addi %11, %49 : vector<32x32xi32>
    %c0_i32_17 = arith.constant 0 : i32
    %51 = vector.broadcast %c0_i32_17 : i32 to vector<32x32xi32>
    %52 = arith.cmpi sge, %50, %51 : vector<32x32xi32>
    %c-5_i32_18 = arith.constant -5 : i32
    %53 = vector.broadcast %c-5_i32_18 : i32 to vector<32x32xi32>
    %54 = arith.addi %11, %53 : vector<32x32xi32>
    %c16_i32_19 = arith.constant 16 : i32
    %55 = vector.broadcast %c16_i32_19 : i32 to vector<32x32xi32>
    %56 = arith.cmpi slt, %54, %55 : vector<32x32xi32>
    %57 = arith.andi %52, %56 : vector<32x32xi1>
    %cst_20 = arith.constant 0.000000e+00 : f32
    %58 = vector.broadcast %cst_20 : f32 to vector<32x32xf32>
    %59 = arith.select %57, %48, %58 : vector<32x32xi1>, vector<32x32xf32>
    %c4_i32 = arith.constant 4 : i32
    %60 = tpu.dynamic_rotate %9 by %c4_i32 dim 0 : vector<32x32xf32>, i32 -> vector<32x32xf32>
    %c-4_i32 = arith.constant -4 : i32
    %61 = vector.broadcast %c-4_i32 : i32 to vector<32x32xi32>
    %62 = arith.addi %11, %61 : vector<32x32xi32>
    %c0_i32_21 = arith.constant 0 : i32
    %63 = vector.broadcast %c0_i32_21 : i32 to vector<32x32xi32>
    %64 = arith.cmpi sge, %62, %63 : vector<32x32xi32>
    %c-4_i32_22 = arith.constant -4 : i32
    %65 = vector.broadcast %c-4_i32_22 : i32 to vector<32x32xi32>
    %66 = arith.addi %11, %65 : vector<32x32xi32>
    %c16_i32_23 = arith.constant 16 : i32
    %67 = vector.broadcast %c16_i32_23 : i32 to vector<32x32xi32>
    %68 = arith.cmpi slt, %66, %67 : vector<32x32xi32>
    %69 = arith.andi %64, %68 : vector<32x32xi1>
    %cst_24 = arith.constant 0.000000e+00 : f32
    %70 = vector.broadcast %cst_24 : f32 to vector<32x32xf32>
    %71 = arith.select %69, %60, %70 : vector<32x32xi1>, vector<32x32xf32>
    %c3_i32 = arith.constant 3 : i32
    %72 = tpu.dynamic_rotate %9 by %c3_i32 dim 0 : vector<32x32xf32>, i32 -> vector<32x32xf32>
    %c-3_i32 = arith.constant -3 : i32
    %73 = vector.broadcast %c-3_i32 : i32 to vector<32x32xi32>
    %74 = arith.addi %11, %73 : vector<32x32xi32>
    %c0_i32_25 = arith.constant 0 : i32
    %75 = vector.broadcast %c0_i32_25 : i32 to vector<32x32xi32>
    %76 = arith.cmpi sge, %74, %75 : vector<32x32xi32>
    %c-3_i32_26 = arith.constant -3 : i32
    %77 = vector.broadcast %c-3_i32_26 : i32 to vector<32x32xi32>
    %78 = arith.addi %11, %77 : vector<32x32xi32>
    %c16_i32_27 = arith.constant 16 : i32
    %79 = vector.broadcast %c16_i32_27 : i32 to vector<32x32xi32>
    %80 = arith.cmpi slt, %78, %79 : vector<32x32xi32>
    %81 = arith.andi %76, %80 : vector<32x32xi1>
    %cst_28 = arith.constant 0.000000e+00 : f32
    %82 = vector.broadcast %cst_28 : f32 to vector<32x32xf32>
    %83 = arith.select %81, %72, %82 : vector<32x32xi1>, vector<32x32xf32>
    %c2_i32 = arith.constant 2 : i32
    %84 = tpu.dynamic_rotate %9 by %c2_i32 dim 0 : vector<32x32xf32>, i32 -> vector<32x32xf32>
    %c-2_i32 = arith.constant -2 : i32
    %85 = vector.broadcast %c-2_i32 : i32 to vector<32x32xi32>
    %86 = arith.addi %11, %85 : vector<32x32xi32>
    %c0_i32_29 = arith.constant 0 : i32
    %87 = vector.broadcast %c0_i32_29 : i32 to vector<32x32xi32>
    %88 = arith.cmpi sge, %86, %87 : vector<32x32xi32>
    %c-2_i32_30 = arith.constant -2 : i32
    %89 = vector.broadcast %c-2_i32_30 : i32 to vector<32x32xi32>
    %90 = arith.addi %11, %89 : vector<32x32xi32>
    %c16_i32_31 = arith.constant 16 : i32
    %91 = vector.broadcast %c16_i32_31 : i32 to vector<32x32xi32>
    %92 = arith.cmpi slt, %90, %91 : vector<32x32xi32>
    %93 = arith.andi %88, %92 : vector<32x32xi1>
    %cst_32 = arith.constant 0.000000e+00 : f32
    %94 = vector.broadcast %cst_32 : f32 to vector<32x32xf32>
    %95 = arith.select %93, %84, %94 : vector<32x32xi1>, vector<32x32xf32>
    %c1_i32 = arith.constant 1 : i32
    %96 = tpu.dynamic_rotate %9 by %c1_i32 dim 0 : vector<32x32xf32>, i32 -> vector<32x32xf32>
    %c-1_i32 = arith.constant -1 : i32
    %97 = vector.broadcast %c-1_i32 : i32 to vector<32x32xi32>
    %98 = arith.addi %11, %97 : vector<32x32xi32>
    %c0_i32_33 = arith.constant 0 : i32
    %99 = vector.broadcast %c0_i32_33 : i32 to vector<32x32xi32>
    %100 = arith.cmpi sge, %98, %99 : vector<32x32xi32>
    %c-1_i32_34 = arith.constant -1 : i32
    %101 = vector.broadcast %c-1_i32_34 : i32 to vector<32x32xi32>
    %102 = arith.addi %11, %101 : vector<32x32xi32>
    %c16_i32_35 = arith.constant 16 : i32
    %103 = vector.broadcast %c16_i32_35 : i32 to vector<32x32xi32>
    %104 = arith.cmpi slt, %102, %103 : vector<32x32xi32>
    %105 = arith.andi %100, %104 : vector<32x32xi1>
    %cst_36 = arith.constant 0.000000e+00 : f32
    %106 = vector.broadcast %cst_36 : f32 to vector<32x32xf32>
    %107 = arith.select %105, %96, %106 : vector<32x32xi1>, vector<32x32xf32>
    %c0_i32_37 = arith.constant 0 : i32
    %108 = vector.broadcast %c0_i32_37 : i32 to vector<32x32xi32>
    %109 = arith.addi %11, %108 : vector<32x32xi32>
    %c0_i32_38 = arith.constant 0 : i32
    %110 = vector.broadcast %c0_i32_38 : i32 to vector<32x32xi32>
    %111 = arith.cmpi sge, %109, %110 : vector<32x32xi32>
    %c0_i32_39 = arith.constant 0 : i32
    %112 = vector.broadcast %c0_i32_39 : i32 to vector<32x32xi32>
    %113 = arith.addi %11, %112 : vector<32x32xi32>
    %c16_i32_40 = arith.constant 16 : i32
    %114 = vector.broadcast %c16_i32_40 : i32 to vector<32x32xi32>
    %115 = arith.cmpi slt, %113, %114 : vector<32x32xi32>
    %116 = arith.andi %111, %115 : vector<32x32xi1>
    %cst_41 = arith.constant 0.000000e+00 : f32
    %117 = vector.broadcast %cst_41 : f32 to vector<32x32xf32>
    %118 = arith.select %116, %9, %117 : vector<32x32xi1>, vector<32x32xf32>
    %c31_i32 = arith.constant 31 : i32
    %119 = tpu.dynamic_rotate %9 by %c31_i32 dim 0 : vector<32x32xf32>, i32 -> vector<32x32xf32>
    %c1_i32_42 = arith.constant 1 : i32
    %120 = vector.broadcast %c1_i32_42 : i32 to vector<32x32xi32>
    %121 = arith.addi %11, %120 : vector<32x32xi32>
    %c0_i32_43 = arith.constant 0 : i32
    %122 = vector.broadcast %c0_i32_43 : i32 to vector<32x32xi32>
    %123 = arith.cmpi sge, %121, %122 : vector<32x32xi32>
    %c1_i32_44 = arith.constant 1 : i32
    %124 = vector.broadcast %c1_i32_44 : i32 to vector<32x32xi32>
    %125 = arith.addi %11, %124 : vector<32x32xi32>
    %c16_i32_45 = arith.constant 16 : i32
    %126 = vector.broadcast %c16_i32_45 : i32 to vector<32x32xi32>
    %127 = arith.cmpi slt, %125, %126 : vector<32x32xi32>
    %128 = arith.andi %123, %127 : vector<32x32xi1>
    %cst_46 = arith.constant 0.000000e+00 : f32
    %129 = vector.broadcast %cst_46 : f32 to vector<32x32xf32>
    %130 = arith.select %128, %119, %129 : vector<32x32xi1>, vector<32x32xf32>
    %c30_i32 = arith.constant 30 : i32
    %131 = tpu.dynamic_rotate %9 by %c30_i32 dim 0 : vector<32x32xf32>, i32 -> vector<32x32xf32>
    %c2_i32_47 = arith.constant 2 : i32
    %132 = vector.broadcast %c2_i32_47 : i32 to vector<32x32xi32>
    %133 = arith.addi %11, %132 : vector<32x32xi32>
    %c0_i32_48 = arith.constant 0 : i32
    %134 = vector.broadcast %c0_i32_48 : i32 to vector<32x32xi32>
    %135 = arith.cmpi sge, %133, %134 : vector<32x32xi32>
    %c2_i32_49 = arith.constant 2 : i32
    %136 = vector.broadcast %c2_i32_49 : i32 to vector<32x32xi32>
    %137 = arith.addi %11, %136 : vector<32x32xi32>
    %c16_i32_50 = arith.constant 16 : i32
    %138 = vector.broadcast %c16_i32_50 : i32 to vector<32x32xi32>
    %139 = arith.cmpi slt, %137, %138 : vector<32x32xi32>
    %140 = arith.andi %135, %139 : vector<32x32xi1>
    %cst_51 = arith.constant 0.000000e+00 : f32
    %141 = vector.broadcast %cst_51 : f32 to vector<32x32xf32>
    %142 = arith.select %140, %131, %141 : vector<32x32xi1>, vector<32x32xf32>
    %c29_i32 = arith.constant 29 : i32
    %143 = tpu.dynamic_rotate %9 by %c29_i32 dim 0 : vector<32x32xf32>, i32 -> vector<32x32xf32>
    %c3_i32_52 = arith.constant 3 : i32
    %144 = vector.broadcast %c3_i32_52 : i32 to vector<32x32xi32>
    %145 = arith.addi %11, %144 : vector<32x32xi32>
    %c0_i32_53 = arith.constant 0 : i32
    %146 = vector.broadcast %c0_i32_53 : i32 to vector<32x32xi32>
    %147 = arith.cmpi sge, %145, %146 : vector<32x32xi32>
    %c3_i32_54 = arith.constant 3 : i32
    %148 = vector.broadcast %c3_i32_54 : i32 to vector<32x32xi32>
    %149 = arith.addi %11, %148 : vector<32x32xi32>
    %c16_i32_55 = arith.constant 16 : i32
    %150 = vector.broadcast %c16_i32_55 : i32 to vector<32x32xi32>
    %151 = arith.cmpi slt, %149, %150 : vector<32x32xi32>
    %152 = arith.andi %147, %151 : vector<32x32xi1>
    %cst_56 = arith.constant 0.000000e+00 : f32
    %153 = vector.broadcast %cst_56 : f32 to vector<32x32xf32>
    %154 = arith.select %152, %143, %153 : vector<32x32xi1>, vector<32x32xf32>
    %c28_i32 = arith.constant 28 : i32
    %155 = tpu.dynamic_rotate %9 by %c28_i32 dim 0 : vector<32x32xf32>, i32 -> vector<32x32xf32>
    %c4_i32_57 = arith.constant 4 : i32
    %156 = vector.broadcast %c4_i32_57 : i32 to vector<32x32xi32>
    %157 = arith.addi %11, %156 : vector<32x32xi32>
    %c0_i32_58 = arith.constant 0 : i32
    %158 = vector.broadcast %c0_i32_58 : i32 to vector<32x32xi32>
    %159 = arith.cmpi sge, %157, %158 : vector<32x32xi32>
    %c4_i32_59 = arith.constant 4 : i32
    %160 = vector.broadcast %c4_i32_59 : i32 to vector<32x32xi32>
    %161 = arith.addi %11, %160 : vector<32x32xi32>
    %c16_i32_60 = arith.constant 16 : i32
    %162 = vector.broadcast %c16_i32_60 : i32 to vector<32x32xi32>
    %163 = arith.cmpi slt, %161, %162 : vector<32x32xi32>
    %164 = arith.andi %159, %163 : vector<32x32xi1>
    %cst_61 = arith.constant 0.000000e+00 : f32
    %165 = vector.broadcast %cst_61 : f32 to vector<32x32xf32>
    %166 = arith.select %164, %155, %165 : vector<32x32xi1>, vector<32x32xf32>
    %c27_i32 = arith.constant 27 : i32
    %167 = tpu.dynamic_rotate %9 by %c27_i32 dim 0 : vector<32x32xf32>, i32 -> vector<32x32xf32>
    %c5_i32_62 = arith.constant 5 : i32
    %168 = vector.broadcast %c5_i32_62 : i32 to vector<32x32xi32>
    %169 = arith.addi %11, %168 : vector<32x32xi32>
    %c0_i32_63 = arith.constant 0 : i32
    %170 = vector.broadcast %c0_i32_63 : i32 to vector<32x32xi32>
    %171 = arith.cmpi sge, %169, %170 : vector<32x32xi32>
    %c5_i32_64 = arith.constant 5 : i32
    %172 = vector.broadcast %c5_i32_64 : i32 to vector<32x32xi32>
    %173 = arith.addi %11, %172 : vector<32x32xi32>
    %c16_i32_65 = arith.constant 16 : i32
    %174 = vector.broadcast %c16_i32_65 : i32 to vector<32x32xi32>
    %175 = arith.cmpi slt, %173, %174 : vector<32x32xi32>
    %176 = arith.andi %171, %175 : vector<32x32xi1>
    %cst_66 = arith.constant 0.000000e+00 : f32
    %177 = vector.broadcast %cst_66 : f32 to vector<32x32xf32>
    %178 = arith.select %176, %167, %177 : vector<32x32xi1>, vector<32x32xf32>
    %c26_i32 = arith.constant 26 : i32
    %179 = tpu.dynamic_rotate %9 by %c26_i32 dim 0 : vector<32x32xf32>, i32 -> vector<32x32xf32>
    %c6_i32_67 = arith.constant 6 : i32
    %180 = vector.broadcast %c6_i32_67 : i32 to vector<32x32xi32>
    %181 = arith.addi %11, %180 : vector<32x32xi32>
    %c0_i32_68 = arith.constant 0 : i32
    %182 = vector.broadcast %c0_i32_68 : i32 to vector<32x32xi32>
    %183 = arith.cmpi sge, %181, %182 : vector<32x32xi32>
    %c6_i32_69 = arith.constant 6 : i32
    %184 = vector.broadcast %c6_i32_69 : i32 to vector<32x32xi32>
    %185 = arith.addi %11, %184 : vector<32x32xi32>
    %c16_i32_70 = arith.constant 16 : i32
    %186 = vector.broadcast %c16_i32_70 : i32 to vector<32x32xi32>
    %187 = arith.cmpi slt, %185, %186 : vector<32x32xi32>
    %188 = arith.andi %183, %187 : vector<32x32xi1>
    %cst_71 = arith.constant 0.000000e+00 : f32
    %189 = vector.broadcast %cst_71 : f32 to vector<32x32xf32>
    %190 = arith.select %188, %179, %189 : vector<32x32xi1>, vector<32x32xf32>
    %c25_i32 = arith.constant 25 : i32
    %191 = tpu.dynamic_rotate %9 by %c25_i32 dim 0 : vector<32x32xf32>, i32 -> vector<32x32xf32>
    %c7_i32_72 = arith.constant 7 : i32
    %192 = vector.broadcast %c7_i32_72 : i32 to vector<32x32xi32>
    %193 = arith.addi %11, %192 : vector<32x32xi32>
    %c0_i32_73 = arith.constant 0 : i32
    %194 = vector.broadcast %c0_i32_73 : i32 to vector<32x32xi32>
    %195 = arith.cmpi sge, %193, %194 : vector<32x32xi32>
    %c7_i32_74 = arith.constant 7 : i32
    %196 = vector.broadcast %c7_i32_74 : i32 to vector<32x32xi32>
    %197 = arith.addi %11, %196 : vector<32x32xi32>
    %c16_i32_75 = arith.constant 16 : i32
    %198 = vector.broadcast %c16_i32_75 : i32 to vector<32x32xi32>
    %199 = arith.cmpi slt, %197, %198 : vector<32x32xi32>
    %200 = arith.andi %195, %199 : vector<32x32xi1>
    %cst_76 = arith.constant 0.000000e+00 : f32
    %201 = vector.broadcast %cst_76 : f32 to vector<32x32xf32>
    %202 = arith.select %200, %191, %201 : vector<32x32xi1>, vector<32x32xf32>
    %c24_i32 = arith.constant 24 : i32
    %203 = tpu.dynamic_rotate %9 by %c24_i32 dim 0 : vector<32x32xf32>, i32 -> vector<32x32xf32>
    %c8_i32_77 = arith.constant 8 : i32
    %204 = vector.broadcast %c8_i32_77 : i32 to vector<32x32xi32>
    %205 = arith.addi %11, %204 : vector<32x32xi32>
    %c0_i32_78 = arith.constant 0 : i32
    %206 = vector.broadcast %c0_i32_78 : i32 to vector<32x32xi32>
    %207 = arith.cmpi sge, %205, %206 : vector<32x32xi32>
    %c8_i32_79 = arith.constant 8 : i32
    %208 = vector.broadcast %c8_i32_79 : i32 to vector<32x32xi32>
    %209 = arith.addi %11, %208 : vector<32x32xi32>
    %c16_i32_80 = arith.constant 16 : i32
    %210 = vector.broadcast %c16_i32_80 : i32 to vector<32x32xi32>
    %211 = arith.cmpi slt, %209, %210 : vector<32x32xi32>
    %212 = arith.andi %207, %211 : vector<32x32xi1>
    %cst_81 = arith.constant 0.000000e+00 : f32
    %213 = vector.broadcast %cst_81 : f32 to vector<32x32xf32>
    %214 = arith.select %212, %203, %213 : vector<32x32xi1>, vector<32x32xf32>
    %215 = tpu.concatenate %23, %35, %47, %59, %71, %83, %95, %107, %118, %130, %142, %154, %166, %178, %190, %202 in 1 : vector<32x32xf32>, vector<32x32xf32>, vector<32x32xf32>, vector<32x32xf32>, vector<32x32xf32>, vector<32x32xf32>, vector<32x32xf32>, vector<32x32xf32>, vector<32x32xf32>, vector<32x32xf32>, vector<32x32xf32>, vector<32x32xf32>, vector<32x32xf32>, vector<32x32xf32>, vector<32x32xf32>, vector<32x32xf32> -> vector<32x512xf32>
    %216 = tpu.concatenate %215, %214 in 1 : vector<32x512xf32>, vector<32x32xf32> -> vector<32x544xf32>
    %217 = arith.truncf %216 : vector<32x544xf32> to vector<32x544xbf16>
    %c0_82 = arith.constant 0 : index
    %c0_83 = arith.constant 0 : index
    %218 = vector.load %arg5[%c0_82, %c0_83] : memref<544x32xbf16, #tpu.memory_space<vmem>>, vector<544x32xbf16>
    %cst_84 = arith.constant dense<0.000000e+00> : vector<32x32xf32>
    %219 = tpu.matmul %217, %218, %cst_84 {dimension_numbers = #tpu.dot_dimension_numbers<[1], [0], [0], [1], [0, 0, 1, 1], [], []>} : vector<32x544xbf16>, vector<544x32xbf16>, vector<32x32xf32> -> vector<32x32xf32>
    %c0_85 = arith.constant 0 : index
    %c0_86 = arith.constant 0 : index
    %220 = vector.load %arg6[%c0_85, %c0_86] : memref<1x32xf32, #tpu.memory_space<vmem>>, vector<1x32xf32>
    %221 = vector.broadcast %220 : vector<1x32xf32> to vector<32x32xf32>
    %222 = arith.addf %219, %221 : vector<32x32xf32>
    %223 = arith.addf %222, %1 : vector<32x32xf32>
    %cst_87 = arith.constant 0.000000e+00 : f32
    %224 = vector.broadcast %cst_87 : f32 to vector<32x32xf32>
    %225 = arith.maximumf %223, %224 : vector<32x32xf32>
    %c0_88 = arith.constant 0 : index
    %c0_89 = arith.constant 0 : index
    %226 = vector.load %arg7[%c0_88, %c0_89] : memref<32x128xbf16, #tpu.memory_space<vmem>>, vector<32x128xbf16>
    %cst_90 = arith.constant dense<0.000000e+00> : vector<32x128xf32>
    %227 = tpu.matmul %2, %226, %cst_90 {dimension_numbers = #tpu.dot_dimension_numbers<[1], [0], [0], [1], [0, 0, 1, 1], [], []>} : vector<32x32xbf16>, vector<32x128xbf16>, vector<32x128xf32> -> vector<32x128xf32>
    %c0_91 = arith.constant 0 : index
    %c0_92 = arith.constant 0 : index
    %228 = vector.load %arg8[%c0_91, %c0_92] : memref<1x128xf32, #tpu.memory_space<vmem>>, vector<1x128xf32>
    %229 = vector.broadcast %228 : vector<1x128xf32> to vector<32x128xf32>
    %230 = arith.addf %227, %229 : vector<32x128xf32>
    %231 = arith.truncf %230 : vector<32x128xf32> to vector<32x128xbf16>
    %232 = vector.shape_cast %231 : vector<32x128xbf16> to vector<2x16x128xbf16>
    %cst_93 = arith.constant dense<0.000000e+00> : vector<2x16x16xf32>
    %233 = tpu.matmul %232, %232, %cst_93 {dimension_numbers = #tpu.dot_dimension_numbers<[2], [2], [1], [1], [0, 0, 0, 1, 1, 1], [0], [0]>} : vector<2x16x128xbf16>, vector<2x16x128xbf16>, vector<2x16x16xf32> -> vector<2x16x16xf32>
    %234 = tpu.iota {dimensions = array<i32: 0>} : vector<16x16xi32>
    %235 = tpu.iota {dimensions = array<i32: 1>} : vector<16x16xi32>
    %236 = arith.cmpi eq, %234, %235 : vector<16x16xi32>
    %237 = arith.extui %236 : vector<16x16xi1> to vector<16x16xi32>
    %238 = arith.sitofp %237 : vector<16x16xi32> to vector<16x16xf32>
    %239 = vector.shape_cast %238 : vector<16x16xf32> to vector<1x16x16xf32>
    %240 = vector.broadcast %239 : vector<1x16x16xf32> to vector<2x16x16xf32>
    %241 = arith.mulf %233, %240 : vector<2x16x16xf32>
    %cst_94 = arith.constant dense<0.000000e+00> : vector<2x16xf32>
    %242 = vector.multi_reduction <add>, %241, %cst_94 [2] : vector<2x16x16xf32> to vector<2x16xf32>
    %243 = vector.shape_cast %242 : vector<2x16xf32> to vector<2x16x1xf32>
    %cst_95 = arith.constant dense<0.000000e+00> : vector<2x16xf32>
    %244 = vector.multi_reduction <add>, %241, %cst_95 [1] : vector<2x16x16xf32> to vector<2x16xf32>
    %245 = vector.shape_cast %244 : vector<2x16xf32> to vector<2x1x16xf32>
    %246 = vector.broadcast %243 : vector<2x16x1xf32> to vector<2x16x16xf32>
    %247 = vector.broadcast %245 : vector<2x1x16xf32> to vector<2x16x16xf32>
    %248 = arith.addf %246, %247 : vector<2x16x16xf32>
    %cst_96 = arith.constant 2.000000e+00 : f32
    %249 = vector.broadcast %cst_96 : f32 to vector<2x16x16xf32>
    %250 = arith.mulf %249, %233 : vector<2x16x16xf32>
    %251 = arith.subf %248, %250 : vector<2x16x16xf32>
    %cst_97 = arith.constant 0.000000e+00 : f32
    %252 = vector.broadcast %cst_97 : f32 to vector<2x16x16xf32>
    %253 = arith.maximumf %251, %252 : vector<2x16x16xf32>
    %cst_98 = arith.constant 0.000000e+00 : f32
    %254 = vector.broadcast %cst_98 : f32 to vector<2x16x16xf32>
    %255 = arith.subf %254, %253 : vector<2x16x16xf32>
    %256 = math.exp %255 : vector<2x16x16xf32>
    %c0_99 = arith.constant 0 : index
    %c0_100 = arith.constant 0 : index
    %c0_101 = arith.constant 0 : index
    %257 = vector.load %arg2[%c0_99, %c0_100, %c0_101] : memref<2x16x16xbf16, #tpu.memory_space<vmem>>, vector<2x16x16xbf16>
    %258 = arith.extf %257 : vector<2x16x16xbf16> to vector<2x16x16xf32>
    %259 = arith.mulf %256, %258 : vector<2x16x16xf32>
    %c0_102 = arith.constant 0 : index
    %c0_103 = arith.constant 0 : index
    %260 = vector.load %arg9[%c0_102, %c0_103] : memref<32x32xbf16, #tpu.memory_space<vmem>>, vector<32x32xbf16>
    %cst_104 = arith.constant dense<0.000000e+00> : vector<32x32xf32>
    %261 = tpu.matmul %2, %260, %cst_104 {dimension_numbers = #tpu.dot_dimension_numbers<[1], [0], [0], [1], [0, 0, 1, 1], [], []>} : vector<32x32xbf16>, vector<32x32xbf16>, vector<32x32xf32> -> vector<32x32xf32>
    %c0_105 = arith.constant 0 : index
    %c0_106 = arith.constant 0 : index
    %262 = vector.load %arg10[%c0_105, %c0_106] : memref<1x32xf32, #tpu.memory_space<vmem>>, vector<1x32xf32>
    %263 = vector.broadcast %262 : vector<1x32xf32> to vector<32x32xf32>
    %264 = arith.addf %261, %263 : vector<32x32xf32>
    %cst_107 = arith.constant 0.000000e+00 : f32
    %265 = vector.broadcast %cst_107 : f32 to vector<32x32xf32>
    %266 = arith.maximumf %264, %265 : vector<32x32xf32>
    %267 = arith.truncf %259 : vector<2x16x16xf32> to vector<2x16x16xbf16>
    %268 = arith.truncf %266 : vector<32x32xf32> to vector<32x32xbf16>
    %269 = vector.shape_cast %268 : vector<32x32xbf16> to vector<2x16x32xbf16>
    %cst_108 = arith.constant dense<0.000000e+00> : vector<2x16x32xf32>
    %270 = tpu.matmul %267, %269, %cst_108 {dimension_numbers = #tpu.dot_dimension_numbers<[2], [1], [1], [2], [0, 0, 0, 1, 1, 2], [0], [0]>} : vector<2x16x16xbf16>, vector<2x16x32xbf16>, vector<2x16x32xf32> -> vector<2x16x32xf32>
    %271 = vector.shape_cast %270 : vector<2x16x32xf32> to vector<32x32xf32>
    %272 = arith.truncf %225 : vector<32x32xf32> to vector<32x32xbf16>
    %273 = arith.truncf %271 : vector<32x32xf32> to vector<32x32xbf16>
    %c0_109 = arith.constant 0 : index
    %c0_110 = arith.constant 0 : index
    %274 = vector.load %arg11[%c0_109, %c0_110] : memref<32x32xbf16, #tpu.memory_space<vmem>>, vector<32x32xbf16>
    %cst_111 = arith.constant dense<0.000000e+00> : vector<32x32xf32>
    %275 = tpu.matmul %272, %274, %cst_111 {dimension_numbers = #tpu.dot_dimension_numbers<[1], [0], [0], [1], [0, 0, 1, 1], [], []>} : vector<32x32xbf16>, vector<32x32xbf16>, vector<32x32xf32> -> vector<32x32xf32>
    %c0_112 = arith.constant 0 : index
    %c0_113 = arith.constant 0 : index
    %276 = vector.load %arg14[%c0_112, %c0_113] : memref<32x32xbf16, #tpu.memory_space<vmem>>, vector<32x32xbf16>
    %cst_114 = arith.constant dense<0.000000e+00> : vector<32x32xf32>
    %277 = tpu.matmul %273, %276, %cst_114 {dimension_numbers = #tpu.dot_dimension_numbers<[1], [0], [0], [1], [0, 0, 1, 1], [], []>} : vector<32x32xbf16>, vector<32x32xbf16>, vector<32x32xf32> -> vector<32x32xf32>
    %278 = arith.addf %275, %277 : vector<32x32xf32>
    %c0_115 = arith.constant 0 : index
    %c0_116 = arith.constant 0 : index
    %279 = vector.load %arg20[%c0_115, %c0_116] : memref<1x32xf32, #tpu.memory_space<vmem>>, vector<1x32xf32>
    %280 = vector.broadcast %279 : vector<1x32xf32> to vector<32x32xf32>
    %281 = arith.addf %278, %280 : vector<32x32xf32>
    %c0_117 = arith.constant 0 : index
    %c0_118 = arith.constant 0 : index
    %282 = vector.load %arg17[%c0_117, %c0_118] : memref<32x32xbf16, #tpu.memory_space<vmem>>, vector<32x32xbf16>
    %cst_119 = arith.constant dense<0.000000e+00> : vector<32x32xf32>
    %283 = tpu.matmul %2, %282, %cst_119 {dimension_numbers = #tpu.dot_dimension_numbers<[1], [0], [0], [1], [0, 0, 1, 1], [], []>} : vector<32x32xbf16>, vector<32x32xbf16>, vector<32x32xf32> -> vector<32x32xf32>
    %c0_120 = arith.constant 0 : index
    %c0_121 = arith.constant 0 : index
    %284 = vector.load %arg23[%c0_120, %c0_121] : memref<1x32xf32, #tpu.memory_space<vmem>>, vector<1x32xf32>
    %285 = vector.broadcast %284 : vector<1x32xf32> to vector<32x32xf32>
    %286 = arith.addf %283, %285 : vector<32x32xf32>
    %287 = arith.addf %281, %286 : vector<32x32xf32>
    %288 = arith.negf %287 : vector<32x32xf32>
    %289 = math.exp %288 : vector<32x32xf32>
    %cst_122 = arith.constant 1.000000e+00 : f32
    %290 = vector.broadcast %cst_122 : f32 to vector<32x32xf32>
    %291 = arith.addf %290, %289 : vector<32x32xf32>
    %292 = arith.divf %290, %291 : vector<32x32xf32>
    %c0_123 = arith.constant 0 : index
    %c0_124 = arith.constant 0 : index
    %293 = vector.load %arg12[%c0_123, %c0_124] : memref<32x32xbf16, #tpu.memory_space<vmem>>, vector<32x32xbf16>
    %cst_125 = arith.constant dense<0.000000e+00> : vector<32x32xf32>
    %294 = tpu.matmul %272, %293, %cst_125 {dimension_numbers = #tpu.dot_dimension_numbers<[1], [0], [0], [1], [0, 0, 1, 1], [], []>} : vector<32x32xbf16>, vector<32x32xbf16>, vector<32x32xf32> -> vector<32x32xf32>
    %c0_126 = arith.constant 0 : index
    %c0_127 = arith.constant 0 : index
    %295 = vector.load %arg15[%c0_126, %c0_127] : memref<32x32xbf16, #tpu.memory_space<vmem>>, vector<32x32xbf16>
    %cst_128 = arith.constant dense<0.000000e+00> : vector<32x32xf32>
    %296 = tpu.matmul %273, %295, %cst_128 {dimension_numbers = #tpu.dot_dimension_numbers<[1], [0], [0], [1], [0, 0, 1, 1], [], []>} : vector<32x32xbf16>, vector<32x32xbf16>, vector<32x32xf32> -> vector<32x32xf32>
    %297 = arith.addf %294, %296 : vector<32x32xf32>
    %c0_129 = arith.constant 0 : index
    %c0_130 = arith.constant 0 : index
    %298 = vector.load %arg21[%c0_129, %c0_130] : memref<1x32xf32, #tpu.memory_space<vmem>>, vector<1x32xf32>
    %299 = vector.broadcast %298 : vector<1x32xf32> to vector<32x32xf32>
    %300 = arith.addf %297, %299 : vector<32x32xf32>
    %c0_131 = arith.constant 0 : index
    %c0_132 = arith.constant 0 : index
    %301 = vector.load %arg18[%c0_131, %c0_132] : memref<32x32xbf16, #tpu.memory_space<vmem>>, vector<32x32xbf16>
    %cst_133 = arith.constant dense<0.000000e+00> : vector<32x32xf32>
    %302 = tpu.matmul %2, %301, %cst_133 {dimension_numbers = #tpu.dot_dimension_numbers<[1], [0], [0], [1], [0, 0, 1, 1], [], []>} : vector<32x32xbf16>, vector<32x32xbf16>, vector<32x32xf32> -> vector<32x32xf32>
    %c0_134 = arith.constant 0 : index
    %c0_135 = arith.constant 0 : index
    %303 = vector.load %arg24[%c0_134, %c0_135] : memref<1x32xf32, #tpu.memory_space<vmem>>, vector<1x32xf32>
    %304 = vector.broadcast %303 : vector<1x32xf32> to vector<32x32xf32>
    %305 = arith.addf %302, %304 : vector<32x32xf32>
    %306 = arith.addf %300, %305 : vector<32x32xf32>
    %307 = arith.negf %306 : vector<32x32xf32>
    %308 = math.exp %307 : vector<32x32xf32>
    %cst_136 = arith.constant 1.000000e+00 : f32
    %309 = vector.broadcast %cst_136 : f32 to vector<32x32xf32>
    %310 = arith.addf %309, %308 : vector<32x32xf32>
    %311 = arith.divf %309, %310 : vector<32x32xf32>
    %c0_137 = arith.constant 0 : index
    %c0_138 = arith.constant 0 : index
    %312 = vector.load %arg13[%c0_137, %c0_138] : memref<32x32xbf16, #tpu.memory_space<vmem>>, vector<32x32xbf16>
    %cst_139 = arith.constant dense<0.000000e+00> : vector<32x32xf32>
    %313 = tpu.matmul %272, %312, %cst_139 {dimension_numbers = #tpu.dot_dimension_numbers<[1], [0], [0], [1], [0, 0, 1, 1], [], []>} : vector<32x32xbf16>, vector<32x32xbf16>, vector<32x32xf32> -> vector<32x32xf32>
    %c0_140 = arith.constant 0 : index
    %c0_141 = arith.constant 0 : index
    %314 = vector.load %arg16[%c0_140, %c0_141] : memref<32x32xbf16, #tpu.memory_space<vmem>>, vector<32x32xbf16>
    %cst_142 = arith.constant dense<0.000000e+00> : vector<32x32xf32>
    %315 = tpu.matmul %273, %314, %cst_142 {dimension_numbers = #tpu.dot_dimension_numbers<[1], [0], [0], [1], [0, 0, 1, 1], [], []>} : vector<32x32xbf16>, vector<32x32xbf16>, vector<32x32xf32> -> vector<32x32xf32>
    %316 = arith.addf %313, %315 : vector<32x32xf32>
    %c0_143 = arith.constant 0 : index
    %c0_144 = arith.constant 0 : index
    %317 = vector.load %arg22[%c0_143, %c0_144] : memref<1x32xf32, #tpu.memory_space<vmem>>, vector<1x32xf32>
    %318 = vector.broadcast %317 : vector<1x32xf32> to vector<32x32xf32>
    %319 = arith.addf %316, %318 : vector<32x32xf32>
    %c0_145 = arith.constant 0 : index
    %c0_146 = arith.constant 0 : index
    %320 = vector.load %arg19[%c0_145, %c0_146] : memref<32x32xbf16, #tpu.memory_space<vmem>>, vector<32x32xbf16>
    %cst_147 = arith.constant dense<0.000000e+00> : vector<32x32xf32>
    %321 = tpu.matmul %2, %320, %cst_147 {dimension_numbers = #tpu.dot_dimension_numbers<[1], [0], [0], [1], [0, 0, 1, 1], [], []>} : vector<32x32xbf16>, vector<32x32xbf16>, vector<32x32xf32> -> vector<32x32xf32>
    %c0_148 = arith.constant 0 : index
    %c0_149 = arith.constant 0 : index
    %322 = vector.load %arg25[%c0_148, %c0_149] : memref<1x32xf32, #tpu.memory_space<vmem>>, vector<1x32xf32>
    %323 = vector.broadcast %322 : vector<1x32xf32> to vector<32x32xf32>
    %324 = arith.addf %321, %323 : vector<32x32xf32>
    %325 = arith.mulf %292, %324 : vector<32x32xf32>
    %326 = arith.addf %319, %325 : vector<32x32xf32>
    %327 = math.tanh %326 : vector<32x32xf32>
    %cst_150 = arith.constant 1.000000e+00 : f32
    %328 = vector.broadcast %cst_150 : f32 to vector<32x32xf32>
    %329 = arith.subf %328, %311 : vector<32x32xf32>
    %330 = arith.mulf %329, %327 : vector<32x32xf32>
    %331 = arith.mulf %311, %1 : vector<32x32xf32>
    %332 = arith.addf %330, %331 : vector<32x32xf32>
    %333 = vector.shape_cast %332 : vector<32x32xf32> to vector<2x16x32xf32>
    %c0_151 = arith.constant 0 : index
    %c0_152 = arith.constant 0 : index
    %c0_153 = arith.constant 0 : index
    %334 = vector.load %arg26[%c0_151, %c0_152, %c0_153] : memref<2x16x32xf32, #tpu.memory_space<vmem>>, vector<2x16x32xf32>
    tpu.vector_store %arg26[%c0_151, %c0_152, %c0_153], %333 {strides = array<i32>} : memref<2x16x32xf32, #tpu.memory_space<vmem>>, vector<2x16x32xf32>,
    return
  }
  func.func @transform_0(%arg0: i32) -> (i32, i32, i32) {
    %c0_i32 = arith.constant 0 : i32
    %c0_i32_0 = arith.constant 0 : i32
    %c0_i32_1 = arith.constant 0 : i32
    return %arg0, %c0_i32, %c0_i32_0 : i32, i32, i32
  }
  func.func @transform_1(%arg0: i32) -> (i32, i32, i32) {
    %c0_i32 = arith.constant 0 : i32
    %c0_i32_0 = arith.constant 0 : i32
    %c0_i32_1 = arith.constant 0 : i32
    return %arg0, %c0_i32, %c0_i32_0 : i32, i32, i32
  }
  func.func @transform_2(%arg0: i32) -> (i32, i32) {
    %c0_i32 = arith.constant 0 : i32
    %c0_i32_0 = arith.constant 0 : i32
    %c0_i32_1 = arith.constant 0 : i32
    return %c0_i32, %c0_i32_0 : i32, i32
  }
  func.func @transform_3(%arg0: i32) -> (i32, i32) {
    %c0_i32 = arith.constant 0 : i32
    %c0_i32_0 = arith.constant 0 : i32
    %c0_i32_1 = arith.constant 0 : i32
    return %c0_i32, %c0_i32_0 : i32, i32
  }
  func.func @transform_4(%arg0: i32) -> (i32, i32) {
    %c0_i32 = arith.constant 0 : i32
    %c0_i32_0 = arith.constant 0 : i32
    %c0_i32_1 = arith.constant 0 : i32
    return %c0_i32, %c0_i32_0 : i32, i32
  }
  func.func @transform_5(%arg0: i32) -> (i32, i32) {
    %c0_i32 = arith.constant 0 : i32
    %c0_i32_0 = arith.constant 0 : i32
    %c0_i32_1 = arith.constant 0 : i32
    return %c0_i32, %c0_i32_0 : i32, i32
  }
  func.func @transform_6(%arg0: i32) -> (i32, i32) {
    %c0_i32 = arith.constant 0 : i32
    %c0_i32_0 = arith.constant 0 : i32
    %c0_i32_1 = arith.constant 0 : i32
    return %c0_i32, %c0_i32_0 : i32, i32
  }
  func.func @transform_7(%arg0: i32) -> (i32, i32) {
    %c0_i32 = arith.constant 0 : i32
    %c0_i32_0 = arith.constant 0 : i32
    %c0_i32_1 = arith.constant 0 : i32
    return %c0_i32, %c0_i32_0 : i32, i32
  }
  func.func @transform_8(%arg0: i32) -> (i32, i32) {
    %c0_i32 = arith.constant 0 : i32
    %c0_i32_0 = arith.constant 0 : i32
    %c0_i32_1 = arith.constant 0 : i32
    return %c0_i32, %c0_i32_0 : i32, i32
  }
  func.func @transform_9(%arg0: i32) -> (i32, i32) {
    %c0_i32 = arith.constant 0 : i32
    %c0_i32_0 = arith.constant 0 : i32
    %c0_i32_1 = arith.constant 0 : i32
    return %c0_i32, %c0_i32_0 : i32, i32
  }
  func.func @transform_10(%arg0: i32) -> (i32, i32) {
    %c0_i32 = arith.constant 0 : i32
    %c0_i32_0 = arith.constant 0 : i32
    %c0_i32_1 = arith.constant 0 : i32
    return %c0_i32, %c0_i32_0 : i32, i32
  }
  func.func @transform_11(%arg0: i32) -> (i32, i32) {
    %c0_i32 = arith.constant 0 : i32
    %c0_i32_0 = arith.constant 0 : i32
    %c0_i32_1 = arith.constant 0 : i32
    return %c0_i32, %c0_i32_0 : i32, i32
  }
  func.func @transform_12(%arg0: i32) -> (i32, i32) {
    %c0_i32 = arith.constant 0 : i32
    %c0_i32_0 = arith.constant 0 : i32
    %c0_i32_1 = arith.constant 0 : i32
    return %c0_i32, %c0_i32_0 : i32, i32
  }
  func.func @transform_13(%arg0: i32) -> (i32, i32) {
    %c0_i32 = arith.constant 0 : i32
    %c0_i32_0 = arith.constant 0 : i32
    %c0_i32_1 = arith.constant 0 : i32
    return %c0_i32, %c0_i32_0 : i32, i32
  }
  func.func @transform_14(%arg0: i32) -> (i32, i32) {
    %c0_i32 = arith.constant 0 : i32
    %c0_i32_0 = arith.constant 0 : i32
    %c0_i32_1 = arith.constant 0 : i32
    return %c0_i32, %c0_i32_0 : i32, i32
  }
  func.func @transform_15(%arg0: i32) -> (i32, i32) {
    %c0_i32 = arith.constant 0 : i32
    %c0_i32_0 = arith.constant 0 : i32
    %c0_i32_1 = arith.constant 0 : i32
    return %c0_i32, %c0_i32_0 : i32, i32
  }
  func.func @transform_16(%arg0: i32) -> (i32, i32) {
    %c0_i32 = arith.constant 0 : i32
    %c0_i32_0 = arith.constant 0 : i32
    %c0_i32_1 = arith.constant 0 : i32
    return %c0_i32, %c0_i32_0 : i32, i32
  }
  func.func @transform_17(%arg0: i32) -> (i32, i32) {
    %c0_i32 = arith.constant 0 : i32
    %c0_i32_0 = arith.constant 0 : i32
    %c0_i32_1 = arith.constant 0 : i32
    return %c0_i32, %c0_i32_0 : i32, i32
  }
  func.func @transform_18(%arg0: i32) -> (i32, i32) {
    %c0_i32 = arith.constant 0 : i32
    %c0_i32_0 = arith.constant 0 : i32
    %c0_i32_1 = arith.constant 0 : i32
    return %c0_i32, %c0_i32_0 : i32, i32
  }
  func.func @transform_19(%arg0: i32) -> (i32, i32) {
    %c0_i32 = arith.constant 0 : i32
    %c0_i32_0 = arith.constant 0 : i32
    %c0_i32_1 = arith.constant 0 : i32
    return %c0_i32, %c0_i32_0 : i32, i32
  }
  func.func @transform_20(%arg0: i32) -> (i32, i32) {
    %c0_i32 = arith.constant 0 : i32
    %c0_i32_0 = arith.constant 0 : i32
    %c0_i32_1 = arith.constant 0 : i32
    return %c0_i32, %c0_i32_0 : i32, i32
  }
  func.func @transform_21(%arg0: i32) -> (i32, i32) {
    %c0_i32 = arith.constant 0 : i32
    %c0_i32_0 = arith.constant 0 : i32
    %c0_i32_1 = arith.constant 0 : i32
    return %c0_i32, %c0_i32_0 : i32, i32
  }
  func.func @transform_22(%arg0: i32) -> (i32, i32) {
    %c0_i32 = arith.constant 0 : i32
    %c0_i32_0 = arith.constant 0 : i32
    %c0_i32_1 = arith.constant 0 : i32
    return %c0_i32, %c0_i32_0 : i32, i32
  }
  func.func @transform_23(%arg0: i32) -> (i32, i32) {
    %c0_i32 = arith.constant 0 : i32
    %c0_i32_0 = arith.constant 0 : i32
    %c0_i32_1 = arith.constant 0 : i32
    return %c0_i32, %c0_i32_0 : i32, i32
  }
  func.func @transform_24(%arg0: i32) -> (i32, i32) {
    %c0_i32 = arith.constant 0 : i32
    %c0_i32_0 = arith.constant 0 : i32
    %c0_i32_1 = arith.constant 0 : i32
    return %c0_i32, %c0_i32_0 : i32, i32
  }
  func.func @transform_25(%arg0: i32) -> (i32, i32, i32) {
    %c0_i32 = arith.constant 0 : i32
    %c0_i32_0 = arith.constant 0 : i32
    %c0_i32_1 = arith.constant 0 : i32
    return %arg0, %c0_i32, %c0_i32_0 : i32, i32, i32
  }
}

</mosaic_0001>

<llo_original>
// kernel: conv_nmp_block.1
$region0: #{conv_nmp_block.1}
  #allocation0 [shape = 'u32[]', space=smem, size = 0x4, offset = 0x4, fixed_abs, tag = 'smem constant byte address 0x4 - core index']
  #allocation1 [shape = 'u32[144,128]{1,0:T(1,128)}', space=vmem, size = 0x12000, scoped, tag = 'internal scratch']
  %s0 = inlined_call_operand.hbm [shape: f32[2,16,32], index: 0, kind: input, shape index: {}]
  %s1 = inlined_call_operand.hbm [shape: bf16[2,16,16], index: 1, kind: input, shape index: {}]
  %s2 = inlined_call_operand.hbm [shape: bf16[32,32], index: 2, kind: input, shape index: {}]
  %s3 = inlined_call_operand.hbm [shape: f32[1,32], index: 3, kind: input, shape index: {}]
  %s4 = inlined_call_operand.hbm [shape: bf16[544,32], index: 4, kind: input, shape index: {}]
  %s5 = inlined_call_operand.hbm [shape: f32[1,32], index: 5, kind: input, shape index: {}]
  %s6 = inlined_call_operand.hbm [shape: bf16[32,128], index: 6, kind: input, shape index: {}]
  %s7 = inlined_call_operand.hbm [shape: f32[1,128], index: 7, kind: input, shape index: {}]
  %s8 = inlined_call_operand.hbm [shape: bf16[32,32], index: 8, kind: input, shape index: {}]
  %s9 = inlined_call_operand.hbm [shape: f32[1,32], index: 9, kind: input, shape index: {}]
  %s10 = inlined_call_operand.hbm [shape: bf16[32,32], index: 10, kind: input, shape index: {}]
  %s11 = inlined_call_operand.hbm [shape: bf16[32,32], index: 11, kind: input, shape index: {}]
  %s12 = inlined_call_operand.hbm [shape: bf16[32,32], index: 12, kind: input, shape index: {}]
  %s13 = inlined_call_operand.hbm [shape: bf16[32,32], index: 13, kind: input, shape index: {}]
  %s14 = inlined_call_operand.hbm [shape: bf16[32,32], index: 14, kind: input, shape index: {}]
  %s15 = inlined_call_operand.hbm [shape: bf16[32,32], index: 15, kind: input, shape index: {}]
  %s16 = inlined_call_operand.hbm [shape: bf16[32,32], index: 16, kind: input, shape index: {}]
  %s17 = inlined_call_operand.hbm [shape: bf16[32,32], index: 17, kind: input, shape index: {}]
  %s18 = inlined_call_operand.hbm [shape: bf16[32,32], index: 18, kind: input, shape index: {}]
  %s19 = inlined_call_operand.hbm [shape: f32[1,32], index: 19, kind: input, shape index: {}]
  %s20 = inlined_call_operand.hbm [shape: f32[1,32], index: 20, kind: input, shape index: {}]
  %s21 = inlined_call_operand.hbm [shape: f32[1,32], index: 21, kind: input, shape index: {}]
  %s22 = inlined_call_operand.hbm [shape: f32[1,32], index: 22, kind: input, shape index: {}]
  %s23 = inlined_call_operand.hbm [shape: f32[1,32], index: 23, kind: input, shape index: {}]
  %s24 = inlined_call_operand.hbm [shape: f32[1,32], index: 24, kind: input, shape index: {}]
  %s25 = inlined_call_operand.hbm [shape: f32[2,16,32], index: 25, kind: output, shape index: {}]
  %s26 = sld [smem:[#allocation0]]
  $region210: #{conv_nmp_block.1} parent=0
    _
  %s28 = ssub.s32 1, %s26
  %s29 = scalar_select 0, %s28, %s26
  $region1: #{conv_nmp_block.1} parent=0
    #allocation2 [shape = 'u8[16384]{0}', space=vmem, size = 0x4000, scoped, tag = 'input window, operand 0, single buffered']
    #allocation3 [shape = 's32[1]{0}', space=sflag, size = 0x4, scoped, tag = 'scoped memory for conv_nmp_block.1']
    #allocation4 [shape = 's32[1]{0}', space=sflag, size = 0x4, scoped, tag = 'scoped memory for conv_nmp_block.1']
    #allocation5 [shape = 'u8[8192]{0}', space=vmem, size = 0x2000, scoped, tag = 'input window, operand 1, single buffered']
    #allocation6 [shape = 's32[1]{0}', space=sflag, size = 0x4, scoped, tag = 'scoped memory for conv_nmp_block.1']
    #allocation7 [shape = 'u8[8192]{0}', space=vmem, size = 0x2000, scoped, tag = 'input window, operand 2, single buffered']
    #allocation8 [shape = 'u8[512]{0}', space=vmem, size = 0x400, scoped, tag = 'input window, operand 3, single buffered']
    #allocation9 [shape = 's32[1]{0}', space=sflag, size = 0x4, scoped, tag = 'scoped memory for conv_nmp_block.1']
    #allocation10 [shape = 'u8[139264]{0}', space=vmem, size = 0x22000, scoped, tag = 'input window, operand 4, single buffered']
    #allocation11 [shape = 'u8[512]{0}', space=vmem, size = 0x400, scoped, tag = 'input window, operand 5, single buffered']
    #allocation12 [shape = 's32[1]{0}', space=sflag, size = 0x4, scoped, tag = 'scoped memory for conv_nmp_block.1']
    #allocation13 [shape = 'u8[8192]{0}', space=vmem, size = 0x2000, scoped, tag = 'input window, operand 6, single buffered']
    #allocation14 [shape = 'u8[512]{0}', space=vmem, size = 0x400, scoped, tag = 'input window, operand 7, single buffered']
    #allocation15 [shape = 's32[1]{0}', space=sflag, size = 0x4, scoped, tag = 'scoped memory for conv_nmp_block.1']
    #allocation16 [shape = 'u8[8192]{0}', space=vmem, size = 0x2000, scoped, tag = 'input window, operand 8, single buffered']
    #allocation17 [shape = 'u8[512]{0}', space=vmem, size = 0x400, scoped, tag = 'input window, operand 9, single buffered']
    #allocation18 [shape = 's32[1]{0}', space=sflag, size = 0x4, scoped, tag = 'scoped memory for conv_nmp_block.1']
    #allocation19 [shape = 'u8[8192]{0}', space=vmem, size = 0x2000, scoped, tag = 'input window, operand 10, single buffered']
    #allocation20 [shape = 'u8[8192]{0}', space=vmem, size = 0x2000, scoped, tag = 'input window, operand 11, single buffered']
    #allocation21 [shape = 's32[1]{0}', space=sflag, size = 0x4, scoped, tag = 'scoped memory for conv_nmp_block.1']
    #allocation22 [shape = 'u8[8192]{0}', space=vmem, size = 0x2000, scoped, tag = 'input window, operand 12, single buffered']
    #allocation23 [shape = 'u8[8192]{0}', space=vmem, size = 0x2000, scoped, tag = 'input window, operand 13, single buffered']
    #allocation24 [shape = 's32[1]{0}', space=sflag, size = 0x4, scoped, tag = 'scoped memory for conv_nmp_block.1']
    #allocation25 [shape = 'u8[8192]{0}', space=vmem, size = 0x2000, scoped, tag = 'input window, operand 14, single buffered']
    #allocation26 [shape = 'u8[8192]{0}', space=vmem, size = 0x2000, scoped, tag = 'input window, operand 15, single buffered']
    #allocation27 [shape = 's32[1]{0}', space=sflag, size = 0x4, scoped, tag = 'scoped memory for conv_nmp_block.1']
    #allocation28 [shape = 'u8[8192]{0}', space=vmem, size = 0x2000, scoped, tag = 'input window, operand 16, single buffered']
    #allocation29 [shape = 'u8[8192]{0}', space=vmem, size = 0x2000, scoped, tag = 'input window, operand 17, single buffered']
    #allocation30 [shape = 's32[1]{0}', space=sflag, size = 0x4, scoped, tag = 'scoped memory for conv_nmp_block.1']
    #allocation31 [shape = 'u8[8192]{0}', space=vmem, size = 0x2000, scoped, tag = 'input window, operand 18, single buffered']
    #allocation32 [shape = 'u8[512]{0}', space=vmem, size = 0x400, scoped, tag = 'input window, operand 19, single buffered']
    #allocation33 [shape = 's32[1]{0}', space=sflag, size = 0x4, scoped, tag = 'scoped memory for conv_nmp_block.1']
    #allocation34 [shape = 'u8[512]{0}', space=vmem, size = 0x400, scoped, tag = 'input window, operand 20, single buffered']
    #allocation35 [shape = 'u8[512]{0}', space=vmem, size = 0x400, scoped, tag = 'input window, operand 21, single buffered']
    #allocation36 [shape = 's32[1]{0}', space=sflag, size = 0x4, scoped, tag = 'scoped memory for conv_nmp_block.1']
    #allocation37 [shape = 'u8[512]{0}', space=vmem, size = 0x400, scoped, tag = 'input window, operand 22, single buffered']
    #allocation38 [shape = 'u8[512]{0}', space=vmem, size = 0x400, scoped, tag = 'input window, operand 23, single buffered']
    #allocation39 [shape = 's32[1]{0}', space=sflag, size = 0x4, scoped, tag = 'scoped memory for conv_nmp_block.1']
    #allocation40 [shape = 'u8[512]{0}', space=vmem, size = 0x400, scoped, tag = 'input window, operand 24, single buffered']
    #allocation41 [shape = 'u8[16384]{0}', space=vmem, size = 0x4000, scoped, tag = 'output window, operand 0, single buffered']
    %30 = vsyncpa [#allocation3], 0
    %31 = vsyncpa [#allocation6], 0
    %32 = vsyncpa [#allocation9], 0
    %33 = vsyncpa [#allocation12], 0
    %34 = vsyncpa [#allocation15], 0
    %35 = vsyncpa [#allocation18], 0
    %36 = vsyncpa [#allocation21], 0
    %37 = vsyncpa [#allocation24], 0
    %38 = vsyncpa [#allocation27], 0
    %39 = vsyncpa [#allocation30], 0
    %40 = vsyncpa [#allocation33], 0
    %41 = vsyncpa [#allocation36], 0
    %42 = vsyncpa [#allocation39], 0
    %43 = vsyncpa [#allocation4], 0
    // Predicated region
    $region2: #{conv_nmp_block.1} parent=1 // pred_check
      _
    $region3: #{conv_nmp_block.1} parent=1 // pred_check_branch
      %45 = sbr.rel (0) target = $region5
    $region4: #{conv_nmp_block.1} parent=1 // pred_region
      %s47 = ssub.s32 512, 512
      %48 = vsyncadd [#allocation3], %s47
      %s49 = sshll.u32 [#allocation2], 4
      %s50 = int_to_ptr.vmem [resolvable:$true] %s49
      %55 = dma.hbm_to_vmem [thread:$0]  %s0, 512, %s50, [#allocation3], 128, 128, 8
    $region5: #{conv_nmp_block.1} parent=1 // pred_fallthru
      _
    // Predicated region
    $region6: #{conv_nmp_block.1} parent=1 // pred_check
      _
    $region7: #{conv_nmp_block.1} parent=1 // pred_check_branch
      %57 = sbr.rel (0) target = $region9
    $region8: #{conv_nmp_block.1} parent=1 // pred_region
      %s59 = ssub.s32 256, 256
      %60 = vsyncadd [#allocation6], %s59
      %s61 = sshll.u32 [#allocation5], 4
      %s62 = int_to_ptr.vmem [resolvable:$true] %s61
      %67 = dma.hbm_to_vmem [thread:$0]  %s1, 256, %s62, [#allocation6], 64, 64, 4
    $region9: #{conv_nmp_block.1} parent=1 // pred_fallthru
      _
    // Predicated region
    $region10: #{conv_nmp_block.1} parent=1 // pred_check
      _
    $region11: #{conv_nmp_block.1} parent=1 // pred_check_branch
      %69 = sbr.rel (0) target = $region13
    $region12: #{conv_nmp_block.1} parent=1 // pred_region
      %s71 = ssub.s32 256, 256
      %72 = vsyncadd [#allocation6], %s71
      %s73 = sshll.u32 [#allocation7], 4
      %s74 = int_to_ptr.vmem [resolvable:$true] %s73
      %79 = dma.hbm_to_vmem [thread:$0]  %s2, 256, %s74, [#allocation6], 64, 64, 4
    $region13: #{conv_nmp_block.1} parent=1 // pred_fallthru
      _
    // Predicated region
    $region14: #{conv_nmp_block.1} parent=1 // pred_check
      _
    $region15: #{conv_nmp_block.1} parent=1 // pred_check_branch
      %81 = sbr.rel (0) target = $region17
    $region16: #{conv_nmp_block.1} parent=1 // pred_region
      %s83 = ssub.s32 16, 16
      %84 = vsyncadd [#allocation9], %s83
      %s86 = sshll.u32 [#allocation8], 4
      %s87 = int_to_ptr.vmem [resolvable:$true] %s86
      %89 = dma.hbm_to_vmem [thread:$0]  %s3, 16, %s87, [#allocation9]
    $region17: #{conv_nmp_block.1} parent=1 // pred_fallthru
      _
    // Predicated region
    $region18: #{conv_nmp_block.1} parent=1 // pred_check
      _
    $region19: #{conv_nmp_block.1} parent=1 // pred_check_branch
      %91 = sbr.rel (0) target = $region21
    $region20: #{conv_nmp_block.1} parent=1 // pred_region
      %s93 = ssub.s32 4352, 4352
      %94 = vsyncadd [#allocation9], %s93
      %s95 = sshll.u32 [#allocation10], 4
      %s96 = int_to_ptr.vmem [resolvable:$true] %s95
      %101 = dma.hbm_to_vmem [thread:$0]  %s4, 4352, %s96, [#allocation9], 64, 64, 4
    $region21: #{conv_nmp_block.1} parent=1 // pred_fallthru
      _
    // Predicated region
    $region22: #{conv_nmp_block.1} parent=1 // pred_check
      _
    $region23: #{conv_nmp_block.1} parent=1 // pred_check_branch
      %103 = sbr.rel (0) target = $region25
    $region24: #{conv_nmp_block.1} parent=1 // pred_region
      %s105 = ssub.s32 16, 16
      %106 = vsyncadd [#allocation12], %s105
      %s108 = sshll.u32 [#allocation11], 4
      %s109 = int_to_ptr.vmem [resolvable:$true] %s108
      %111 = dma.hbm_to_vmem [thread:$0]  %s5, 16, %s109, [#allocation12]
    $region25: #{conv_nmp_block.1} parent=1 // pred_fallthru
      _
    // Predicated region
    $region26: #{conv_nmp_block.1} parent=1 // pred_check
      _
    $region27: #{conv_nmp_block.1} parent=1 // pred_check_branch
      %113 = sbr.rel (0) target = $region29
    $region28: #{conv_nmp_block.1} parent=1 // pred_region
      %s115 = ssub.s32 256, 256
      %116 = vsyncadd [#allocation12], %s115
      %s117 = sshll.u32 [#allocation13], 4
      %s118 = int_to_ptr.vmem [resolvable:$true] %s117
      %123 = dma.hbm_to_vmem [thread:$0]  %s6, 256, %s118, [#allocation12], 64, 64, 4
    $region29: #{conv_nmp_block.1} parent=1 // pred_fallthru
      _
    // Predicated region
    $region30: #{conv_nmp_block.1} parent=1 // pred_check
      _
    $region31: #{conv_nmp_block.1} parent=1 // pred_check_branch
      %125 = sbr.rel (0) target = $region33
    $region32: #{conv_nmp_block.1} parent=1 // pred_region
      %s127 = ssub.s32 16, 16
      %128 = vsyncadd [#allocation15], %s127
      %s130 = sshll.u32 [#allocation14], 4
      %s131 = int_to_ptr.vmem [resolvable:$true] %s130
      %133 = dma.hbm_to_vmem [thread:$0]  %s7, 16, %s131, [#allocation15]
    $region33: #{conv_nmp_block.1} parent=1 // pred_fallthru
      _
    // Predicated region
    $region34: #{conv_nmp_block.1} parent=1 // pred_check
      _
    $region35: #{conv_nmp_block.1} parent=1 // pred_check_branch
      %135 = sbr.rel (0) target = $region37
    $region36: #{conv_nmp_block.1} parent=1 // pred_region
      %s137 = ssub.s32 256, 256
      %138 = vsyncadd [#allocation15], %s137
      %s139 = sshll.u32 [#allocation16], 4
      %s140 = int_to_ptr.vmem [resolvable:$true] %s139
      %145 = dma.hbm_to_vmem [thread:$0]  %s8, 256, %s140, [#allocation15], 64, 64, 4
    $region37: #{conv_nmp_block.1} parent=1 // pred_fallthru
      _
    // Predicated region
    $region38: #{conv_nmp_block.1} parent=1 // pred_check
      _
    $region39: #{conv_nmp_block.1} parent=1 // pred_check_branch
      %147 = sbr.rel (0) target = $region41
    $region40: #{conv_nmp_block.1} parent=1 // pred_region
      %s149 = ssub.s32 16, 16
      %150 = vsyncadd [#allocation18], %s149
      %s152 = sshll.u32 [#allocation17], 4
      %s153 = int_to_ptr.vmem [resolvable:$true] %s152
      %155 = dma.hbm_to_vmem [thread:$0]  %s9, 16, %s153, [#allocation18]
    $region41: #{conv_nmp_block.1} parent=1 // pred_fallthru
      _
    // Predicated region
    $region42: #{conv_nmp_block.1} parent=1 // pred_check
      _
    $region43: #{conv_nmp_block.1} parent=1 // pred_check_branch
      %157 = sbr.rel (0) target = $region45
    $region44: #{conv_nmp_block.1} parent=1 // pred_region
      %s159 = ssub.s32 256, 256
      %160 = vsyncadd [#allocation18], %s159
      %s161 = sshll.u32 [#allocation19], 4
      %s162 = int_to_ptr.vmem [resolvable:$true] %s161
      %167 = dma.hbm_to_vmem [thread:$0]  %s10, 256, %s162, [#allocation18], 64, 64, 4
    $region45: #{conv_nmp_block.1} parent=1 // pred_fallthru
      _
    // Predicated region
    $region46: #{conv_nmp_block.1} parent=1 // pred_check
      _
    $region47: #{conv_nmp_block.1} parent=1 // pred_check_branch
      %169 = sbr.rel (0) target = $region49
    $region48: #{conv_nmp_block.1} parent=1 // pred_region
      %s171 = ssub.s32 256, 256
      %172 = vsyncadd [#allocation21], %s171
      %s173 = sshll.u32 [#allocation20], 4
      %s174 = int_to_ptr.vmem [resolvable:$true] %s173
      %179 = dma.hbm_to_vmem [thread:$0]  %s11, 256, %s174, [#allocation21], 64, 64, 4
    $region49: #{conv_nmp_block.1} parent=1 // pred_fallthru
      _
    // Predicated region
    $region50: #{conv_nmp_block.1} parent=1 // pred_check
      _
    $region51: #{conv_nmp_block.1} parent=1 // pred_check_branch
      %181 = sbr.rel (0) target = $region53
    $region52: #{conv_nmp_block.1} parent=1 // pred_region
      %s183 = ssub.s32 256, 256
      %184 = vsyncadd [#allocation21], %s183
      %s185 = sshll.u32 [#allocation22], 4
      %s186 = int_to_ptr.vmem [resolvable:$true] %s185
      %191 = dma.hbm_to_vmem [thread:$0]  %s12, 256, %s186, [#allocation21], 64, 64, 4
    $region53: #{conv_nmp_block.1} parent=1 // pred_fallthru
      _
    // Predicated region
    $region54: #{conv_nmp_block.1} parent=1 // pred_check
      _
    $region55: #{conv_nmp_block.1} parent=1 // pred_check_branch
      %193 = sbr.rel (0) target = $region57
    $region56: #{conv_nmp_block.1} parent=1 // pred_region
      %s195 = ssub.s32 256, 256
      %196 = vsyncadd [#allocation24], %s195
      %s197 = sshll.u32 [#allocation23], 4
      %s198 = int_to_ptr.vmem [resolvable:$true] %s197
      %203 = dma.hbm_to_vmem [thread:$0]  %s13, 256, %s198, [#allocation24], 64, 64, 4
    $region57: #{conv_nmp_block.1} parent=1 // pred_fallthru
      _
    // Predicated region
    $region58: #{conv_nmp_block.1} parent=1 // pred_check
      _
    $region59: #{conv_nmp_block.1} parent=1 // pred_check_branch
      %205 = sbr.rel (0) target = $region61
    $region60: #{conv_nmp_block.1} parent=1 // pred_region
      %s207 = ssub.s32 256, 256
      %208 = vsyncadd [#allocation24], %s207
      %s209 = sshll.u32 [#allocation25], 4
      %s210 = int_to_ptr.vmem [resolvable:$true] %s209
      %215 = dma.hbm_to_vmem [thread:$0]  %s14, 256, %s210, [#allocation24], 64, 64, 4
    $region61: #{conv_nmp_block.1} parent=1 // pred_fallthru
      _
    // Predicated region
    $region62: #{conv_nmp_block.1} parent=1 // pred_check
      _
    $region63: #{conv_nmp_block.1} parent=1 // pred_check_branch
      %217 = sbr.rel (0) target = $region65
    $region64: #{conv_nmp_block.1} parent=1 // pred_region
      %s219 = ssub.s32 256, 256
      %220 = vsyncadd [#allocation27], %s219
      %s221 = sshll.u32 [#allocation26], 4
      %s222 = int_to_ptr.vmem [resolvable:$true] %s221
      %227 = dma.hbm_to_vmem [thread:$0]  %s15, 256, %s222, [#allocation27], 64, 64, 4
    $region65: #{conv_nmp_block.1} parent=1 // pred_fallthru
      _
    // Predicated region
    $region66: #{conv_nmp_block.1} parent=1 // pred_check
      _
    $region67: #{conv_nmp_block.1} parent=1 // pred_check_branch
      %229 = sbr.rel (0) target = $region69
    $region68: #{conv_nmp_block.1} parent=1 // pred_region
      %s231 = ssub.s32 256, 256
      %232 = vsyncadd [#allocation27], %s231
      %s233 = sshll.u32 [#allocation28], 4
      %s234 = int_to_ptr.vmem [resolvable:$true] %s233
      %239 = dma.hbm_to_vmem [thread:$0]  %s16, 256, %s234, [#allocation27], 64, 64, 4
    $region69: #{conv_nmp_block.1} parent=1 // pred_fallthru
      _
    // Predicated region
    $region70: #{conv_nmp_block.1} parent=1 // pred_check
      _
    $region71: #{conv_nmp_block.1} parent=1 // pred_check_branch
      %241 = sbr.rel (0) target = $region73
    $region72: #{conv_nmp_block.1} parent=1 // pred_region
      %s243 = ssub.s32 256, 256
      %244 = vsyncadd [#allocation30], %s243
      %s245 = sshll.u32 [#allocation29], 4
      %s246 = int_to_ptr.vmem [resolvable:$true] %s245
      %251 = dma.hbm_to_vmem [thread:$0]  %s17, 256, %s246, [#allocation30], 64, 64, 4
    $region73: #{conv_nmp_block.1} parent=1 // pred_fallthru
      _
    // Predicated region
    $region74: #{conv_nmp_block.1} parent=1 // pred_check
      _
    $region75: #{conv_nmp_block.1} parent=1 // pred_check_branch
      %253 = sbr.rel (0) target = $region77
    $region76: #{conv_nmp_block.1} parent=1 // pred_region
      %s255 = ssub.s32 256, 256
      %256 = vsyncadd [#allocation30], %s255
      %s257 = sshll.u32 [#allocation31], 4
      %s258 = int_to_ptr.vmem [resolvable:$true] %s257
      %263 = dma.hbm_to_vmem [thread:$0]  %s18, 256, %s258, [#allocation30], 64, 64, 4
    $region77: #{conv_nmp_block.1} parent=1 // pred_fallthru
      _
    // Predicated region
    $region78: #{conv_nmp_block.1} parent=1 // pred_check
      _
    $region79: #{conv_nmp_block.1} parent=1 // pred_check_branch
      %265 = sbr.rel (0) target = $region81
    $region80: #{conv_nmp_block.1} parent=1 // pred_region
      %s267 = ssub.s32 16, 16
      %268 = vsyncadd [#allocation33], %s267
      %s270 = sshll.u32 [#allocation32], 4
      %s271 = int_to_ptr.vmem [resolvable:$true] %s270
      %273 = dma.hbm_to_vmem [thread:$0]  %s19, 16, %s271, [#allocation33]
    $region81: #{conv_nmp_block.1} parent=1 // pred_fallthru
      _
    // Predicated region
    $region82: #{conv_nmp_block.1} parent=1 // pred_check
      _
    $region83: #{conv_nmp_block.1} parent=1 // pred_check_branch
      %275 = sbr.rel (0) target = $region85
    $region84: #{conv_nmp_block.1} parent=1 // pred_region
      %s277 = ssub.s32 16, 16
      %278 = vsyncadd [#allocation33], %s277
      %s280 = sshll.u32 [#allocation34], 4
      %s281 = int_to_ptr.vmem [resolvable:$true] %s280
      %283 = dma.hbm_to_vmem [thread:$0]  %s20, 16, %s281, [#allocation33]
    $region85: #{conv_nmp_block.1} parent=1 // pred_fallthru
      _
    // Predicated region
    $region86: #{conv_nmp_block.1} parent=1 // pred_check
      _
    $region87: #{conv_nmp_block.1} parent=1 // pred_check_branch
      %285 = sbr.rel (0) target = $region89
    $region88: #{conv_nmp_block.1} parent=1 // pred_region
      %s287 = ssub.s32 16, 16
      %288 = vsyncadd [#allocation36], %s287
      %s290 = sshll.u32 [#allocation35], 4
      %s291 = int_to_ptr.vmem [resolvable:$true] %s290
      %293 = dma.hbm_to_vmem [thread:$0]  %s21, 16, %s291, [#allocation36]
    $region89: #{conv_nmp_block.1} parent=1 // pred_fallthru
      _
    // Predicated region
    $region90: #{conv_nmp_block.1} parent=1 // pred_check
      _
    $region91: #{conv_nmp_block.1} parent=1 // pred_check_branch
      %295 = sbr.rel (0) target = $region93
    $region92: #{conv_nmp_block.1} parent=1 // pred_region
      %s297 = ssub.s32 16, 16
      %298 = vsyncadd [#allocation36], %s297
      %s300 = sshll.u32 [#allocation37], 4
      %s301 = int_to_ptr.vmem [resolvable:$true] %s300
      %303 = dma.hbm_to_vmem [thread:$0]  %s22, 16, %s301, [#allocation36]
    $region93: #{conv_nmp_block.1} parent=1 // pred_fallthru
      _
    // Predicated region
    $region94: #{conv_nmp_block.1} parent=1 // pred_check
      _
    $region95: #{conv_nmp_block.1} parent=1 // pred_check_branch
      %305 = sbr.rel (0) target = $region97
    $region96: #{conv_nmp_block.1} parent=1 // pred_region
      %s307 = ssub.s32 16, 16
      %308 = vsyncadd [#allocation39], %s307
      %s310 = sshll.u32 [#allocation38], 4
      %s311 = int_to_ptr.vmem [resolvable:$true] %s310
      %313 = dma.hbm_to_vmem [thread:$0]  %s23, 16, %s311, [#allocation39]
    $region97: #{conv_nmp_block.1} parent=1 // pred_fallthru
      _
    // Predicated region
    $region98: #{conv_nmp_block.1} parent=1 // pred_check
      _
    $region99: #{conv_nmp_block.1} parent=1 // pred_check_branch
      %315 = sbr.rel (0) target = $region101
    $region100: #{conv_nmp_block.1} parent=1 // pred_region
      %s317 = ssub.s32 16, 16
      %318 = vsyncadd [#allocation39], %s317
      %s320 = sshll.u32 [#allocation40], 4
      %s321 = int_to_ptr.vmem [resolvable:$true] %s320
      %323 = dma.hbm_to_vmem [thread:$0]  %s24, 16, %s321, [#allocation39]
    $region101: #{conv_nmp_block.1} parent=1 // pred_fallthru
      _
    // Predicated region
    $region102: #{conv_nmp_block.1} parent=1 // pred_check
      _
    $region103: #{conv_nmp_block.1} parent=1 // pred_check_branch
      %325 = sbr.rel (0) target = $region105
    $region104: #{conv_nmp_block.1} parent=1 // pred_region
      %326 = dma.done [#allocation3], 512
    $region105: #{conv_nmp_block.1} parent=1 // pred_fallthru
      _
    // Predicated region
    $region106: #{conv_nmp_block.1} parent=1 // pred_check
      _
    $region107: #{conv_nmp_block.1} parent=1 // pred_check_branch
      %328 = sbr.rel (0) target = $region109
    $region108: #{conv_nmp_block.1} parent=1 // pred_region
      %329 = dma.done [#allocation6], 256
    $region109: #{conv_nmp_block.1} parent=1 // pred_fallthru
      _
    // Predicated region
    $region110: #{conv_nmp_block.1} parent=1 // pred_check
      _
    $region111: #{conv_nmp_block.1} parent=1 // pred_check_branch
      %331 = sbr.rel (0) target = $region113
    $region112: #{conv_nmp_block.1} parent=1 // pred_region
      %332 = dma.done [#allocation6], 256
    $region113: #{conv_nmp_block.1} parent=1 // pred_fallthru
      _
    // Predicated region
    $region114: #{conv_nmp_block.1} parent=1 // pred_check
      _
    $region115: #{conv_nmp_block.1} parent=1 // pred_check_branch
      %334 = sbr.rel (0) target = $region117
    $region116: #{conv_nmp_block.1} parent=1 // pred_region
      %335 = dma.done [#allocation9], 16
    $region117: #{conv_nmp_block.1} parent=1 // pred_fallthru
      _
    // Predicated region
    $region118: #{conv_nmp_block.1} parent=1 // pred_check
      _
    $region119: #{conv_nmp_block.1} parent=1 // pred_check_branch
      %337 = sbr.rel (0) target = $region121
    $region120: #{conv_nmp_block.1} parent=1 // pred_region
      %338 = dma.done [#allocation9], 4352
    $region121: #{conv_nmp_block.1} parent=1 // pred_fallthru
      _
    // Predicated region
    $region122: #{conv_nmp_block.1} parent=1 // pred_check
      _
    $region123: #{conv_nmp_block.1} parent=1 // pred_check_branch
      %340 = sbr.rel (0) target = $region125
    $region124: #{conv_nmp_block.1} parent=1 // pred_region
      %341 = dma.done [#allocation12], 16
    $region125: #{conv_nmp_block.1} parent=1 // pred_fallthru
      _
    // Predicated region
    $region126: #{conv_nmp_block.1} parent=1 // pred_check
      _
    $region127: #{conv_nmp_block.1} parent=1 // pred_check_branch
      %343 = sbr.rel (0) target = $region129
    $region128: #{conv_nmp_block.1} parent=1 // pred_region
      %344 = dma.done [#allocation12], 256
    $region129: #{conv_nmp_block.1} parent=1 // pred_fallthru
      _
    // Predicated region
    $region130: #{conv_nmp_block.1} parent=1 // pred_check
      _
    $region131: #{conv_nmp_block.1} parent=1 // pred_check_branch
      %346 = sbr.rel (0) target = $region133
    $region132: #{conv_nmp_block.1} parent=1 // pred_region
      %347 = dma.done [#allocation15], 16
    $region133: #{conv_nmp_block.1} parent=1 // pred_fallthru
      _
    // Predicated region
    $region134: #{conv_nmp_block.1} parent=1 // pred_check
      _
    $region135: #{conv_nmp_block.1} parent=1 // pred_check_branch
      %349 = sbr.rel (0) target = $region137
    $region136: #{conv_nmp_block.1} parent=1 // pred_region
      %350 = dma.done [#allocation15], 256
    $region137: #{conv_nmp_block.1} parent=1 // pred_fallthru
      _
    // Predicated region
    $region138: #{conv_nmp_block.1} parent=1 // pred_check
      _
    $region139: #{conv_nmp_block.1} parent=1 // pred_check_branch
      %352 = sbr.rel (0) target = $region141
    $region140: #{conv_nmp_block.1} parent=1 // pred_region
      %353 = dma.done [#allocation18], 16
    $region141: #{conv_nmp_block.1} parent=1 // pred_fallthru
      _
    // Predicated region
    $region142: #{conv_nmp_block.1} parent=1 // pred_check
      _
    $region143: #{conv_nmp_block.1} parent=1 // pred_check_branch
      %355 = sbr.rel (0) target = $region145
    $region144: #{conv_nmp_block.1} parent=1 // pred_region
      %356 = dma.done [#allocation18], 256
    $region145: #{conv_nmp_block.1} parent=1 // pred_fallthru
      _
    // Predicated region
    $region146: #{conv_nmp_block.1} parent=1 // pred_check
      _
    $region147: #{conv_nmp_block.1} parent=1 // pred_check_branch
      %358 = sbr.rel (0) target = $region149
    $region148: #{conv_nmp_block.1} parent=1 // pred_region
      %359 = dma.done [#allocation21], 256
    $region149: #{conv_nmp_block.1} parent=1 // pred_fallthru
      _
    // Predicated region
    $region150: #{conv_nmp_block.1} parent=1 // pred_check
      _
    $region151: #{conv_nmp_block.1} parent=1 // pred_check_branch
      %361 = sbr.rel (0) target = $region153
    $region152: #{conv_nmp_block.1} parent=1 // pred_region
      %362 = dma.done [#allocation21], 256
    $region153: #{conv_nmp_block.1} parent=1 // pred_fallthru
      _
    // Predicated region
    $region154: #{conv_nmp_block.1} parent=1 // pred_check
      _
    $region155: #{conv_nmp_block.1} parent=1 // pred_check_branch
      %364 = sbr.rel (0) target = $region157
    $region156: #{conv_nmp_block.1} parent=1 // pred_region
      %365 = dma.done [#allocation24], 256
    $region157: #{conv_nmp_block.1} parent=1 // pred_fallthru
      _
    // Predicated region
    $region158: #{conv_nmp_block.1} parent=1 // pred_check
      _
    $region159: #{conv_nmp_block.1} parent=1 // pred_check_branch
      %367 = sbr.rel (0) target = $region161
    $region160: #{conv_nmp_block.1} parent=1 // pred_region
      %368 = dma.done [#allocation24], 256
    $region161: #{conv_nmp_block.1} parent=1 // pred_fallthru
      _
    // Predicated region
    $region162: #{conv_nmp_block.1} parent=1 // pred_check
      _
    $region163: #{conv_nmp_block.1} parent=1 // pred_check_branch
      %370 = sbr.rel (0) target = $region165
    $region164: #{conv_nmp_block.1} parent=1 // pred_region
      %371 = dma.done [#allocation27], 256
    $region165: #{conv_nmp_block.1} parent=1 // pred_fallthru
      _
    // Predicated region
    $region166: #{conv_nmp_block.1} parent=1 // pred_check
      _
    $region167: #{conv_nmp_block.1} parent=1 // pred_check_branch
      %373 = sbr.rel (0) target = $region169
    $region168: #{conv_nmp_block.1} parent=1 // pred_region
      %374 = dma.done [#allocation27], 256
    $region169: #{conv_nmp_block.1} parent=1 // pred_fallthru
      _
    // Predicated region
    $region170: #{conv_nmp_block.1} parent=1 // pred_check
      _
    $region171: #{conv_nmp_block.1} parent=1 // pred_check_branch
      %376 = sbr.rel (0) target = $region173
    $region172: #{conv_nmp_block.1} parent=1 // pred_region
      %377 = dma.done [#allocation30], 256
    $region173: #{conv_nmp_block.1} parent=1 // pred_fallthru
      _
    // Predicated region
    $region174: #{conv_nmp_block.1} parent=1 // pred_check
      _
    $region175: #{conv_nmp_block.1} parent=1 // pred_check_branch
      %379 = sbr.rel (0) target = $region177
    $region176: #{conv_nmp_block.1} parent=1 // pred_region
      %380 = dma.done [#allocation30], 256
    $region177: #{conv_nmp_block.1} parent=1 // pred_fallthru
      _
    // Predicated region
    $region178: #{conv_nmp_block.1} parent=1 // pred_check
      _
    $region179: #{conv_nmp_block.1} parent=1 // pred_check_branch
      %382 = sbr.rel (0) target = $region181
    $region180: #{conv_nmp_block.1} parent=1 // pred_region
      %383 = dma.done [#allocation33], 16
    $region181: #{conv_nmp_block.1} parent=1 // pred_fallthru
      _
    // Predicated region
    $region182: #{conv_nmp_block.1} parent=1 // pred_check
      _
    $region183: #{conv_nmp_block.1} parent=1 // pred_check_branch
      %385 = sbr.rel (0) target = $region185
    $region184: #{conv_nmp_block.1} parent=1 // pred_region
      %386 = dma.done [#allocation33], 16
    $region185: #{conv_nmp_block.1} parent=1 // pred_fallthru
      _
    // Predicated region
    $region186: #{conv_nmp_block.1} parent=1 // pred_check
      _
    $region187: #{conv_nmp_block.1} parent=1 // pred_check_branch
      %388 = sbr.rel (0) target = $region189
    $region188: #{conv_nmp_block.1} parent=1 // pred_region
      %389 = dma.done [#allocation36], 16
    $region189: #{conv_nmp_block.1} parent=1 // pred_fallthru
      _
    // Predicated region
    $region190: #{conv_nmp_block.1} parent=1 // pred_check
      _
    $region191: #{conv_nmp_block.1} parent=1 // pred_check_branch
      %391 = sbr.rel (0) target = $region193
    $region192: #{conv_nmp_block.1} parent=1 // pred_region
      %392 = dma.done [#allocation36], 16
    $region193: #{conv_nmp_block.1} parent=1 // pred_fallthru
      _
    // Predicated region
    $region194: #{conv_nmp_block.1} parent=1 // pred_check
      _
    $region195: #{conv_nmp_block.1} parent=1 // pred_check_branch
      %394 = sbr.rel (0) target = $region197
    $region196: #{conv_nmp_block.1} parent=1 // pred_region
      %395 = dma.done [#allocation39], 16
    $region197: #{conv_nmp_block.1} parent=1 // pred_fallthru
      _
    // Predicated region
    $region198: #{conv_nmp_block.1} parent=1 // pred_check
      _
    $region199: #{conv_nmp_block.1} parent=1 // pred_check_branch
      %397 = sbr.rel (0) target = $region201
    $region200: #{conv_nmp_block.1} parent=1 // pred_region
      %398 = dma.done [#allocation39], 16
    $region201: #{conv_nmp_block.1} parent=1 // pred_fallthru
      _
    %v400 = vld [vmem:[#allocation2] sm:$0xff]
    %v401 = vld [vmem:[#allocation2 + $0x8] sm:$0xff]
    %v402 = vld [vmem:[#allocation2 + $0x10] sm:$0xff]
    %v403 = vld [vmem:[#allocation2 + $0x18] sm:$0xff]
    %v404 = vpack.c.bf16 %v401, %v400
    %v405 = vpack.c.bf16 %v403, %v402
    %v406 = vld [vmem:[#allocation7] sm:$0xf]
    %v407 = vld [vmem:[#allocation7 + $0x4] sm:$0xf]
    %v408 = vld [vmem:[#allocation7 + $0x8] sm:$0xf]
    %v409 = vld [vmem:[#allocation7 + $0xc] sm:$0xf]
    %v410 = vld [vmem:[#allocation8] sm:$0x1]
    %v412 = vlaneseq
    %v413 = vshrl.u32 %v412, 7
    %v414 = vsub.s32 0, %v413
    %v415 = vrot.slane %v410, %v414
    %v421 = vunpack.c.l.b16 %v406
    %v422 = vunpack.c.l.b16 %v407
    %v423 = vunpack.c.l.b16 %v408
    %v424 = vunpack.c.l.b16 %v409
    %v425 = vpack.c.b16 %v422, %v421
    %v426 = vpack.c.b16 %v424, %v423
    %vm429 = vcmask 261120
    %v431 = vsel %vm429, %v404, 0
    %v434 = vsel %vm429, %v405, 0
    %436 = vmatprep.subr.bf16.mxu0 0
    %437 = vmatpush1.bf16.msra.mxu0 %v425
    %438 = vmatprep.subr.bf16.mxu0 0
    %439 = vmatpush1.bf16.msra.mxu0 %v426
    %440 = vmatprep.subr.bf16.mxu0 0
    %441 = vmatpush1.bf16.msra.mxu0 0
    %442 = vmatprep.subr.bf16.mxu0 0
    %443 = vmatpush1.bf16.msra.mxu0 0
    %444 = vmatprep.subr.bf16.mxu0 0
    %445 = vmatpush1.bf16.msra.mxu0 0
    %446 = vmatprep.subr.bf16.mxu0 0
    %447 = vmatpush1.bf16.msra.mxu0 0
    %448 = vmatprep.subr.bf16.mxu0 0
    %449 = vmatpush1.bf16.msra.mxu0 0
    %450 = vmatprep.subr.bf16.mxu0 0
    %451 = vmatpush1.bf16.msra.mxu0 0
    %452 = vmatprep.subr.bf16.mxu0 0
    %453 = vmatpush1.bf16.msra.mxu0 0
    %454 = vmatprep.subr.bf16.mxu0 0
    %455 = vmatpush1.bf16.msra.mxu0 0
    %456 = vmatprep.subr.bf16.mxu0 0
    %457 = vmatpush1.bf16.msra.mxu0 0
    %458 = vmatprep.subr.bf16.mxu0 0
    %459 = vmatpush1.bf16.msra.mxu0 0
    %460 = vmatprep.subr.bf16.mxu0 0
    %461 = vmatpush1.bf16.msra.mxu0 0
    %462 = vmatprep.subr.bf16.mxu0 0
    %463 = vmatpush1.bf16.msra.mxu0 0
    %464 = vmatprep.subr.bf16.mxu0 0
    %465 = vmatpush1.bf16.msra.mxu0 0
    %466 = vmatprep.subr.bf16.mxu0 0
    %467 = vmatpush1.bf16.msra.mxu0 0
    %468 = vmatprep.mubr.bf16.mxu0 0
    %469 = vmatmul.mubr.bf16.gmra.mrb[0].mxu0 %v431
    %v470 = vpop.f32.mrb[0].mxu0
    %v471 = vadd.f32 %v415, %v470
    %v472 = vpop.f32.mrb[0].mxu0
    %v473 = vpop.f32.mrb[0].mxu0
    %v474 = vadd.f32 %v415, %v473
    %v475 = vpop.f32.mrb[0].mxu0
    %476 = vmatprep.mubr.bf16.mxu0 0
    %477 = vmatmul.mubr.bf16.gmra.mrb[0].mxu0 %v434
    %v478 = vpop.f32.mrb[0].mxu0
    %v479 = vadd.f32 %v415, %v478
    %v480 = vpop.f32.mrb[0].mxu0
    %v481 = vpop.f32.mrb[0].mxu0
    %v482 = vadd.f32 %v415, %v481
    %v483 = vpop.f32.mrb[0].mxu0
    %484 = vdwg.mxu0
    %v485 = vmax.f32 %v471, 0.0
    %v486 = vmax.f32 %v474, 0.0
    %v487 = vmax.f32 %v479, 0.0
    %v488 = vmax.f32 %v482, 0.0
    %v489 = vlaneseq
    %v490 = vshrl.u32 %v489, 7
    %v491 = vadd.s32 %v490, 8
    %v492 = vadd.s32 %v490, 4294967288
    %v493 = vadd.s32 %v491, 4294967288
    %vm494 = vcmp.ge.s32.totalorder %v492, 0
    %vm495 = vcmp.ge.s32.totalorder %v493, 0
    %vm496 = vcmp.lt.s32.totalorder %v492, 16
    %vm497 = vcmp.lt.s32.totalorder %v493, 16
    %vm498 = vmand %vm494, %vm496
    %vm499 = vmand %vm495, %vm497
    %v500 = vsel %vm498, %v488, 0.0
    %v501 = vsel %vm499, %v485, 0.0
    %v502 = vsel %vm498, %v486, 0.0
    %v503 = vsel %vm499, %v487, 0.0
    %v504 = vrot.slane %v485, 1
    %v505 = vrot.slane %v486, 1
    %v506 = vrot.slane %v487, 1
    %v507 = vrot.slane %v488, 1
    %vm508 = vcmp.lt.s32.totalorder %v490, 7
    %v509 = vsel %vm508, %v506, %v507
    %v510 = vsel %vm508, %v505, %v506
    %v511 = vsel %vm508, %v504, %v505
    %v512 = vsel %vm508, %v507, %v504
    %v513 = vadd.s32 %v490, 4294967289
    %v514 = vadd.s32 %v491, 4294967289
    %vm515 = vcmp.ge.s32.totalorder %v513, 0
    %vm516 = vcmp.ge.s32.totalorder %v514, 0
    %vm517 = vcmp.lt.s32.totalorder %v513, 16
    %vm518 = vcmp.lt.s32.totalorder %v514, 16
    %vm519 = vmand %vm515, %vm517
    %vm520 = vmand %vm516, %vm518
    %v521 = vsel %vm519, %v512, 0.0
    %v522 = vsel %vm520, %v511, 0.0
    %v523 = vsel %vm519, %v510, 0.0
    %v524 = vsel %vm520, %v509, 0.0
    %v525 = vrot.slane %v485, 2
    %v526 = vrot.slane %v486, 2
    %v527 = vrot.slane %v487, 2
    %v528 = vrot.slane %v488, 2
    %vm529 = vcmp.lt.s32.totalorder %v490, 6
    %v530 = vsel %vm529, %v527, %v528
    %v531 = vsel %vm529, %v526, %v527
    %v532 = vsel %vm529, %v525, %v526
    %v533 = vsel %vm529, %v528, %v525
    %v534 = vadd.s32 %v490, 4294967290
    %v535 = vadd.s32 %v491, 4294967290
    %vm536 = vcmp.ge.s32.totalorder %v534, 0
    %vm537 = vcmp.ge.s32.totalorder %v535, 0
    %vm538 = vcmp.lt.s32.totalorder %v534, 16
    %vm539 = vcmp.lt.s32.totalorder %v535, 16
    %vm540 = vmand %vm536, %vm538
    %vm541 = vmand %vm537, %vm539
    %v542 = vsel %vm540, %v533, 0.0
    %v543 = vsel %vm541, %v532, 0.0
    %v544 = vsel %vm540, %v531, 0.0
    %v545 = vsel %vm541, %v530, 0.0
    %v546 = vrot.slane %v485, 3
    %v547 = vrot.slane %v486, 3
    %v548 = vrot.slane %v487, 3
    %v549 = vrot.slane %v488, 3
    %vm550 = vcmp.lt.s32.totalorder %v490, 5
    %v551 = vsel %vm550, %v548, %v549
    %v552 = vsel %vm550, %v547, %v548
    %v553 = vsel %vm550, %v546, %v547
    %v554 = vsel %vm550, %v549, %v546
    %v555 = vadd.s32 %v490, 4294967291
    %v556 = vadd.s32 %v491, 4294967291
    %vm557 = vcmp.ge.s32.totalorder %v555, 0
    %vm558 = vcmp.ge.s32.totalorder %v556, 0
    %vm559 = vcmp.lt.s32.totalorder %v555, 16
    %vm560 = vcmp.lt.s32.totalorder %v556, 16
    %vm561 = vmand %vm557, %vm559
    %vm562 = vmand %vm558, %vm560
    %v563 = vsel %vm561, %v554, 0.0
    %v564 = vsel %vm562, %v553, 0.0
    %v565 = vsel %vm561, %v552, 0.0
    %v566 = vsel %vm562, %v551, 0.0
    %v567 = vrot.slane %v485, 4
    %v568 = vrot.slane %v486, 4
    %v569 = vrot.slane %v487, 4
    %v570 = vrot.slane %v488, 4
    %vm571 = vcmp.lt.s32.totalorder %v490, 4
    %v572 = vsel %vm571, %v569, %v570
    %v573 = vsel %vm571, %v568, %v569
    %v574 = vsel %vm571, %v567, %v568
    %v575 = vsel %vm571, %v570, %v567
    %v576 = vadd.s32 %v490, 4294967292
    %v577 = vadd.s32 %v491, 4294967292
    %vm578 = vcmp.ge.s32.totalorder %v576, 0
    %vm579 = vcmp.ge.s32.totalorder %v577, 0
    %vm580 = vcmp.lt.s32.totalorder %v576, 16
    %vm581 = vcmp.lt.s32.totalorder %v577, 16
    %vm582 = vmand %vm578, %vm580
    %vm583 = vmand %vm579, %vm581
    %v584 = vsel %vm582, %v575, 0.0
    %v585 = vsel %vm583, %v574, 0.0
    %v586 = vsel %vm582, %v573, 0.0
    %v587 = vsel %vm583, %v572, 0.0
    %v588 = vrot.slane %v485, 5
    %v589 = vrot.slane %v486, 5
    %v590 = vrot.slane %v487, 5
    %v591 = vrot.slane %v488, 5
    %vm592 = vcmp.lt.s32.totalorder %v490, 3
    %v593 = vsel %vm592, %v590, %v591
    %v594 = vsel %vm592, %v589, %v590
    %v595 = vsel %vm592, %v588, %v589
    %v596 = vsel %vm592, %v591, %v588
    %v597 = vadd.s32 %v490, 4294967293
    %v598 = vadd.s32 %v491, 4294967293
    %vm599 = vcmp.ge.s32.totalorder %v597, 0
    %vm600 = vcmp.ge.s32.totalorder %v598, 0
    %vm601 = vcmp.lt.s32.totalorder %v597, 16
    %vm602 = vcmp.lt.s32.totalorder %v598, 16
    %vm603 = vmand %vm599, %vm601
    %vm604 = vmand %vm600, %vm602
    %v605 = vsel %vm603, %v596, 0.0
    %v606 = vsel %vm604, %v595, 0.0
    %v607 = vsel %vm603, %v594, 0.0
    %v608 = vsel %vm604, %v593, 0.0
    %v609 = vrot.slane %v485, 6
    %v610 = vrot.slane %v486, 6
    %v611 = vrot.slane %v487, 6
    %v612 = vrot.slane %v488, 6
    %vm613 = vcmp.lt.s32.totalorder %v490, 2
    %v614 = vsel %vm613, %v611, %v612
    %v615 = vsel %vm613, %v610, %v611
    %v616 = vsel %vm613, %v609, %v610
    %v617 = vsel %vm613, %v612, %v609
    %v618 = vadd.s32 %v490, 4294967294
    %v619 = vadd.s32 %v491, 4294967294
    %vm620 = vcmp.ge.s32.totalorder %v618, 0
    %vm621 = vcmp.ge.s32.totalorder %v619, 0
    %vm622 = vcmp.lt.s32.totalorder %v618, 16
    %vm623 = vcmp.lt.s32.totalorder %v619, 16
    %vm624 = vmand %vm620, %vm622
    %vm625 = vmand %vm621, %vm623
    %v626 = vsel %vm624, %v617, 0.0
    %v627 = vsel %vm625, %v616, 0.0
    %v628 = vsel %vm624, %v615, 0.0
    %v629 = vsel %vm625, %v614, 0.0
    %v630 = vrot.slane %v485, 7
    %v631 = vrot.slane %v486, 7
    %v632 = vrot.slane %v487, 7
    %v633 = vrot.slane %v488, 7
    %vm634 = vcmp.lt.s32.totalorder %v490, 1
    %v635 = vsel %vm634, %v632, %v633
    %v636 = vsel %vm634, %v631, %v632
    %v637 = vsel %vm634, %v630, %v631
    %v638 = vsel %vm634, %v633, %v630
    %v639 = vadd.s32 %v490, 4294967295
    %v640 = vadd.s32 %v491, 4294967295
    %vm641 = vcmp.ge.s32.totalorder %v639, 0
    %vm642 = vcmp.ge.s32.totalorder %v640, 0
    %vm643 = vcmp.lt.s32.totalorder %v639, 16
    %vm644 = vcmp.lt.s32.totalorder %v640, 16
    %vm645 = vmand %vm641, %vm643
    %vm646 = vmand %vm642, %vm644
    %v647 = vsel %vm645, %v638, 0.0
    %v648 = vsel %vm646, %v637, 0.0
    %v649 = vsel %vm645, %v636, 0.0
    %v650 = vsel %vm646, %v635, 0.0
    %vm651 = vcmp.ge.s32.totalorder %v490, 0
    %vm652 = vcmp.ge.s32.totalorder %v491, 0
    %vm653 = vcmp.lt.s32.totalorder %v490, 16
    %vm654 = vcmp.lt.s32.totalorder %v491, 16
    %vm655 = vmand %vm651, %vm653
    %vm656 = vmand %vm652, %vm654
    %v657 = vsel %vm655, %v485, 0.0
    %v658 = vsel %vm656, %v486, 0.0
    %v659 = vsel %vm655, %v487, 0.0
    %v660 = vsel %vm656, %v488, 0.0
    %v661 = vadd.s32 %v490, 1
    %v662 = vadd.s32 %v491, 1
    %vm663 = vcmp.ge.s32.totalorder %v661, 0
    %vm664 = vcmp.ge.s32.totalorder %v662, 0
    %vm665 = vcmp.lt.s32.totalorder %v661, 16
    %vm666 = vcmp.lt.s32.totalorder %v662, 16
    %vm667 = vmand %vm663, %vm665
    %vm668 = vmand %vm664, %vm666
    %v669 = vsel %vm667, %v511, 0.0
    %v670 = vsel %vm668, %v510, 0.0
    %v671 = vsel %vm667, %v509, 0.0
    %v672 = vsel %vm668, %v512, 0.0
    %v673 = vadd.s32 %v490, 2
    %v674 = vadd.s32 %v491, 2
    %vm675 = vcmp.ge.s32.totalorder %v673, 0
    %vm676 = vcmp.ge.s32.totalorder %v674, 0
    %vm677 = vcmp.lt.s32.totalorder %v673, 16
    %vm678 = vcmp.lt.s32.totalorder %v674, 16
    %vm679 = vmand %vm675, %vm677
    %vm680 = vmand %vm676, %vm678
    %v681 = vsel %vm679, %v532, 0.0
    %v682 = vsel %vm680, %v531, 0.0
    %v683 = vsel %vm679, %v530, 0.0
    %v684 = vsel %vm680, %v533, 0.0
    %v685 = vadd.s32 %v490, 3
    %v686 = vadd.s32 %v491, 3
    %vm687 = vcmp.ge.s32.totalorder %v685, 0
    %vm688 = vcmp.ge.s32.totalorder %v686, 0
    %vm689 = vcmp.lt.s32.totalorder %v685, 16
    %vm690 = vcmp.lt.s32.totalorder %v686, 16
    %vm691 = vmand %vm687, %vm689
    %vm692 = vmand %vm688, %vm690
    %v693 = vsel %vm691, %v553, 0.0
    %v694 = vsel %vm692, %v552, 0.0
    %v695 = vsel %vm691, %v551, 0.0
    %v696 = vsel %vm692, %v554, 0.0
    %v697 = vadd.s32 %v490, 4
    %v698 = vadd.s32 %v491, 4
    %vm699 = vcmp.ge.s32.totalorder %v697, 0
    %vm700 = vcmp.ge.s32.totalorder %v698, 0
    %vm701 = vcmp.lt.s32.totalorder %v697, 16
    %vm702 = vcmp.lt.s32.totalorder %v698, 16
    %vm703 = vmand %vm699, %vm701
    %vm704 = vmand %vm700, %vm702
    %v705 = vsel %vm703, %v574, 0.0
    %v706 = vsel %vm704, %v573, 0.0
    %v707 = vsel %vm703, %v572, 0.0
    %v708 = vsel %vm704, %v575, 0.0
    %v709 = vadd.s32 %v490, 5
    %v710 = vadd.s32 %v491, 5
    %vm711 = vcmp.ge.s32.totalorder %v709, 0
    %vm712 = vcmp.ge.s32.totalorder %v710, 0
    %vm713 = vcmp.lt.s32.totalorder %v709, 16
    %vm714 = vcmp.lt.s32.totalorder %v710, 16
    %vm715 = vmand %vm711, %vm713
    %vm716 = vmand %vm712, %vm714
    %v717 = vsel %vm715, %v595, 0.0
    %v718 = vsel %vm716, %v594, 0.0
    %v719 = vsel %vm715, %v593, 0.0
    %v720 = vsel %vm716, %v596, 0.0
    %v721 = vadd.s32 %v490, 6
    %v722 = vadd.s32 %v491, 6
    %vm723 = vcmp.ge.s32.totalorder %v721, 0
    %vm724 = vcmp.ge.s32.totalorder %v722, 0
    %vm725 = vcmp.lt.s32.totalorder %v721, 16
    %vm726 = vcmp.lt.s32.totalorder %v722, 16
    %vm727 = vmand %vm723, %vm725
    %vm728 = vmand %vm724, %vm726
    %v729 = vsel %vm727, %v616, 0.0
    %v730 = vsel %vm728, %v615, 0.0
    %v731 = vsel %vm727, %v614, 0.0
    %v732 = vsel %vm728, %v617, 0.0
    %v733 = vadd.s32 %v490, 7
    %v734 = vadd.s32 %v491, 7
    %vm735 = vcmp.ge.s32.totalorder %v733, 0
    %vm736 = vcmp.ge.s32.totalorder %v734, 0
    %vm737 = vcmp.lt.s32.totalorder %v733, 16
    %vm738 = vcmp.lt.s32.totalorder %v734, 16
    %vm739 = vmand %vm735, %vm737
    %vm740 = vmand %vm736, %vm738
    %v741 = vsel %vm739, %v637, 0.0
    %v742 = vsel %vm740, %v636, 0.0
    %v743 = vsel %vm739, %v635, 0.0
    %v744 = vsel %vm740, %v638, 0.0
    %v745 = vadd.s32 %v491, 8
    %vm746 = vcmp.ge.s32.totalorder %v745, 0
    %vm747 = vcmp.lt.s32.totalorder %v745, 16
    %vm748 = vmand %vm746, %vm747
    %v749 = vsel %vm748, %v487, 0.0
    %v750 = vsel %vm748, %v485, 0.0
    %755 = vrot.lane.b32.xlu0 %v521, 32
    %v756 = vpop.permute.xlu0 %755
    %757 = vrot.lane.b32.xlu0 %v522, 32
    %v758 = vpop.permute.xlu0 %757
    %759 = vrot.lane.b32.xlu0 %v523, 32
    %v760 = vpop.permute.xlu0 %759
    %761 = vrot.lane.b32.xlu0 %v524, 32
    %v762 = vpop.permute.xlu0 %761
    %771 = vrot.lane.b32.xlu0 %v542, 64
    %v772 = vpop.permute.xlu0 %771
    %773 = vrot.lane.b32.xlu0 %v543, 64
    %v774 = vpop.permute.xlu0 %773
    %775 = vrot.lane.b32.xlu0 %v544, 64
    %v776 = vpop.permute.xlu0 %775
    %777 = vrot.lane.b32.xlu0 %v545, 64
    %v778 = vpop.permute.xlu0 %777
    %787 = vrot.lane.b32.xlu0 %v563, 96
    %v788 = vpop.permute.xlu0 %787
    %789 = vrot.lane.b32.xlu0 %v564, 96
    %v790 = vpop.permute.xlu0 %789
    %791 = vrot.lane.b32.xlu0 %v565, 96
    %v792 = vpop.permute.xlu0 %791
    %793 = vrot.lane.b32.xlu0 %v566, 96
    %v794 = vpop.permute.xlu0 %793
    %803 = vrot.lane.b32.xlu0 %v605, 32
    %v804 = vpop.permute.xlu0 %803
    %805 = vrot.lane.b32.xlu0 %v606, 32
    %v806 = vpop.permute.xlu0 %805
    %807 = vrot.lane.b32.xlu0 %v607, 32
    %v808 = vpop.permute.xlu0 %807
    %809 = vrot.lane.b32.xlu0 %v608, 32
    %v810 = vpop.permute.xlu0 %809
    %819 = vrot.lane.b32.xlu0 %v626, 64
    %v820 = vpop.permute.xlu0 %819
    %821 = vrot.lane.b32.xlu0 %v627, 64
    %v822 = vpop.permute.xlu0 %821
    %823 = vrot.lane.b32.xlu0 %v628, 64
    %v824 = vpop.permute.xlu0 %823
    %825 = vrot.lane.b32.xlu0 %v629, 64
    %v826 = vpop.permute.xlu0 %825
    %835 = vrot.lane.b32.xlu0 %v647, 96
    %v836 = vpop.permute.xlu0 %835
    %837 = vrot.lane.b32.xlu0 %v648, 96
    %v838 = vpop.permute.xlu0 %837
    %839 = vrot.lane.b32.xlu0 %v649, 96
    %v840 = vpop.permute.xlu0 %839
    %841 = vrot.lane.b32.xlu0 %v650, 96
    %v842 = vpop.permute.xlu0 %841
    %851 = vrot.lane.b32.xlu0 %v669, 32
    %v852 = vpop.permute.xlu0 %851
    %853 = vrot.lane.b32.xlu0 %v670, 32
    %v854 = vpop.permute.xlu0 %853
    %855 = vrot.lane.b32.xlu0 %v671, 32
    %v856 = vpop.permute.xlu0 %855
    %857 = vrot.lane.b32.xlu0 %v672, 32
    %v858 = vpop.permute.xlu0 %857
    %867 = vrot.lane.b32.xlu0 %v681, 64
    %v868 = vpop.permute.xlu0 %867
    %869 = vrot.lane.b32.xlu0 %v682, 64
    %v870 = vpop.permute.xlu0 %869
    %871 = vrot.lane.b32.xlu0 %v683, 64
    %v872 = vpop.permute.xlu0 %871
    %873 = vrot.lane.b32.xlu0 %v684, 64
    %v874 = vpop.permute.xlu0 %873
    %883 = vrot.lane.b32.xlu0 %v693, 96
    %v884 = vpop.permute.xlu0 %883
    %885 = vrot.lane.b32.xlu0 %v694, 96
    %v886 = vpop.permute.xlu0 %885
    %887 = vrot.lane.b32.xlu0 %v695, 96
    %v888 = vpop.permute.xlu0 %887
    %889 = vrot.lane.b32.xlu0 %v696, 96
    %v890 = vpop.permute.xlu0 %889
    %899 = vrot.lane.b32.xlu0 %v717, 32
    %v900 = vpop.permute.xlu0 %899
    %901 = vrot.lane.b32.xlu0 %v718, 32
    %v902 = vpop.permute.xlu0 %901
    %903 = vrot.lane.b32.xlu0 %v719, 32
    %v904 = vpop.permute.xlu0 %903
    %905 = vrot.lane.b32.xlu0 %v720, 32
    %v906 = vpop.permute.xlu0 %905
    %915 = vrot.lane.b32.xlu0 %v729, 64
    %v916 = vpop.permute.xlu0 %915
    %917 = vrot.lane.b32.xlu0 %v730, 64
    %v918 = vpop.permute.xlu0 %917
    %919 = vrot.lane.b32.xlu0 %v731, 64
    %v920 = vpop.permute.xlu0 %919
    %921 = vrot.lane.b32.xlu0 %v732, 64
    %v922 = vpop.permute.xlu0 %921
    %931 = vrot.lane.b32.xlu0 %v741, 96
    %v932 = vpop.permute.xlu0 %931
    %933 = vrot.lane.b32.xlu0 %v742, 96
    %v934 = vpop.permute.xlu0 %933
    %935 = vrot.lane.b32.xlu0 %v743, 96
    %v936 = vpop.permute.xlu0 %935
    %937 = vrot.lane.b32.xlu0 %v744, 96
    %v938 = vpop.permute.xlu0 %937
    %v943 = vsel %vm429, %v500, %v756
    %v944 = vsel %vm429, %v501, %v758
    %v945 = vsel %vm429, %v502, %v760
    %v946 = vsel %vm429, %v503, %v762
    %vm947 = vcmask 523264
    %v948 = vsel %vm947, %v943, %v772
    %v949 = vsel %vm947, %v944, %v774
    %v950 = vsel %vm947, %v945, %v776
    %v951 = vsel %vm947, %v946, %v778
    %vm952 = vcmask 785408
    %v953 = vsel %vm952, %v948, %v788
    %v954 = vsel %vm952, %v949, %v790
    %v955 = vsel %vm952, %v950, %v792
    %v956 = vsel %vm952, %v951, %v794
    %v957 = vsel %vm429, %v584, %v804
    %v958 = vsel %vm429, %v585, %v806
    %v959 = vsel %vm429, %v586, %v808
    %v960 = vsel %vm429, %v587, %v810
    %v961 = vsel %vm947, %v957, %v820
    %v962 = vsel %vm947, %v958, %v822
    %v963 = vsel %vm947, %v959, %v824
    %v964 = vsel %vm947, %v960, %v826
    %v965 = vsel %vm952, %v961, %v836
    %v966 = vsel %vm952, %v962, %v838
    %v967 = vsel %vm952, %v963, %v840
    %v968 = vsel %vm952, %v964, %v842
    %v969 = vsel %vm429, %v657, %v852
    %v970 = vsel %vm429, %v658, %v854
    %v971 = vsel %vm429, %v659, %v856
    %v972 = vsel %vm429, %v660, %v858
    %v973 = vsel %vm947, %v969, %v868
    %v974 = vsel %vm947, %v970, %v870
    %v975 = vsel %vm947, %v971, %v872
    %v976 = vsel %vm947, %v972, %v874
    %v977 = vsel %vm952, %v973, %v884
    %v978 = vsel %vm952, %v974, %v886
    %v979 = vsel %vm952, %v975, %v888
    %v980 = vsel %vm952, %v976, %v890
    %v981 = vsel %vm429, %v705, %v900
    %v982 = vsel %vm429, %v706, %v902
    %v983 = vsel %vm429, %v707, %v904
    %v984 = vsel %vm429, %v708, %v906
    %v985 = vsel %vm947, %v981, %v916
    %v986 = vsel %vm947, %v982, %v918
    %v987 = vsel %vm947, %v983, %v920
    %v988 = vsel %vm947, %v984, %v922
    %v989 = vsel %vm952, %v985, %v932
    %v990 = vsel %vm952, %v986, %v934
    %v991 = vsel %vm952, %v987, %v936
    %v992 = vsel %vm952, %v988, %v938
    %v993 = vpack.c.bf16 %v954, %v953
    %v994 = vpack.c.bf16 %v966, %v965
    %v995 = vpack.c.bf16 %v978, %v977
    %v996 = vpack.c.bf16 %v990, %v989
    %v997 = vpack.c.bf16 %v749, %v658
    %v998 = vpack.c.bf16 %v956, %v955
    %v999 = vpack.c.bf16 %v968, %v967
    %v1000 = vpack.c.bf16 %v980, %v979
    %v1001 = vpack.c.bf16 %v992, %v991
    %v1002 = vpack.c.bf16 %v750, %v660
    %v1003 = vld [vmem:[#allocation10] sm:$0xf]
    %v1004 = vld [vmem:[#allocation10 + $0x4] sm:$0xf]
    %v1005 = vld [vmem:[#allocation10 + $0x8] sm:$0xf]
    %v1006 = vld [vmem:[#allocation10 + $0xc] sm:$0xf]
    %v1007 = vld [vmem:[#allocation10 + $0x10] sm:$0xf]
    %v1008 = vld [vmem:[#allocation10 + $0x14] sm:$0xf]
    %v1009 = vld [vmem:[#allocation10 + $0x18] sm:$0xf]
    %v1010 = vld [vmem:[#allocation10 + $0x1c] sm:$0xf]
    %v1011 = vld [vmem:[#allocation10 + $0x20] sm:$0xf]
    %v1012 = vld [vmem:[#allocation10 + $0x24] sm:$0xf]
    %v1013 = vld [vmem:[#allocation10 + $0x28] sm:$0xf]
    %v1014 = vld [vmem:[#allocation10 + $0x2c] sm:$0xf]
    %v1015 = vld [vmem:[#allocation10 + $0x30] sm:$0xf]
    %v1016 = vld [vmem:[#allocation10 + $0x34] sm:$0xf]
    %v1017 = vld [vmem:[#allocation10 + $0x38] sm:$0xf]
    %v1018 = vld [vmem:[#allocation10 + $0x3c] sm:$0xf]
    %v1019 = vld [vmem:[#allocation10 + $0x40] sm:$0xf]
    %v1020 = vld [vmem:[#allocation10 + $0x44] sm:$0xf]
    %v1021 = vld [vmem:[#allocation10 + $0x48] sm:$0xf]
    %v1022 = vld [vmem:[#allocation10 + $0x4c] sm:$0xf]
    %v1023 = vld [vmem:[#allocation10 + $0x50] sm:$0xf]
    %v1024 = vld [vmem:[#allocation10 + $0x54] sm:$0xf]
    %v1025 = vld [vmem:[#allocation10 + $0x58] sm:$0xf]
    %v1026 = vld [vmem:[#allocation10 + $0x5c] sm:$0xf]
    %v1027 = vld [vmem:[#allocation10 + $0x60] sm:$0xf]
    %v1028 = vld [vmem:[#allocation10 + $0x64] sm:$0xf]
    %v1029 = vld [vmem:[#allocation10 + $0x68] sm:$0xf]
    %v1030 = vld [vmem:[#allocation10 + $0x6c] sm:$0xf]
    %v1031 = vld [vmem:[#allocation10 + $0x70] sm:$0xf]
    %v1032 = vld [vmem:[#allocation10 + $0x74] sm:$0xf]
    %v1033 = vld [vmem:[#allocation10 + $0x78] sm:$0xf]
    %v1034 = vld [vmem:[#allocation10 + $0x7c] sm:$0xf]
    %v1035 = vld [vmem:[#allocation10 + $0x80] sm:$0xf]
    %v1036 = vld [vmem:[#allocation10 + $0x84] sm:$0xf]
    %v1037 = vld [vmem:[#allocation10 + $0x88] sm:$0xf]
    %v1038 = vld [vmem:[#allocation10 + $0x8c] sm:$0xf]
    %v1039 = vld [vmem:[#allocation10 + $0x90] sm:$0xf]
    %v1040 = vld [vmem:[#allocation10 + $0x94] sm:$0xf]
    %v1041 = vld [vmem:[#allocation10 + $0x98] sm:$0xf]
    %v1042 = vld [vmem:[#allocation10 + $0x9c] sm:$0xf]
    %v1043 = vld [vmem:[#allocation10 + $0xa0] sm:$0xf]
    %v1044 = vld [vmem:[#allocation10 + $0xa4] sm:$0xf]
    %v1045 = vld [vmem:[#allocation10 + $0xa8] sm:$0xf]
    %v1046 = vld [vmem:[#allocation10 + $0xac] sm:$0xf]
    %v1047 = vld [vmem:[#allocation10 + $0xb0] sm:$0xf]
    %v1048 = vld [vmem:[#allocation10 + $0xb4] sm:$0xf]
    %v1049 = vld [vmem:[#allocation10 + $0xb8] sm:$0xf]
    %v1050 = vld [vmem:[#allocation10 + $0xbc] sm:$0xf]
    %v1051 = vld [vmem:[#allocation10 + $0xc0] sm:$0xf]
    %v1052 = vld [vmem:[#allocation10 + $0xc4] sm:$0xf]
    %v1053 = vld [vmem:[#allocation10 + $0xc8] sm:$0xf]
    %v1054 = vld [vmem:[#allocation10 + $0xcc] sm:$0xf]
    %v1055 = vld [vmem:[#allocation10 + $0xd0] sm:$0xf]
    %v1056 = vld [vmem:[#allocation10 + $0xd4] sm:$0xf]
    %v1057 = vld [vmem:[#allocation10 + $0xd8] sm:$0xf]
    %v1058 = vld [vmem:[#allocation10 + $0xdc] sm:$0xf]
    %v1059 = vld [vmem:[#allocation10 + $0xe0] sm:$0xf]
    %v1060 = vld [vmem:[#allocation10 + $0xe4] sm:$0xf]
    %v1061 = vld [vmem:[#allocation10 + $0xe8] sm:$0xf]
    %v1062 = vld [vmem:[#allocation10 + $0xec] sm:$0xf]
    %v1063 = vld [vmem:[#allocation10 + $0xf0] sm:$0xf]
    %v1064 = vld [vmem:[#allocation10 + $0xf4] sm:$0xf]
    %v1065 = vld [vmem:[#allocation10 + $0xf8] sm:$0xf]
    %v1066 = vld [vmem:[#allocation10 + $0xfc] sm:$0xf]
    %v1067 = vld [vmem:[#allocation10 + $0x100] sm:$0xf]
    %v1068 = vld [vmem:[#allocation10 + $0x104] sm:$0xf]
    %v1069 = vld [vmem:[#allocation10 + $0x108] sm:$0xf]
    %v1070 = vld [vmem:[#allocation10 + $0x10c] sm:$0xf]
    %v1071 = vld [vmem:[#allocation11] sm:$0x1]
    %v1073 = vlaneseq
    %v1074 = vshrl.u32 %v1073, 7
    %v1075 = vsub.s32 0, %v1074
    %v1076 = vrot.slane %v1071, %v1075
    %v1146 = vunpack.c.l.b16 %v1003
    %v1147 = vunpack.c.l.b16 %v1004
    %v1148 = vunpack.c.l.b16 %v1005
    %v1149 = vunpack.c.l.b16 %v1006
    %v1150 = vunpack.c.l.b16 %v1007
    %v1151 = vunpack.c.l.b16 %v1008
    %v1152 = vunpack.c.l.b16 %v1009
    %v1153 = vunpack.c.l.b16 %v1010
    %v1154 = vunpack.c.l.b16 %v1011
    %v1155 = vunpack.c.l.b16 %v1012
    %v1156 = vunpack.c.l.b16 %v1013
    %v1157 = vunpack.c.l.b16 %v1014
    %v1158 = vunpack.c.l.b16 %v1015
    %v1159 = vunpack.c.l.b16 %v1016
    %v1160 = vunpack.c.l.b16 %v1017
    %v1161 = vunpack.c.l.b16 %v1018
    %v1162 = vunpack.c.l.b16 %v1019
    %v1163 = vunpack.c.l.b16 %v1020
    %v1164 = vunpack.c.l.b16 %v1021
    %v1165 = vunpack.c.l.b16 %v1022
    %v1166 = vunpack.c.l.b16 %v1023
    %v1167 = vunpack.c.l.b16 %v1024
    %v1168 = vunpack.c.l.b16 %v1025
    %v1169 = vunpack.c.l.b16 %v1026
    %v1170 = vunpack.c.l.b16 %v1027
    %v1171 = vunpack.c.l.b16 %v1028
    %v1172 = vunpack.c.l.b16 %v1029
    %v1173 = vunpack.c.l.b16 %v1030
    %v1174 = vunpack.c.l.b16 %v1031
    %v1175 = vunpack.c.l.b16 %v1032
    %v1176 = vunpack.c.l.b16 %v1033
    %v1177 = vunpack.c.l.b16 %v1034
    %v1178 = vunpack.c.l.b16 %v1035
    %v1179 = vunpack.c.l.b16 %v1036
    %v1180 = vunpack.c.l.b16 %v1037
    %v1181 = vunpack.c.l.b16 %v1038
    %v1182 = vunpack.c.l.b16 %v1039
    %v1183 = vunpack.c.l.b16 %v1040
    %v1184 = vunpack.c.l.b16 %v1041
    %v1185 = vunpack.c.l.b16 %v1042
    %v1186 = vunpack.c.l.b16 %v1043
    %v1187 = vunpack.c.l.b16 %v1044
    %v1188 = vunpack.c.l.b16 %v1045
    %v1189 = vunpack.c.l.b16 %v1046
    %v1190 = vunpack.c.l.b16 %v1047
    %v1191 = vunpack.c.l.b16 %v1048
    %v1192 = vunpack.c.l.b16 %v1049
    %v1193 = vunpack.c.l.b16 %v1050
    %v1194 = vunpack.c.l.b16 %v1051
    %v1195 = vunpack.c.l.b16 %v1052
    %v1196 = vunpack.c.l.b16 %v1053
    %v1197 = vunpack.c.l.b16 %v1054
    %v1198 = vunpack.c.l.b16 %v1055
    %v1199 = vunpack.c.l.b16 %v1056
    %v1200 = vunpack.c.l.b16 %v1057
    %v1201 = vunpack.c.l.b16 %v1058
    %v1202 = vunpack.c.l.b16 %v1059
    %v1203 = vunpack.c.l.b16 %v1060
    %v1204 = vunpack.c.l.b16 %v1061
    %v1205 = vunpack.c.l.b16 %v1062
    %v1206 = vunpack.c.l.b16 %v1063
    %v1207 = vunpack.c.l.b16 %v1064
    %v1208 = vunpack.c.l.b16 %v1065
    %v1209 = vunpack.c.l.b16 %v1066
    %v1210 = vunpack.c.l.b16 %v1067
    %v1211 = vunpack.c.l.b16 %v1068
    %v1212 = vunpack.c.l.b16 %v1069
    %v1213 = vunpack.c.l.b16 %v1070
    %v1214 = vpack.c.b16 %v1147, %v1146
    %v1215 = vpack.c.b16 %v1149, %v1148
    %v1216 = vpack.c.b16 %v1151, %v1150
    %v1217 = vpack.c.b16 %v1153, %v1152
    %v1218 = vpack.c.b16 %v1155, %v1154
    %v1219 = vpack.c.b16 %v1157, %v1156
    %v1220 = vpack.c.b16 %v1159, %v1158
    %v1221 = vpack.c.b16 %v1161, %v1160
    %v1222 = vpack.c.b16 %v1163, %v1162
    %v1223 = vpack.c.b16 %v1165, %v1164
    %v1224 = vpack.c.b16 %v1167, %v1166
    %v1225 = vpack.c.b16 %v1169, %v1168
    %v1226 = vpack.c.b16 %v1171, %v1170
    %v1227 = vpack.c.b16 %v1173, %v1172
    %v1228 = vpack.c.b16 %v1175, %v1174
    %v1229 = vpack.c.b16 %v1177, %v1176
    %v1230 = vpack.c.b16 %v1179, %v1178
    %v1231 = vpack.c.b16 %v1181, %v1180
    %v1232 = vpack.c.b16 %v1183, %v1182
    %v1233 = vpack.c.b16 %v1185, %v1184
    %v1234 = vpack.c.b16 %v1187, %v1186
    %v1235 = vpack.c.b16 %v1189, %v1188
    %v1236 = vpack.c.b16 %v1191, %v1190
    %v1237 = vpack.c.b16 %v1193, %v1192
    %v1238 = vpack.c.b16 %v1195, %v1194
    %v1239 = vpack.c.b16 %v1197, %v1196
    %v1240 = vpack.c.b16 %v1199, %v1198
    %v1241 = vpack.c.b16 %v1201, %v1200
    %v1242 = vpack.c.b16 %v1203, %v1202
    %v1243 = vpack.c.b16 %v1205, %v1204
    %v1244 = vpack.c.b16 %v1207, %v1206
    %v1245 = vpack.c.b16 %v1209, %v1208
    %v1246 = vpack.c.b16 %v1211, %v1210
    %v1247 = vpack.c.b16 %v1213, %v1212
    %v1283 = vsel %vm429, %v997, 0
    %v1286 = vsel %vm429, %v1002, 0
    %1288 = vmatprep.subr.bf16.mxu0 0
    %1289 = vmatpush1.bf16.msra.mxu0 %v1214
    %1290 = vmatprep.subr.bf16.mxu0 0
    %1291 = vmatpush1.bf16.msra.mxu0 %v1215
    %1292 = vmatprep.subr.bf16.mxu0 0
    %1293 = vmatpush1.bf16.msra.mxu0 %v1216
    %1294 = vmatprep.subr.bf16.mxu0 0
    %1295 = vmatpush1.bf16.msra.mxu0 %v1217
    %1296 = vmatprep.subr.bf16.mxu0 0
    %1297 = vmatpush1.bf16.msra.mxu0 %v1218
    %1298 = vmatprep.subr.bf16.mxu0 0
    %1299 = vmatpush1.bf16.msra.mxu0 %v1219
    %1300 = vmatprep.subr.bf16.mxu0 0
    %1301 = vmatpush1.bf16.msra.mxu0 %v1220
    %1302 = vmatprep.subr.bf16.mxu0 0
    %1303 = vmatpush1.bf16.msra.mxu0 %v1221
    %1304 = vmatprep.subr.bf16.mxu0 0
    %1305 = vmatpush1.bf16.msra.mxu0 %v1222
    %1306 = vmatprep.subr.bf16.mxu0 0
    %1307 = vmatpush1.bf16.msra.mxu0 %v1223
    %1308 = vmatprep.subr.bf16.mxu0 0
    %1309 = vmatpush1.bf16.msra.mxu0 %v1224
    %1310 = vmatprep.subr.bf16.mxu0 0
    %1311 = vmatpush1.bf16.msra.mxu0 %v1225
    %1312 = vmatprep.subr.bf16.mxu0 0
    %1313 = vmatpush1.bf16.msra.mxu0 %v1226
    %1314 = vmatprep.subr.bf16.mxu0 0
    %1315 = vmatpush1.bf16.msra.mxu0 %v1227
    %1316 = vmatprep.subr.bf16.mxu0 0
    %1317 = vmatpush1.bf16.msra.mxu0 %v1228
    %1318 = vmatprep.subr.bf16.mxu0 0
    %1319 = vmatpush1.bf16.msra.mxu0 %v1229
    %1320 = vmatprep.mubr.bf16.mxu0 %v994
    %1321 = vmatmul.mubr.bf16.gmra.mrb[0].mxu0 %v993
    %v1322 = vpop.f32.mrb[0].mxu0
    %v1323 = vadd.f32 %v1076, %v1322
    %v1324 = vpop.f32.mrb[0].mxu0
    %v1325 = vpop.f32.mrb[0].mxu0
    %v1326 = vadd.f32 %v1076, %v1325
    %v1327 = vpop.f32.mrb[0].mxu0
    %1328 = vmatprep.mubr.bf16.mxu0 %v999
    %1329 = vmatmul.mubr.bf16.gmra.mrb[0].mxu0 %v998
    %v1330 = vpop.f32.mrb[0].mxu0
    %v1331 = vadd.f32 %v1076, %v1330
    %v1332 = vpop.f32.mrb[0].mxu0
    %v1333 = vpop.f32.mrb[0].mxu0
    %v1334 = vadd.f32 %v1076, %v1333
    %v1335 = vpop.f32.mrb[0].mxu0
    %1336 = vdwg.mxu0
    %1337 = vmatprep.subr.bf16.mxu0 0
    %1338 = vmatpush1.bf16.msra.mxu0 %v1230
    %1339 = vmatprep.subr.bf16.mxu0 0
    %1340 = vmatpush1.bf16.msra.mxu0 %v1231
    %1341 = vmatprep.subr.bf16.mxu0 0
    %1342 = vmatpush1.bf16.msra.mxu0 %v1232
    %1343 = vmatprep.subr.bf16.mxu0 0
    %1344 = vmatpush1.bf16.msra.mxu0 %v1233
    %1345 = vmatprep.subr.bf16.mxu0 0
    %1346 = vmatpush1.bf16.msra.mxu0 %v1234
    %1347 = vmatprep.subr.bf16.mxu0 0
    %1348 = vmatpush1.bf16.msra.mxu0 %v1235
    %1349 = vmatprep.subr.bf16.mxu0 0
    %1350 = vmatpush1.bf16.msra.mxu0 %v1236
    %1351 = vmatprep.subr.bf16.mxu0 0
    %1352 = vmatpush1.bf16.msra.mxu0 %v1237
    %1353 = vmatprep.subr.bf16.mxu0 0
    %1354 = vmatpush1.bf16.msra.mxu0 %v1238
    %1355 = vmatprep.subr.bf16.mxu0 0
    %1356 = vmatpush1.bf16.msra.mxu0 %v1239
    %1357 = vmatprep.subr.bf16.mxu0 0
    %1358 = vmatpush1.bf16.msra.mxu0 %v1240
    %1359 = vmatprep.subr.bf16.mxu0 0
    %1360 = vmatpush1.bf16.msra.mxu0 %v1241
    %1361 = vmatprep.subr.bf16.mxu0 0
    %1362 = vmatpush1.bf16.msra.mxu0 %v1242
    %1363 = vmatprep.subr.bf16.mxu0 0
    %1364 = vmatpush1.bf16.msra.mxu0 %v1243
    %1365 = vmatprep.subr.bf16.mxu0 0
    %1366 = vmatpush1.bf16.msra.mxu0 %v1244
    %1367 = vmatprep.subr.bf16.mxu0 0
    %1368 = vmatpush1.bf16.msra.mxu0 %v1245
    %1369 = vmatprep.mubr.bf16.mxu0 %v996
    %1370 = vmatmul.mubr.bf16.gmra.mrb[0].mxu0 %v995
    %v1371 = vpop.f32.mrb[0].mxu0
    %v1372 = vadd.f32 %v1323, %v1371
    %v1373 = vpop.f32.mrb[0].mxu0
    %v1374 = vpop.f32.mrb[0].mxu0
    %v1375 = vadd.f32 %v1326, %v1374
    %v1376 = vpop.f32.mrb[0].mxu0
    %1377 = vmatprep.mubr.bf16.mxu0 %v1001
    %1378 = vmatmul.mubr.bf16.gmra.mrb[0].mxu0 %v1000
    %v1379 = vpop.f32.mrb[0].mxu0
    %v1380 = vadd.f32 %v1331, %v1379
    %v1381 = vpop.f32.mrb[0].mxu0
    %v1382 = vpop.f32.mrb[0].mxu0
    %v1383 = vadd.f32 %v1334, %v1382
    %v1384 = vpop.f32.mrb[0].mxu0
    %1385 = vdwg.mxu0
    %1386 = vmatprep.subr.bf16.mxu0 0
    %1387 = vmatpush1.bf16.msra.mxu0 %v1246
    %1388 = vmatprep.subr.bf16.mxu0 0
    %1389 = vmatpush1.bf16.msra.mxu0 %v1247
    %1390 = vmatprep.subr.bf16.mxu0 0
    %1391 = vmatpush1.bf16.msra.mxu0 0
    %1392 = vmatprep.subr.bf16.mxu0 0
    %1393 = vmatpush1.bf16.msra.mxu0 0
    %1394 = vmatprep.subr.bf16.mxu0 0
    %1395 = vmatpush1.bf16.msra.mxu0 0
    %1396 = vmatprep.subr.bf16.mxu0 0
    %1397 = vmatpush1.bf16.msra.mxu0 0
    %1398 = vmatprep.subr.bf16.mxu0 0
    %1399 = vmatpush1.bf16.msra.mxu0 0
    %1400 = vmatprep.subr.bf16.mxu0 0
    %1401 = vmatpush1.bf16.msra.mxu0 0
    %1402 = vmatprep.subr.bf16.mxu0 0
    %1403 = vmatpush1.bf16.msra.mxu0 0
    %1404 = vmatprep.subr.bf16.mxu0 0
    %1405 = vmatpush1.bf16.msra.mxu0 0
    %1406 = vmatprep.subr.bf16.mxu0 0
    %1407 = vmatpush1.bf16.msra.mxu0 0
    %1408 = vmatprep.subr.bf16.mxu0 0
    %1409 = vmatpush1.bf16.msra.mxu0 0
    %1410 = vmatprep.subr.bf16.mxu0 0
    %1411 = vmatpush1.bf16.msra.mxu0 0
    %1412 = vmatprep.subr.bf16.mxu0 0
    %1413 = vmatpush1.bf16.msra.mxu0 0
    %1414 = vmatprep.subr.bf16.mxu0 0
    %1415 = vmatpush1.bf16.msra.mxu0 0
    %1416 = vmatprep.subr.bf16.mxu0 0
    %1417 = vmatpush1.bf16.msra.mxu0 0
    %1418 = vmatprep.mubr.bf16.mxu0 0
    %1419 = vmatmul.mubr.bf16.gmra.mrb[0].mxu0 %v1283
    %v1420 = vpop.f32.mrb[0].mxu0
    %v1421 = vadd.f32 %v1372, %v1420
    %v1422 = vpop.f32.mrb[0].mxu0
    %v1423 = vpop.f32.mrb[0].mxu0
    %v1424 = vadd.f32 %v1375, %v1423
    %v1425 = vpop.f32.mrb[0].mxu0
    %1426 = vmatprep.mubr.bf16.mxu0 0
    %1427 = vmatmul.mubr.bf16.gmra.mrb[0].mxu0 %v1286
    %v1428 = vpop.f32.mrb[0].mxu0
    %v1429 = vadd.f32 %v1380, %v1428
    %v1430 = vpop.f32.mrb[0].mxu0
    %v1431 = vpop.f32.mrb[0].mxu0
    %v1432 = vadd.f32 %v1383, %v1431
    %v1433 = vpop.f32.mrb[0].mxu0
    %1434 = vdwg.mxu0
    %v1435 = vadd.f32 %v1421, %v400
    %v1436 = vadd.f32 %v1424, %v401
    %v1437 = vadd.f32 %v1429, %v402
    %v1438 = vadd.f32 %v1432, %v403
    %v1439 = vmax.f32 %v1435, 0.0
    %v1440 = vmax.f32 %v1436, 0.0
    %v1441 = vmax.f32 %v1437, 0.0
    %v1442 = vmax.f32 %v1438, 0.0
    %v1443 = vld [vmem:[#allocation13] sm:$0xf]
    %v1444 = vld [vmem:[#allocation13 + $0x4] sm:$0xf]
    %v1445 = vld [vmem:[#allocation13 + $0x8] sm:$0xf]
    %v1446 = vld [vmem:[#allocation13 + $0xc] sm:$0xf]
    %v1447 = vld [vmem:[#allocation14] sm:$0x1]
    %v1449 = vlaneseq
    %v1450 = vshrl.u32 %v1449, 7
    %v1451 = vsub.s32 0, %v1450
    %v1452 = vrot.slane %v1447, %v1451
    %v1458 = vunpack.c.l.b16 %v1443
    %v1459 = vunpack.c.l.b16 %v1444
    %v1460 = vunpack.c.l.b16 %v1445
    %v1461 = vunpack.c.l.b16 %v1446
    %v1462 = vpack.c.b16 %v1459, %v1458
    %v1463 = vpack.c.b16 %v1461, %v1460
    %1466 = vmatprep.subr.bf16.mxu0 0
    %1467 = vmatpush1.bf16.msra.mxu0 %v1462
    %1468 = vmatprep.subr.bf16.mxu0 0
    %1469 = vmatpush1.bf16.msra.mxu0 %v1463
    %1470 = vmatprep.subr.bf16.mxu0 0
    %1471 = vmatpush1.bf16.msra.mxu0 0
    %1472 = vmatprep.subr.bf16.mxu0 0
    %1473 = vmatpush1.bf16.msra.mxu0 0
    %1474 = vmatprep.subr.bf16.mxu0 0
    %1475 = vmatpush1.bf16.msra.mxu0 0
    %1476 = vmatprep.subr.bf16.mxu0 0
    %1477 = vmatpush1.bf16.msra.mxu0 0
    %1478 = vmatprep.subr.bf16.mxu0 0
    %1479 = vmatpush1.bf16.msra.mxu0 0
    %1480 = vmatprep.subr.bf16.mxu0 0
    %1481 = vmatpush1.bf16.msra.mxu0 0
    %1482 = vmatprep.subr.bf16.mxu0 0
    %1483 = vmatpush1.bf16.msra.mxu0 0
    %1484 = vmatprep.subr.bf16.mxu0 0
    %1485 = vmatpush1.bf16.msra.mxu0 0
    %1486 = vmatprep.subr.bf16.mxu0 0
    %1487 = vmatpush1.bf16.msra.mxu0 0
    %1488 = vmatprep.subr.bf16.mxu0 0
    %1489 = vmatpush1.bf16.msra.mxu0 0
    %1490 = vmatprep.subr.bf16.mxu0 0
    %1491 = vmatpush1.bf16.msra.mxu0 0
    %1492 = vmatprep.subr.bf16.mxu0 0
    %1493 = vmatpush1.bf16.msra.mxu0 0
    %1494 = vmatprep.subr.bf16.mxu0 0
    %1495 = vmatpush1.bf16.msra.mxu0 0
    %1496 = vmatprep.subr.bf16.mxu0 0
    %1497 = vmatpush1.bf16.msra.mxu0 0
    %1498 = vmatprep.mubr.bf16.mxu0 0
    %1499 = vmatmul.mubr.bf16.gmra.mrb[0].mxu0 %v431
    %v1500 = vpop.f32.mrb[0].mxu0
    %v1501 = vadd.f32 %v1452, %v1500
    %v1502 = vpop.f32.mrb[0].mxu0
    %v1503 = vpop.f32.mrb[0].mxu0
    %v1504 = vadd.f32 %v1452, %v1503
    %v1505 = vpop.f32.mrb[0].mxu0
    %1506 = vmatprep.mubr.bf16.mxu0 0
    %1507 = vmatmul.mubr.bf16.gmra.mrb[0].mxu0 %v434
    %v1508 = vpop.f32.mrb[0].mxu0
    %v1509 = vadd.f32 %v1452, %v1508
    %v1510 = vpop.f32.mrb[0].mxu0
    %v1511 = vpop.f32.mrb[0].mxu0
    %v1512 = vadd.f32 %v1452, %v1511
    %v1513 = vpop.f32.mrb[0].mxu0
    %1514 = vdwg.mxu0
    %v1515 = vpack.c.bf16 %v1504, %v1501
    %v1516 = vpack.c.bf16 %v1512, %v1509
    %1517 = vmatprep.subr.bf16.mxu0 0
    %1518 = vmatpush1.bf16.xpose.msra.mxu0 %v1515
    %1519 = vmatprep.subr.bf16.mxu0 0
    %1520 = vmatpush1.bf16.xpose.msra.mxu0 0
    %1521 = vmatprep.subr.bf16.mxu0 0
    %1522 = vmatpush1.bf16.xpose.msra.mxu0 0
    %1523 = vmatprep.subr.bf16.mxu0 0
    %1524 = vmatpush1.bf16.xpose.msra.mxu0 0
    %1525 = vmatprep.subr.bf16.mxu0 0
    %1526 = vmatpush1.bf16.xpose.msra.mxu0 0
    %1527 = vmatprep.subr.bf16.mxu0 0
    %1528 = vmatpush1.bf16.xpose.msra.mxu0 0
    %1529 = vmatprep.subr.bf16.mxu0 0
    %1530 = vmatpush1.bf16.xpose.msra.mxu0 0
    %1531 = vmatprep.subr.bf16.mxu0 0
    %1532 = vmatpush1.bf16.xpose.msra.mxu0 0
    %1533 = vmatprep.subr.bf16.mxu0 0
    %1534 = vmatpush1.bf16.xpose.msra.mxu0 0
    %1535 = vmatprep.subr.bf16.mxu0 0
    %1536 = vmatpush1.bf16.xpose.msra.mxu0 0
    %1537 = vmatprep.subr.bf16.mxu0 0
    %1538 = vmatpush1.bf16.xpose.msra.mxu0 0
    %1539 = vmatprep.subr.bf16.mxu0 0
    %1540 = vmatpush1.bf16.xpose.msra.mxu0 0
    %1541 = vmatprep.subr.bf16.mxu0 0
    %1542 = vmatpush1.bf16.xpose.msra.mxu0 0
    %1543 = vmatprep.subr.bf16.mxu0 0
    %1544 = vmatpush1.bf16.xpose.msra.mxu0 0
    %1545 = vmatprep.subr.bf16.mxu0 0
    %1546 = vmatpush1.bf16.xpose.msra.mxu0 0
    %1547 = vmatprep.subr.bf16.mxu0 0
    %1548 = vmatpush1.bf16.xpose.msra.mxu0 0
    %1549 = vmatprep.mubr.bf16.mxu0 0
    %1550 = vmatmul.mubr.bf16.gmra.mrb[0].mxu0 %v1515
    %v1551 = vpop.f32.mrb[0].mxu0
    %v1552 = vadd.f32 0.0, %v1551
    %v1553 = vpop.f32.mrb[0].mxu0
    %v1554 = vpop.f32.mrb[0].mxu0
    %v1555 = vadd.f32 0.0, %v1554
    %v1556 = vpop.f32.mrb[0].mxu0
    %1557 = vdwg.mxu0
    %1558 = vmatprep.subr.bf16.mxu0 0
    %1559 = vmatpush1.bf16.xpose.msra.mxu0 %v1516
    %1560 = vmatprep.subr.bf16.mxu0 0
    %1561 = vmatpush1.bf16.xpose.msra.mxu0 0
    %1562 = vmatprep.subr.bf16.mxu0 0
    %1563 = vmatpush1.bf16.xpose.msra.mxu0 0
    %1564 = vmatprep.subr.bf16.mxu0 0
    %1565 = vmatpush1.bf16.xpose.msra.mxu0 0
    %1566 = vmatprep.subr.bf16.mxu0 0
    %1567 = vmatpush1.bf16.xpose.msra.mxu0 0
    %1568 = vmatprep.subr.bf16.mxu0 0
    %1569 = vmatpush1.bf16.xpose.msra.mxu0 0
    %1570 = vmatprep.subr.bf16.mxu0 0
    %1571 = vmatpush1.bf16.xpose.msra.mxu0 0
    %1572 = vmatprep.subr.bf16.mxu0 0
    %1573 = vmatpush1.bf16.xpose.msra.mxu0 0
    %1574 = vmatprep.subr.bf16.mxu0 0
    %1575 = vmatpush1.bf16.xpose.msra.mxu0 0
    %1576 = vmatprep.subr.bf16.mxu0 0
    %1577 = vmatpush1.bf16.xpose.msra.mxu0 0
    %1578 = vmatprep.subr.bf16.mxu0 0
    %1579 = vmatpush1.bf16.xpose.msra.mxu0 0
    %1580 = vmatprep.subr.bf16.mxu0 0
    %1581 = vmatpush1.bf16.xpose.msra.mxu0 0
    %1582 = vmatprep.subr.bf16.mxu0 0
    %1583 = vmatpush1.bf16.xpose.msra.mxu0 0
    %1584 = vmatprep.subr.bf16.mxu0 0
    %1585 = vmatpush1.bf16.xpose.msra.mxu0 0
    %1586 = vmatprep.subr.bf16.mxu0 0
    %1587 = vmatpush1.bf16.xpose.msra.mxu0 0
    %1588 = vmatprep.subr.bf16.mxu0 0
    %1589 = vmatpush1.bf16.xpose.msra.mxu0 0
    %1590 = vmatprep.mubr.bf16.mxu0 0
    %1591 = vmatmul.mubr.bf16.gmra.mrb[0].mxu0 %v1516
    %v1592 = vpop.f32.mrb[0].mxu0
    %v1593 = vadd.f32 0.0, %v1592
    %v1594 = vpop.f32.mrb[0].mxu0
    %v1595 = vpop.f32.mrb[0].mxu0
    %v1596 = vadd.f32 0.0, %v1595
    %v1597 = vpop.f32.mrb[0].mxu0
    %1598 = vdwg.mxu0
    %v1599 = vlaneseq
    %v1600 = vand.u32 %v1599, 127
    %vm1601 = vcmp.eq.s32.totalorder %v490, %v1600
    %vm1602 = vcmp.eq.s32.totalorder %v491, %v1600
    %v1603 = vsel %vm1601, 1, 0
    %v1604 = vsel %vm1602, 1, 0
    %v1605 = vcvt.s32.f32 %v1603
    %v1606 = vcvt.s32.f32 %v1604
    %v1607 = vmul.f32 %v1552, %v1605
    %v1608 = vmul.f32 %v1555, %v1606
    %v1609 = vmul.f32 %v1593, %v1605
    %v1610 = vmul.f32 %v1596, %v1606
    %vm1611 = vcmask 130048
    %v1612 = vsel %vm1611, %v1607, 0.0
    %1613 = vadd.xlane.f32.xlu0 %v1612
    %v1614 = vpop.xlane.xlu0 %1613
    %v1615 = vsel %vm1611, %v1608, 0.0
    %1616 = vadd.xlane.f32.xlu0 %v1615
    %v1617 = vpop.xlane.xlu0 %1616
    %v1618 = vsel %vm1611, %v1609, 0.0
    %1619 = vadd.xlane.f32.xlu0 %v1618
    %v1620 = vpop.xlane.xlu0 %1619
    %v1621 = vsel %vm1611, %v1610, 0.0
    %1622 = vadd.xlane.f32.xlu0 %v1621
    %v1623 = vpop.xlane.xlu0 %1622
    %v1624 = vadd.f32 %v1612, %v1615
    %v1625 = vrot.slane %v1624, 4
    %v1626 = vadd.f32 %v1624, %v1625
    %v1627 = vrot.slane %v1626, 2
    %v1628 = vadd.f32 %v1626, %v1627
    %v1629 = vrot.slane %v1628, 1
    %v1630 = vadd.f32 %v1628, %v1629
    %v1631 = vadd.f32 %v1618, %v1621
    %v1632 = vrot.slane %v1631, 4
    %v1633 = vadd.f32 %v1631, %v1632
    %v1634 = vrot.slane %v1633, 2
    %v1635 = vadd.f32 %v1633, %v1634
    %v1636 = vrot.slane %v1635, 1
    %v1637 = vadd.f32 %v1635, %v1636
    %v1638 = vadd.f32 %v1614, %v1630
    %v1639 = vadd.f32 %v1617, %v1630
    %v1640 = vadd.f32 %v1620, %v1637
    %v1641 = vadd.f32 %v1623, %v1637
    %v1642 = vmul.f32 %v1552, 2.0
    %v1643 = vmul.f32 %v1555, 2.0
    %v1644 = vmul.f32 %v1593, 2.0
    %v1645 = vmul.f32 %v1596, 2.0
    %v1646 = vsub.f32 %v1638, %v1642
    %v1647 = vsub.f32 %v1639, %v1643
    %v1648 = vsub.f32 %v1640, %v1644
    %v1649 = vsub.f32 %v1641, %v1645
    %v1650 = vmax.f32 %v1646, 0.0
    %v1651 = vmax.f32 %v1647, 0.0
    %v1652 = vmax.f32 %v1648, 0.0
    %v1653 = vmax.f32 %v1649, 0.0
    %v1654 = vsub.f32 0.0, %v1650
    %v1655 = vsub.f32 0.0, %v1651
    %v1656 = vsub.f32 0.0, %v1652
    %v1657 = vsub.f32 0.0, %v1653
    %v1658 = vmul.f32 %v1654, 1.442695
    %v1659 = vpow.pop %v1658
    %v1660 = vmul.f32 %v1655, 1.442695
    %v1661 = vpow.pop %v1660
    %v1662 = vmul.f32 %v1656, 1.442695
    %v1663 = vpow.pop %v1662
    %v1664 = vmul.f32 %v1657, 1.442695
    %v1665 = vpow.pop %v1664
    %v1666 = vld [vmem:[#allocation5] sm:$0xf]
    %v1667 = vld [vmem:[#allocation5 + $0x4] sm:$0xf]
    %v1668 = vld [vmem:[#allocation5 + $0x8] sm:$0xf]
    %v1669 = vld [vmem:[#allocation5 + $0xc] sm:$0xf]
    %v1670 = vunpack.c.l.bf16 %v1666
    %v1671 = vunpack.c.l.bf16 %v1667
    %v1672 = vunpack.c.l.bf16 %v1668
    %v1673 = vunpack.c.l.bf16 %v1669
    %v1674 = vmul.f32 %v1659, %v1670
    %v1675 = vmul.f32 %v1661, %v1671
    %v1676 = vmul.f32 %v1663, %v1672
    %v1677 = vmul.f32 %v1665, %v1673
    %v1678 = vld [vmem:[#allocation16] sm:$0xf]
    %v1679 = vld [vmem:[#allocation16 + $0x4] sm:$0xf]
    %v1680 = vld [vmem:[#allocation16 + $0x8] sm:$0xf]
    %v1681 = vld [vmem:[#allocation16 + $0xc] sm:$0xf]
    %v1682 = vld [vmem:[#allocation17] sm:$0x1]
    %v1684 = vlaneseq
    %v1685 = vshrl.u32 %v1684, 7
    %v1686 = vsub.s32 0, %v1685
    %v1687 = vrot.slane %v1682, %v1686
    %v1693 = vunpack.c.l.b16 %v1678
    %v1694 = vunpack.c.l.b16 %v1679
    %v1695 = vunpack.c.l.b16 %v1680
    %v1696 = vunpack.c.l.b16 %v1681
    %v1697 = vpack.c.b16 %v1694, %v1693
    %v1698 = vpack.c.b16 %v1696, %v1695
    %1701 = vmatprep.subr.bf16.mxu0 0
    %1702 = vmatpush1.bf16.msra.mxu0 %v1697
    %1703 = vmatprep.subr.bf16.mxu0 0
    %1704 = vmatpush1.bf16.msra.mxu0 %v1698
    %1705 = vmatprep.subr.bf16.mxu0 0
    %1706 = vmatpush1.bf16.msra.mxu0 0
    %1707 = vmatprep.subr.bf16.mxu0 0
    %1708 = vmatpush1.bf16.msra.mxu0 0
    %1709 = vmatprep.subr.bf16.mxu0 0
    %1710 = vmatpush1.bf16.msra.mxu0 0
    %1711 = vmatprep.subr.bf16.mxu0 0
    %1712 = vmatpush1.bf16.msra.mxu0 0
    %1713 = vmatprep.subr.bf16.mxu0 0
    %1714 = vmatpush1.bf16.msra.mxu0 0
    %1715 = vmatprep.subr.bf16.mxu0 0
    %1716 = vmatpush1.bf16.msra.mxu0 0
    %1717 = vmatprep.subr.bf16.mxu0 0
    %1718 = vmatpush1.bf16.msra.mxu0 0
    %1719 = vmatprep.subr.bf16.mxu0 0
    %1720 = vmatpush1.bf16.msra.mxu0 0
    %1721 = vmatprep.subr.bf16.mxu0 0
    %1722 = vmatpush1.bf16.msra.mxu0 0
    %1723 = vmatprep.subr.bf16.mxu0 0
    %1724 = vmatpush1.bf16.msra.mxu0 0
    %1725 = vmatprep.subr.bf16.mxu0 0
    %1726 = vmatpush1.bf16.msra.mxu0 0
    %1727 = vmatprep.subr.bf16.mxu0 0
    %1728 = vmatpush1.bf16.msra.mxu0 0
    %1729 = vmatprep.subr.bf16.mxu0 0
    %1730 = vmatpush1.bf16.msra.mxu0 0
    %1731 = vmatprep.subr.bf16.mxu0 0
    %1732 = vmatpush1.bf16.msra.mxu0 0
    %1733 = vmatprep.mubr.bf16.mxu0 0
    %1734 = vmatmul.mubr.bf16.gmra.mrb[0].mxu0 %v431
    %v1735 = vpop.f32.mrb[0].mxu0
    %v1736 = vadd.f32 %v1687, %v1735
    %v1737 = vpop.f32.mrb[0].mxu0
    %v1738 = vpop.f32.mrb[0].mxu0
    %v1739 = vadd.f32 %v1687, %v1738
    %v1740 = vpop.f32.mrb[0].mxu0
    %1741 = vmatprep.mubr.bf16.mxu0 0
    %1742 = vmatmul.mubr.bf16.gmra.mrb[0].mxu0 %v434
    %v1743 = vpop.f32.mrb[0].mxu0
    %v1744 = vadd.f32 %v1687, %v1743
    %v1745 = vpop.f32.mrb[0].mxu0
    %v1746 = vpop.f32.mrb[0].mxu0
    %v1747 = vadd.f32 %v1687, %v1746
    %v1748 = vpop.f32.mrb[0].mxu0
    %1749 = vdwg.mxu0
    %v1750 = vmax.f32 %v1736, 0.0
    %v1751 = vmax.f32 %v1739, 0.0
    %v1752 = vmax.f32 %v1744, 0.0
    %v1753 = vmax.f32 %v1747, 0.0
    %v1754 = vpack.c.bf16 %v1675, %v1674
    %v1755 = vpack.c.bf16 %v1677, %v1676
    %v1756 = vpack.c.bf16 %v1751, %v1750
    %v1757 = vpack.c.bf16 %v1753, %v1752
    %v1759 = vsel %vm1611, %v1754, 0
    %1761 = vmatprep.subr.bf16.mxu0 0
    %1762 = vmatpush1.bf16.msra.mxu0 %v1756
    %1763 = vmatprep.subr.bf16.mxu0 0
    %1764 = vmatpush1.bf16.msra.mxu0 0
    %1765 = vmatprep.subr.bf16.mxu0 0
    %1766 = vmatpush1.bf16.msra.mxu0 0
    %1767 = vmatprep.subr.bf16.mxu0 0
    %1768 = vmatpush1.bf16.msra.mxu0 0
    %1769 = vmatprep.subr.bf16.mxu0 0
    %1770 = vmatpush1.bf16.msra.mxu0 0
    %1771 = vmatprep.subr.bf16.mxu0 0
    %1772 = vmatpush1.bf16.msra.mxu0 0
    %1773 = vmatprep.subr.bf16.mxu0 0
    %1774 = vmatpush1.bf16.msra.mxu0 0
    %1775 = vmatprep.subr.bf16.mxu0 0
    %1776 = vmatpush1.bf16.msra.mxu0 0
    %1777 = vmatprep.subr.bf16.mxu0 0
    %1778 = vmatpush1.bf16.msra.mxu0 0
    %1779 = vmatprep.subr.bf16.mxu0 0
    %1780 = vmatpush1.bf16.msra.mxu0 0
    %1781 = vmatprep.subr.bf16.mxu0 0
    %1782 = vmatpush1.bf16.msra.mxu0 0
    %1783 = vmatprep.subr.bf16.mxu0 0
    %1784 = vmatpush1.bf16.msra.mxu0 0
    %1785 = vmatprep.subr.bf16.mxu0 0
    %1786 = vmatpush1.bf16.msra.mxu0 0
    %1787 = vmatprep.subr.bf16.mxu0 0
    %1788 = vmatpush1.bf16.msra.mxu0 0
    %1789 = vmatprep.subr.bf16.mxu0 0
    %1790 = vmatpush1.bf16.msra.mxu0 0
    %1791 = vmatprep.subr.bf16.mxu0 0
    %1792 = vmatpush1.bf16.msra.mxu0 0
    %1793 = vmatprep.mubr.bf16.mxu0 0
    %1794 = vmatmul.mubr.bf16.gmra.mrb[0].mxu0 %v1759
    %v1795 = vpop.f32.mrb[0].mxu0
    %v1796 = vadd.f32 0.0, %v1795
    %v1797 = vpop.f32.mrb[0].mxu0
    %v1798 = vpop.f32.mrb[0].mxu0
    %v1799 = vadd.f32 0.0, %v1798
    %v1800 = vpop.f32.mrb[0].mxu0
    %1801 = vdwg.mxu0
    %v1803 = vsel %vm1611, %v1755, 0
    %1805 = vmatprep.subr.bf16.mxu0 0
    %1806 = vmatpush1.bf16.msra.mxu0 %v1757
    %1807 = vmatprep.subr.bf16.mxu0 0
    %1808 = vmatpush1.bf16.msra.mxu0 0
    %1809 = vmatprep.subr.bf16.mxu0 0
    %1810 = vmatpush1.bf16.msra.mxu0 0
    %1811 = vmatprep.subr.bf16.mxu0 0
    %1812 = vmatpush1.bf16.msra.mxu0 0
    %1813 = vmatprep.subr.bf16.mxu0 0
    %1814 = vmatpush1.bf16.msra.mxu0 0
    %1815 = vmatprep.subr.bf16.mxu0 0
    %1816 = vmatpush1.bf16.msra.mxu0 0
    %1817 = vmatprep.subr.bf16.mxu0 0
    %1818 = vmatpush1.bf16.msra.mxu0 0
    %1819 = vmatprep.subr.bf16.mxu0 0
    %1820 = vmatpush1.bf16.msra.mxu0 0
    %1821 = vmatprep.subr.bf16.mxu0 0
    %1822 = vmatpush1.bf16.msra.mxu0 0
    %1823 = vmatprep.subr.bf16.mxu0 0
    %1824 = vmatpush1.bf16.msra.mxu0 0
    %1825 = vmatprep.subr.bf16.mxu0 0
    %1826 = vmatpush1.bf16.msra.mxu0 0
    %1827 = vmatprep.subr.bf16.mxu0 0
    %1828 = vmatpush1.bf16.msra.mxu0 0
    %1829 = vmatprep.subr.bf16.mxu0 0
    %1830 = vmatpush1.bf16.msra.mxu0 0
    %1831 = vmatprep.subr.bf16.mxu0 0
    %1832 = vmatpush1.bf16.msra.mxu0 0
    %1833 = vmatprep.subr.bf16.mxu0 0
    %1834 = vmatpush1.bf16.msra.mxu0 0
    %1835 = vmatprep.subr.bf16.mxu0 0
    %1836 = vmatpush1.bf16.msra.mxu0 0
    %1837 = vmatprep.mubr.bf16.mxu0 0
    %1838 = vmatmul.mubr.bf16.gmra.mrb[0].mxu0 %v1803
    %v1839 = vpop.f32.mrb[0].mxu0
    %v1840 = vadd.f32 0.0, %v1839
    %v1841 = vpop.f32.mrb[0].mxu0
    %v1842 = vpop.f32.mrb[0].mxu0
    %v1843 = vadd.f32 0.0, %v1842
    %v1844 = vpop.f32.mrb[0].mxu0
    %1845 = vdwg.mxu0
    %v1846 = vpack.c.bf16 %v1440, %v1439
    %v1847 = vpack.c.bf16 %v1442, %v1441
    %v1848 = vpack.c.bf16 %v1799, %v1796
    %v1849 = vpack.c.bf16 %v1843, %v1840
    %v1850 = vld [vmem:[#allocation19] sm:$0xf]
    %v1851 = vld [vmem:[#allocation19 + $0x4] sm:$0xf]
    %v1852 = vld [vmem:[#allocation19 + $0x8] sm:$0xf]
    %v1853 = vld [vmem:[#allocation19 + $0xc] sm:$0xf]
    %v1854 = vld [vmem:[#allocation23] sm:$0xf]
    %v1855 = vld [vmem:[#allocation23 + $0x4] sm:$0xf]
    %v1856 = vld [vmem:[#allocation23 + $0x8] sm:$0xf]
    %v1857 = vld [vmem:[#allocation23 + $0xc] sm:$0xf]
    %v1862 = vunpack.c.l.b16 %v1854
    %v1863 = vunpack.c.l.b16 %v1855
    %v1864 = vunpack.c.l.b16 %v1856
    %v1865 = vunpack.c.l.b16 %v1857
    %v1866 = vpack.c.b16 %v1863, %v1862
    %v1867 = vpack.c.b16 %v1865, %v1864
    %v1871 = vsel %vm429, %v1848, 0
    %v1874 = vsel %vm429, %v1849, 0
    %1876 = vmatprep.subr.bf16.mxu0 0
    %1877 = vmatpush1.bf16.msra.mxu0 %v1866
    %1878 = vmatprep.subr.bf16.mxu0 0
    %1879 = vmatpush1.bf16.msra.mxu0 %v1867
    %1880 = vmatprep.subr.bf16.mxu0 0
    %1881 = vmatpush1.bf16.msra.mxu0 0
    %1882 = vmatprep.subr.bf16.mxu0 0
    %1883 = vmatpush1.bf16.msra.mxu0 0
    %1884 = vmatprep.subr.bf16.mxu0 0
    %1885 = vmatpush1.bf16.msra.mxu0 0
    %1886 = vmatprep.subr.bf16.mxu0 0
    %1887 = vmatpush1.bf16.msra.mxu0 0
    %1888 = vmatprep.subr.bf16.mxu0 0
    %1889 = vmatpush1.bf16.msra.mxu0 0
    %1890 = vmatprep.subr.bf16.mxu0 0
    %1891 = vmatpush1.bf16.msra.mxu0 0
    %1892 = vmatprep.subr.bf16.mxu0 0
    %1893 = vmatpush1.bf16.msra.mxu0 0
    %1894 = vmatprep.subr.bf16.mxu0 0
    %1895 = vmatpush1.bf16.msra.mxu0 0
    %1896 = vmatprep.subr.bf16.mxu0 0
    %1897 = vmatpush1.bf16.msra.mxu0 0
    %1898 = vmatprep.subr.bf16.mxu0 0
    %1899 = vmatpush1.bf16.msra.mxu0 0
    %1900 = vmatprep.subr.bf16.mxu0 0
    %1901 = vmatpush1.bf16.msra.mxu0 0
    %1902 = vmatprep.subr.bf16.mxu0 0
    %1903 = vmatpush1.bf16.msra.mxu0 0
    %1904 = vmatprep.subr.bf16.mxu0 0
    %1905 = vmatpush1.bf16.msra.mxu0 0
    %1906 = vmatprep.subr.bf16.mxu0 0
    %1907 = vmatpush1.bf16.msra.mxu0 0
    %1908 = vmatprep.mubr.bf16.mxu0 0
    %1909 = vmatmul.mubr.bf16.gmra.mrb[0].mxu0 %v1871
    %v1910 = vpop.f32.mrb[0].mxu0
    %v1911 = vadd.f32 0.0, %v1910
    %v1912 = vpop.f32.mrb[0].mxu0
    %v1913 = vpop.f32.mrb[0].mxu0
    %v1914 = vadd.f32 0.0, %v1913
    %v1915 = vpop.f32.mrb[0].mxu0
    %1916 = vmatprep.mubr.bf16.mxu0 0
    %1917 = vmatmul.mubr.bf16.gmra.mrb[0].mxu0 %v1874
    %v1918 = vpop.f32.mrb[0].mxu0
    %v1919 = vadd.f32 0.0, %v1918
    %v1920 = vpop.f32.mrb[0].mxu0
    %v1921 = vpop.f32.mrb[0].mxu0
    %v1922 = vadd.f32 0.0, %v1921
    %v1923 = vpop.f32.mrb[0].mxu0
    %1924 = vdwg.mxu0
    %v1929 = vunpack.c.l.b16 %v1850
    %v1930 = vunpack.c.l.b16 %v1851
    %v1931 = vunpack.c.l.b16 %v1852
    %v1932 = vunpack.c.l.b16 %v1853
    %v1933 = vpack.c.b16 %v1930, %v1929
    %v1934 = vpack.c.b16 %v1932, %v1931
    %v1938 = vsel %vm429, %v1846, 0
    %v1941 = vsel %vm429, %v1847, 0
    %1943 = vmatprep.subr.bf16.mxu0 0
    %1944 = vmatpush1.bf16.msra.mxu0 %v1933
    %1945 = vmatprep.subr.bf16.mxu0 0
    %1946 = vmatpush1.bf16.msra.mxu0 %v1934
    %1947 = vmatprep.subr.bf16.mxu0 0
    %1948 = vmatpush1.bf16.msra.mxu0 0
    %1949 = vmatprep.subr.bf16.mxu0 0
    %1950 = vmatpush1.bf16.msra.mxu0 0
    %1951 = vmatprep.subr.bf16.mxu0 0
    %1952 = vmatpush1.bf16.msra.mxu0 0
    %1953 = vmatprep.subr.bf16.mxu0 0
    %1954 = vmatpush1.bf16.msra.mxu0 0
    %1955 = vmatprep.subr.bf16.mxu0 0
    %1956 = vmatpush1.bf16.msra.mxu0 0
    %1957 = vmatprep.subr.bf16.mxu0 0
    %1958 = vmatpush1.bf16.msra.mxu0 0
    %1959 = vmatprep.subr.bf16.mxu0 0
    %1960 = vmatpush1.bf16.msra.mxu0 0
    %1961 = vmatprep.subr.bf16.mxu0 0
    %1962 = vmatpush1.bf16.msra.mxu0 0
    %1963 = vmatprep.subr.bf16.mxu0 0
    %1964 = vmatpush1.bf16.msra.mxu0 0
    %1965 = vmatprep.subr.bf16.mxu0 0
    %1966 = vmatpush1.bf16.msra.mxu0 0
    %1967 = vmatprep.subr.bf16.mxu0 0
    %1968 = vmatpush1.bf16.msra.mxu0 0
    %1969 = vmatprep.subr.bf16.mxu0 0
    %1970 = vmatpush1.bf16.msra.mxu0 0
    %1971 = vmatprep.subr.bf16.mxu0 0
    %1972 = vmatpush1.bf16.msra.mxu0 0
    %1973 = vmatprep.subr.bf16.mxu0 0
    %1974 = vmatpush1.bf16.msra.mxu0 0
    %1975 = vmatprep.mubr.bf16.mxu0 0
    %1976 = vmatmul.mubr.bf16.gmra.mrb[0].mxu0 %v1938
    %v1977 = vpop.f32.mrb[0].mxu0
    %v1978 = vadd.f32 %v1911, %v1977
    %v1979 = vpop.f32.mrb[0].mxu0
    %v1980 = vpop.f32.mrb[0].mxu0
    %v1981 = vadd.f32 %v1914, %v1980
    %v1982 = vpop.f32.mrb[0].mxu0
    %1983 = vmatprep.mubr.bf16.mxu0 0
    %1984 = vmatmul.mubr.bf16.gmra.mrb[0].mxu0 %v1941
    %v1985 = vpop.f32.mrb[0].mxu0
    %v1986 = vadd.f32 %v1919, %v1985
    %v1987 = vpop.f32.mrb[0].mxu0
    %v1988 = vpop.f32.mrb[0].mxu0
    %v1989 = vadd.f32 %v1922, %v1988
    %v1990 = vpop.f32.mrb[0].mxu0
    %1991 = vdwg.mxu0
    %v1992 = vld [vmem:[#allocation32] sm:$0x1]
    %v1994 = vlaneseq
    %v1995 = vshrl.u32 %v1994, 7
    %v1996 = vsub.s32 0, %v1995
    %v1997 = vrot.slane %v1992, %v1996
    %v1999 = vadd.f32 %v1978, %v1997
    %v2000 = vadd.f32 %v1981, %v1997
    %v2001 = vadd.f32 %v1986, %v1997
    %v2002 = vadd.f32 %v1989, %v1997
    %v2003 = vld [vmem:[#allocation28] sm:$0xf]
    %v2004 = vld [vmem:[#allocation28 + $0x4] sm:$0xf]
    %v2005 = vld [vmem:[#allocation28 + $0x8] sm:$0xf]
    %v2006 = vld [vmem:[#allocation28 + $0xc] sm:$0xf]
    %v2007 = vld [vmem:[#allocation37] sm:$0x1]
    %v2009 = vlaneseq
    %v2010 = vshrl.u32 %v2009, 7
    %v2011 = vsub.s32 0, %v2010
    %v2012 = vrot.slane %v2007, %v2011
    %v2018 = vunpack.c.l.b16 %v2003
    %v2019 = vunpack.c.l.b16 %v2004
    %v2020 = vunpack.c.l.b16 %v2005
    %v2021 = vunpack.c.l.b16 %v2006
    %v2022 = vpack.c.b16 %v2019, %v2018
    %v2023 = vpack.c.b16 %v2021, %v2020
    %2026 = vmatprep.subr.bf16.mxu0 0
    %2027 = vmatpush1.bf16.msra.mxu0 %v2022
    %2028 = vmatprep.subr.bf16.mxu0 0
    %2029 = vmatpush1.bf16.msra.mxu0 %v2023
    %2030 = vmatprep.subr.bf16.mxu0 0
    %2031 = vmatpush1.bf16.msra.mxu0 0
    %2032 = vmatprep.subr.bf16.mxu0 0
    %2033 = vmatpush1.bf16.msra.mxu0 0
    %2034 = vmatprep.subr.bf16.mxu0 0
    %2035 = vmatpush1.bf16.msra.mxu0 0
    %2036 = vmatprep.subr.bf16.mxu0 0
    %2037 = vmatpush1.bf16.msra.mxu0 0
    %2038 = vmatprep.subr.bf16.mxu0 0
    %2039 = vmatpush1.bf16.msra.mxu0 0
    %2040 = vmatprep.subr.bf16.mxu0 0
    %2041 = vmatpush1.bf16.msra.mxu0 0
    %2042 = vmatprep.subr.bf16.mxu0 0
    %2043 = vmatpush1.bf16.msra.mxu0 0
    %2044 = vmatprep.subr.bf16.mxu0 0
    %2045 = vmatpush1.bf16.msra.mxu0 0
    %2046 = vmatprep.subr.bf16.mxu0 0
    %2047 = vmatpush1.bf16.msra.mxu0 0
    %2048 = vmatprep.subr.bf16.mxu0 0
    %2049 = vmatpush1.bf16.msra.mxu0 0
    %2050 = vmatprep.subr.bf16.mxu0 0
    %2051 = vmatpush1.bf16.msra.mxu0 0
    %2052 = vmatprep.subr.bf16.mxu0 0
    %2053 = vmatpush1.bf16.msra.mxu0 0
    %2054 = vmatprep.subr.bf16.mxu0 0
    %2055 = vmatpush1.bf16.msra.mxu0 0
    %2056 = vmatprep.subr.bf16.mxu0 0
    %2057 = vmatpush1.bf16.msra.mxu0 0
    %2058 = vmatprep.mubr.bf16.mxu0 0
    %2059 = vmatmul.mubr.bf16.gmra.mrb[0].mxu0 %v431
    %v2060 = vpop.f32.mrb[0].mxu0
    %v2061 = vadd.f32 %v2012, %v2060
    %v2062 = vpop.f32.mrb[0].mxu0
    %v2063 = vpop.f32.mrb[0].mxu0
    %v2064 = vadd.f32 %v2012, %v2063
    %v2065 = vpop.f32.mrb[0].mxu0
    %2066 = vmatprep.mubr.bf16.mxu0 0
    %2067 = vmatmul.mubr.bf16.gmra.mrb[0].mxu0 %v434
    %v2068 = vpop.f32.mrb[0].mxu0
    %v2069 = vadd.f32 %v2012, %v2068
    %v2070 = vpop.f32.mrb[0].mxu0
    %v2071 = vpop.f32.mrb[0].mxu0
    %v2072 = vadd.f32 %v2012, %v2071
    %v2073 = vpop.f32.mrb[0].mxu0
    %2074 = vdwg.mxu0
    %v2075 = vadd.f32 %v1999, %v2061
    %v2076 = vadd.f32 %v2000, %v2064
    %v2077 = vadd.f32 %v2001, %v2069
    %v2078 = vadd.f32 %v2002, %v2072
    %v2079 = vxor.u32 %v2075, 2147483648
    %v2080 = vxor.u32 %v2076, 2147483648
    %v2081 = vxor.u32 %v2077, 2147483648
    %v2082 = vxor.u32 %v2078, 2147483648
    %v2083 = vmul.f32 %v2079, 1.442695
    %v2084 = vpow.pop %v2083
    %v2085 = vmul.f32 %v2080, 1.442695
    %v2086 = vpow.pop %v2085
    %v2087 = vmul.f32 %v2081, 1.442695
    %v2088 = vpow.pop %v2087
    %v2089 = vmul.f32 %v2082, 1.442695
    %v2090 = vpow.pop %v2089
    %v2091 = vadd.f32 %v2084, 1.0
    %v2092 = vadd.f32 %v2086, 1.0
    %v2093 = vadd.f32 %v2088, 1.0
    %v2094 = vadd.f32 %v2090, 1.0
    %v2095 = vrcp.pop %v2091
    %v2096 = vmul.f32 1.0, %v2095
    %v2097 = vrcp.pop %v2092
    %v2098 = vmul.f32 1.0, %v2097
    %v2099 = vrcp.pop %v2093
    %v2100 = vmul.f32 1.0, %v2099
    %v2101 = vrcp.pop %v2094
    %v2102 = vmul.f32 1.0, %v2101
    %v2103 = vld [vmem:[#allocation20] sm:$0xf]
    %v2104 = vld [vmem:[#allocation20 + $0x4] sm:$0xf]
    %v2105 = vld [vmem:[#allocation20 + $0x8] sm:$0xf]
    %v2106 = vld [vmem:[#allocation20 + $0xc] sm:$0xf]
    %v2107 = vld [vmem:[#allocation25] sm:$0xf]
    %v2108 = vld [vmem:[#allocation25 + $0x4] sm:$0xf]
    %v2109 = vld [vmem:[#allocation25 + $0x8] sm:$0xf]
    %v2110 = vld [vmem:[#allocation25 + $0xc] sm:$0xf]
    %v2115 = vunpack.c.l.b16 %v2107
    %v2116 = vunpack.c.l.b16 %v2108
    %v2117 = vunpack.c.l.b16 %v2109
    %v2118 = vunpack.c.l.b16 %v2110
    %v2119 = vpack.c.b16 %v2116, %v2115
    %v2120 = vpack.c.b16 %v2118, %v2117
    %2123 = vmatprep.subr.bf16.mxu0 0
    %2124 = vmatpush1.bf16.msra.mxu0 %v2119
    %2125 = vmatprep.subr.bf16.mxu0 0
    %2126 = vmatpush1.bf16.msra.mxu0 %v2120
    %2127 = vmatprep.subr.bf16.mxu0 0
    %2128 = vmatpush1.bf16.msra.mxu0 0
    %2129 = vmatprep.subr.bf16.mxu0 0
    %2130 = vmatpush1.bf16.msra.mxu0 0
    %2131 = vmatprep.subr.bf16.mxu0 0
    %2132 = vmatpush1.bf16.msra.mxu0 0
    %2133 = vmatprep.subr.bf16.mxu0 0
    %2134 = vmatpush1.bf16.msra.mxu0 0
    %2135 = vmatprep.subr.bf16.mxu0 0
    %2136 = vmatpush1.bf16.msra.mxu0 0
    %2137 = vmatprep.subr.bf16.mxu0 0
    %2138 = vmatpush1.bf16.msra.mxu0 0
    %2139 = vmatprep.subr.bf16.mxu0 0
    %2140 = vmatpush1.bf16.msra.mxu0 0
    %2141 = vmatprep.subr.bf16.mxu0 0
    %2142 = vmatpush1.bf16.msra.mxu0 0
    %2143 = vmatprep.subr.bf16.mxu0 0
    %2144 = vmatpush1.bf16.msra.mxu0 0
    %2145 = vmatprep.subr.bf16.mxu0 0
    %2146 = vmatpush1.bf16.msra.mxu0 0
    %2147 = vmatprep.subr.bf16.mxu0 0
    %2148 = vmatpush1.bf16.msra.mxu0 0
    %2149 = vmatprep.subr.bf16.mxu0 0
    %2150 = vmatpush1.bf16.msra.mxu0 0
    %2151 = vmatprep.subr.bf16.mxu0 0
    %2152 = vmatpush1.bf16.msra.mxu0 0
    %2153 = vmatprep.subr.bf16.mxu0 0
    %2154 = vmatpush1.bf16.msra.mxu0 0
    %2155 = vmatprep.mubr.bf16.mxu0 0
    %2156 = vmatmul.mubr.bf16.gmra.mrb[0].mxu0 %v1871
    %v2157 = vpop.f32.mrb[0].mxu0
    %v2158 = vadd.f32 0.0, %v2157
    %v2159 = vpop.f32.mrb[0].mxu0
    %v2160 = vpop.f32.mrb[0].mxu0
    %v2161 = vadd.f32 0.0, %v2160
    %v2162 = vpop.f32.mrb[0].mxu0
    %2163 = vmatprep.mubr.bf16.mxu0 0
    %2164 = vmatmul.mubr.bf16.gmra.mrb[0].mxu0 %v1874
    %v2165 = vpop.f32.mrb[0].mxu0
    %v2166 = vadd.f32 0.0, %v2165
    %v2167 = vpop.f32.mrb[0].mxu0
    %v2168 = vpop.f32.mrb[0].mxu0
    %v2169 = vadd.f32 0.0, %v2168
    %v2170 = vpop.f32.mrb[0].mxu0
    %2171 = vdwg.mxu0
    %v2176 = vunpack.c.l.b16 %v2103
    %v2177 = vunpack.c.l.b16 %v2104
    %v2178 = vunpack.c.l.b16 %v2105
    %v2179 = vunpack.c.l.b16 %v2106
    %v2180 = vpack.c.b16 %v2177, %v2176
    %v2181 = vpack.c.b16 %v2179, %v2178
    %2184 = vmatprep.subr.bf16.mxu0 0
    %2185 = vmatpush1.bf16.msra.mxu0 %v2180
    %2186 = vmatprep.subr.bf16.mxu0 0
    %2187 = vmatpush1.bf16.msra.mxu0 %v2181
    %2188 = vmatprep.subr.bf16.mxu0 0
    %2189 = vmatpush1.bf16.msra.mxu0 0
    %2190 = vmatprep.subr.bf16.mxu0 0
    %2191 = vmatpush1.bf16.msra.mxu0 0
    %2192 = vmatprep.subr.bf16.mxu0 0
    %2193 = vmatpush1.bf16.msra.mxu0 0
    %2194 = vmatprep.subr.bf16.mxu0 0
    %2195 = vmatpush1.bf16.msra.mxu0 0
    %2196 = vmatprep.subr.bf16.mxu0 0
    %2197 = vmatpush1.bf16.msra.mxu0 0
    %2198 = vmatprep.subr.bf16.mxu0 0
    %2199 = vmatpush1.bf16.msra.mxu0 0
    %2200 = vmatprep.subr.bf16.mxu0 0
    %2201 = vmatpush1.bf16.msra.mxu0 0
    %2202 = vmatprep.subr.bf16.mxu0 0
    %2203 = vmatpush1.bf16.msra.mxu0 0
    %2204 = vmatprep.subr.bf16.mxu0 0
    %2205 = vmatpush1.bf16.msra.mxu0 0
    %2206 = vmatprep.subr.bf16.mxu0 0
    %2207 = vmatpush1.bf16.msra.mxu0 0
    %2208 = vmatprep.subr.bf16.mxu0 0
    %2209 = vmatpush1.bf16.msra.mxu0 0
    %2210 = vmatprep.subr.bf16.mxu0 0
    %2211 = vmatpush1.bf16.msra.mxu0 0
    %2212 = vmatprep.subr.bf16.mxu0 0
    %2213 = vmatpush1.bf16.msra.mxu0 0
    %2214 = vmatprep.subr.bf16.mxu0 0
    %2215 = vmatpush1.bf16.msra.mxu0 0
    %2216 = vmatprep.mubr.bf16.mxu0 0
    %2217 = vmatmul.mubr.bf16.gmra.mrb[0].mxu0 %v1938
    %v2218 = vpop.f32.mrb[0].mxu0
    %v2219 = vadd.f32 %v2158, %v2218
    %v2220 = vpop.f32.mrb[0].mxu0
    %v2221 = vpop.f32.mrb[0].mxu0
    %v2222 = vadd.f32 %v2161, %v2221
    %v2223 = vpop.f32.mrb[0].mxu0
    %2224 = vmatprep.mubr.bf16.mxu0 0
    %2225 = vmatmul.mubr.bf16.gmra.mrb[0].mxu0 %v1941
    %v2226 = vpop.f32.mrb[0].mxu0
    %v2227 = vadd.f32 %v2166, %v2226
    %v2228 = vpop.f32.mrb[0].mxu0
    %v2229 = vpop.f32.mrb[0].mxu0
    %v2230 = vadd.f32 %v2169, %v2229
    %v2231 = vpop.f32.mrb[0].mxu0
    %2232 = vdwg.mxu0
    %v2233 = vld [vmem:[#allocation34] sm:$0x1]
    %v2235 = vlaneseq
    %v2236 = vshrl.u32 %v2235, 7
    %v2237 = vsub.s32 0, %v2236
    %v2238 = vrot.slane %v2233, %v2237
    %v2240 = vadd.f32 %v2219, %v2238
    %v2241 = vadd.f32 %v2222, %v2238
    %v2242 = vadd.f32 %v2227, %v2238
    %v2243 = vadd.f32 %v2230, %v2238
    %v2244 = vld [vmem:[#allocation29] sm:$0xf]
    %v2245 = vld [vmem:[#allocation29 + $0x4] sm:$0xf]
    %v2246 = vld [vmem:[#allocation29 + $0x8] sm:$0xf]
    %v2247 = vld [vmem:[#allocation29 + $0xc] sm:$0xf]
    %v2248 = vld [vmem:[#allocation38] sm:$0x1]
    %v2250 = vlaneseq
    %v2251 = vshrl.u32 %v2250, 7
    %v2252 = vsub.s32 0, %v2251
    %v2253 = vrot.slane %v2248, %v2252
    %v2259 = vunpack.c.l.b16 %v2244
    %v2260 = vunpack.c.l.b16 %v2245
    %v2261 = vunpack.c.l.b16 %v2246
    %v2262 = vunpack.c.l.b16 %v2247
    %v2263 = vpack.c.b16 %v2260, %v2259
    %v2264 = vpack.c.b16 %v2262, %v2261
    %2267 = vmatprep.subr.bf16.mxu0 0
    %2268 = vmatpush1.bf16.msra.mxu0 %v2263
    %2269 = vmatprep.subr.bf16.mxu0 0
    %2270 = vmatpush1.bf16.msra.mxu0 %v2264
    %2271 = vmatprep.subr.bf16.mxu0 0
    %2272 = vmatpush1.bf16.msra.mxu0 0
    %2273 = vmatprep.subr.bf16.mxu0 0
    %2274 = vmatpush1.bf16.msra.mxu0 0
    %2275 = vmatprep.subr.bf16.mxu0 0
    %2276 = vmatpush1.bf16.msra.mxu0 0
    %2277 = vmatprep.subr.bf16.mxu0 0
    %2278 = vmatpush1.bf16.msra.mxu0 0
    %2279 = vmatprep.subr.bf16.mxu0 0
    %2280 = vmatpush1.bf16.msra.mxu0 0
    %2281 = vmatprep.subr.bf16.mxu0 0
    %2282 = vmatpush1.bf16.msra.mxu0 0
    %2283 = vmatprep.subr.bf16.mxu0 0
    %2284 = vmatpush1.bf16.msra.mxu0 0
    %2285 = vmatprep.subr.bf16.mxu0 0
    %2286 = vmatpush1.bf16.msra.mxu0 0
    %2287 = vmatprep.subr.bf16.mxu0 0
    %2288 = vmatpush1.bf16.msra.mxu0 0
    %2289 = vmatprep.subr.bf16.mxu0 0
    %2290 = vmatpush1.bf16.msra.mxu0 0
    %2291 = vmatprep.subr.bf16.mxu0 0
    %2292 = vmatpush1.bf16.msra.mxu0 0
    %2293 = vmatprep.subr.bf16.mxu0 0
    %2294 = vmatpush1.bf16.msra.mxu0 0
    %2295 = vmatprep.subr.bf16.mxu0 0
    %2296 = vmatpush1.bf16.msra.mxu0 0
    %2297 = vmatprep.subr.bf16.mxu0 0
    %2298 = vmatpush1.bf16.msra.mxu0 0
    %2299 = vmatprep.mubr.bf16.mxu0 0
    %2300 = vmatmul.mubr.bf16.gmra.mrb[0].mxu0 %v431
    %v2301 = vpop.f32.mrb[0].mxu0
    %v2302 = vadd.f32 %v2253, %v2301
    %v2303 = vpop.f32.mrb[0].mxu0
    %v2304 = vpop.f32.mrb[0].mxu0
    %v2305 = vadd.f32 %v2253, %v2304
    %v2306 = vpop.f32.mrb[0].mxu0
    %2307 = vmatprep.mubr.bf16.mxu0 0
    %2308 = vmatmul.mubr.bf16.gmra.mrb[0].mxu0 %v434
    %v2309 = vpop.f32.mrb[0].mxu0
    %v2310 = vadd.f32 %v2253, %v2309
    %v2311 = vpop.f32.mrb[0].mxu0
    %v2312 = vpop.f32.mrb[0].mxu0
    %v2313 = vadd.f32 %v2253, %v2312
    %v2314 = vpop.f32.mrb[0].mxu0
    %2315 = vdwg.mxu0
    %v2316 = vadd.f32 %v2240, %v2302
    %v2317 = vadd.f32 %v2241, %v2305
    %v2318 = vadd.f32 %v2242, %v2310
    %v2319 = vadd.f32 %v2243, %v2313
    %v2320 = vxor.u32 %v2316, 2147483648
    %v2321 = vxor.u32 %v2317, 2147483648
    %v2322 = vxor.u32 %v2318, 2147483648
    %v2323 = vxor.u32 %v2319, 2147483648
    %v2324 = vmul.f32 %v2320, 1.442695
    %v2325 = vpow.pop %v2324
    %v2326 = vmul.f32 %v2321, 1.442695
    %v2327 = vpow.pop %v2326
    %v2328 = vmul.f32 %v2322, 1.442695
    %v2329 = vpow.pop %v2328
    %v2330 = vmul.f32 %v2323, 1.442695
    %v2331 = vpow.pop %v2330
    %v2332 = vadd.f32 %v2325, 1.0
    %v2333 = vadd.f32 %v2327, 1.0
    %v2334 = vadd.f32 %v2329, 1.0
    %v2335 = vadd.f32 %v2331, 1.0
    %v2336 = vrcp.pop %v2332
    %v2337 = vmul.f32 1.0, %v2336
    %v2338 = vrcp.pop %v2333
    %v2339 = vmul.f32 1.0, %v2338
    %v2340 = vrcp.pop %v2334
    %v2341 = vmul.f32 1.0, %v2340
    %v2342 = vrcp.pop %v2335
    %v2343 = vmul.f32 1.0, %v2342
    %v2344 = vld [vmem:[#allocation22] sm:$0xf]
    %v2345 = vld [vmem:[#allocation22 + $0x4] sm:$0xf]
    %v2346 = vld [vmem:[#allocation22 + $0x8] sm:$0xf]
    %v2347 = vld [vmem:[#allocation22 + $0xc] sm:$0xf]
    %v2348 = vld [vmem:[#allocation26] sm:$0xf]
    %v2349 = vld [vmem:[#allocation26 + $0x4] sm:$0xf]
    %v2350 = vld [vmem:[#allocation26 + $0x8] sm:$0xf]
    %v2351 = vld [vmem:[#allocation26 + $0xc] sm:$0xf]
    %v2356 = vunpack.c.l.b16 %v2348
    %v2357 = vunpack.c.l.b16 %v2349
    %v2358 = vunpack.c.l.b16 %v2350
    %v2359 = vunpack.c.l.b16 %v2351
    %v2360 = vpack.c.b16 %v2357, %v2356
    %v2361 = vpack.c.b16 %v2359, %v2358
    %2364 = vmatprep.subr.bf16.mxu0 0
    %2365 = vmatpush1.bf16.msra.mxu0 %v2360
    %2366 = vmatprep.subr.bf16.mxu0 0
    %2367 = vmatpush1.bf16.msra.mxu0 %v2361
    %2368 = vmatprep.subr.bf16.mxu0 0
    %2369 = vmatpush1.bf16.msra.mxu0 0
    %2370 = vmatprep.subr.bf16.mxu0 0
    %2371 = vmatpush1.bf16.msra.mxu0 0
    %2372 = vmatprep.subr.bf16.mxu0 0
    %2373 = vmatpush1.bf16.msra.mxu0 0
    %2374 = vmatprep.subr.bf16.mxu0 0
    %2375 = vmatpush1.bf16.msra.mxu0 0
    %2376 = vmatprep.subr.bf16.mxu0 0
    %2377 = vmatpush1.bf16.msra.mxu0 0
    %2378 = vmatprep.subr.bf16.mxu0 0
    %2379 = vmatpush1.bf16.msra.mxu0 0
    %2380 = vmatprep.subr.bf16.mxu0 0
    %2381 = vmatpush1.bf16.msra.mxu0 0
    %2382 = vmatprep.subr.bf16.mxu0 0
    %2383 = vmatpush1.bf16.msra.mxu0 0
    %2384 = vmatprep.subr.bf16.mxu0 0
    %2385 = vmatpush1.bf16.msra.mxu0 0
    %2386 = vmatprep.subr.bf16.mxu0 0
    %2387 = vmatpush1.bf16.msra.mxu0 0
    %2388 = vmatprep.subr.bf16.mxu0 0
    %2389 = vmatpush1.bf16.msra.mxu0 0
    %2390 = vmatprep.subr.bf16.mxu0 0
    %2391 = vmatpush1.bf16.msra.mxu0 0
    %2392 = vmatprep.subr.bf16.mxu0 0
    %2393 = vmatpush1.bf16.msra.mxu0 0
    %2394 = vmatprep.subr.bf16.mxu0 0
    %2395 = vmatpush1.bf16.msra.mxu0 0
    %2396 = vmatprep.mubr.bf16.mxu0 0
    %2397 = vmatmul.mubr.bf16.gmra.mrb[0].mxu0 %v1871
    %v2398 = vpop.f32.mrb[0].mxu0
    %v2399 = vadd.f32 0.0, %v2398
    %v2400 = vpop.f32.mrb[0].mxu0
    %v2401 = vpop.f32.mrb[0].mxu0
    %v2402 = vadd.f32 0.0, %v2401
    %v2403 = vpop.f32.mrb[0].mxu0
    %2404 = vmatprep.mubr.bf16.mxu0 0
    %2405 = vmatmul.mubr.bf16.gmra.mrb[0].mxu0 %v1874
    %v2406 = vpop.f32.mrb[0].mxu0
    %v2407 = vadd.f32 0.0, %v2406
    %v2408 = vpop.f32.mrb[0].mxu0
    %v2409 = vpop.f32.mrb[0].mxu0
    %v2410 = vadd.f32 0.0, %v2409
    %v2411 = vpop.f32.mrb[0].mxu0
    %2412 = vdwg.mxu0
    %v2417 = vunpack.c.l.b16 %v2344
    %v2418 = vunpack.c.l.b16 %v2345
    %v2419 = vunpack.c.l.b16 %v2346
    %v2420 = vunpack.c.l.b16 %v2347
    %v2421 = vpack.c.b16 %v2418, %v2417
    %v2422 = vpack.c.b16 %v2420, %v2419
    %2425 = vmatprep.subr.bf16.mxu0 0
    %2426 = vmatpush1.bf16.msra.mxu0 %v2421
    %2427 = vmatprep.subr.bf16.mxu0 0
    %2428 = vmatpush1.bf16.msra.mxu0 %v2422
    %2429 = vmatprep.subr.bf16.mxu0 0
    %2430 = vmatpush1.bf16.msra.mxu0 0
    %2431 = vmatprep.subr.bf16.mxu0 0
    %2432 = vmatpush1.bf16.msra.mxu0 0
    %2433 = vmatprep.subr.bf16.mxu0 0
    %2434 = vmatpush1.bf16.msra.mxu0 0
    %2435 = vmatprep.subr.bf16.mxu0 0
    %2436 = vmatpush1.bf16.msra.mxu0 0
    %2437 = vmatprep.subr.bf16.mxu0 0
    %2438 = vmatpush1.bf16.msra.mxu0 0
    %2439 = vmatprep.subr.bf16.mxu0 0
    %2440 = vmatpush1.bf16.msra.mxu0 0
    %2441 = vmatprep.subr.bf16.mxu0 0
    %2442 = vmatpush1.bf16.msra.mxu0 0
    %2443 = vmatprep.subr.bf16.mxu0 0
    %2444 = vmatpush1.bf16.msra.mxu0 0
    %2445 = vmatprep.subr.bf16.mxu0 0
    %2446 = vmatpush1.bf16.msra.mxu0 0
    %2447 = vmatprep.subr.bf16.mxu0 0
    %2448 = vmatpush1.bf16.msra.mxu0 0
    %2449 = vmatprep.subr.bf16.mxu0 0
    %2450 = vmatpush1.bf16.msra.mxu0 0
    %2451 = vmatprep.subr.bf16.mxu0 0
    %2452 = vmatpush1.bf16.msra.mxu0 0
    %2453 = vmatprep.subr.bf16.mxu0 0
    %2454 = vmatpush1.bf16.msra.mxu0 0
    %2455 = vmatprep.subr.bf16.mxu0 0
    %2456 = vmatpush1.bf16.msra.mxu0 0
    %2457 = vmatprep.mubr.bf16.mxu0 0
    %2458 = vmatmul.mubr.bf16.gmra.mrb[0].mxu0 %v1938
    %v2459 = vpop.f32.mrb[0].mxu0
    %v2460 = vadd.f32 %v2399, %v2459
    %v2461 = vpop.f32.mrb[0].mxu0
    %v2462 = vpop.f32.mrb[0].mxu0
    %v2463 = vadd.f32 %v2402, %v2462
    %v2464 = vpop.f32.mrb[0].mxu0
    %2465 = vmatprep.mubr.bf16.mxu0 0
    %2466 = vmatmul.mubr.bf16.gmra.mrb[0].mxu0 %v1941
    %v2467 = vpop.f32.mrb[0].mxu0
    %v2468 = vadd.f32 %v2407, %v2467
    %v2469 = vpop.f32.mrb[0].mxu0
    %v2470 = vpop.f32.mrb[0].mxu0
    %v2471 = vadd.f32 %v2410, %v2470
    %v2472 = vpop.f32.mrb[0].mxu0
    %2473 = vdwg.mxu0
    %v2474 = vld [vmem:[#allocation35] sm:$0x1]
    %v2476 = vlaneseq
    %v2477 = vshrl.u32 %v2476, 7
    %v2478 = vsub.s32 0, %v2477
    %v2479 = vrot.slane %v2474, %v2478
    %v2481 = vadd.f32 %v2460, %v2479
    %v2482 = vadd.f32 %v2463, %v2479
    %v2483 = vadd.f32 %v2468, %v2479
    %v2484 = vadd.f32 %v2471, %v2479
    %v2485 = vld [vmem:[#allocation31] sm:$0xf]
    %v2486 = vld [vmem:[#allocation31 + $0x4] sm:$0xf]
    %v2487 = vld [vmem:[#allocation31 + $0x8] sm:$0xf]
    %v2488 = vld [vmem:[#allocation31 + $0xc] sm:$0xf]
    %v2489 = vld [vmem:[#allocation40] sm:$0x1]
    %v2491 = vlaneseq
    %v2492 = vshrl.u32 %v2491, 7
    %v2493 = vsub.s32 0, %v2492
    %v2494 = vrot.slane %v2489, %v2493
    %v2500 = vunpack.c.l.b16 %v2485
    %v2501 = vunpack.c.l.b16 %v2486
    %v2502 = vunpack.c.l.b16 %v2487
    %v2503 = vunpack.c.l.b16 %v2488
    %v2504 = vpack.c.b16 %v2501, %v2500
    %v2505 = vpack.c.b16 %v2503, %v2502
    %2508 = vmatprep.subr.bf16.mxu0 0
    %2509 = vmatpush1.bf16.msra.mxu0 %v2504
    %2510 = vmatprep.subr.bf16.mxu0 0
    %2511 = vmatpush1.bf16.msra.mxu0 %v2505
    %2512 = vmatprep.subr.bf16.mxu0 0
    %2513 = vmatpush1.bf16.msra.mxu0 0
    %2514 = vmatprep.subr.bf16.mxu0 0
    %2515 = vmatpush1.bf16.msra.mxu0 0
    %2516 = vmatprep.subr.bf16.mxu0 0
    %2517 = vmatpush1.bf16.msra.mxu0 0
    %2518 = vmatprep.subr.bf16.mxu0 0
    %2519 = vmatpush1.bf16.msra.mxu0 0
    %2520 = vmatprep.subr.bf16.mxu0 0
    %2521 = vmatpush1.bf16.msra.mxu0 0
    %2522 = vmatprep.subr.bf16.mxu0 0
    %2523 = vmatpush1.bf16.msra.mxu0 0
    %2524 = vmatprep.subr.bf16.mxu0 0
    %2525 = vmatpush1.bf16.msra.mxu0 0
    %2526 = vmatprep.subr.bf16.mxu0 0
    %2527 = vmatpush1.bf16.msra.mxu0 0
    %2528 = vmatprep.subr.bf16.mxu0 0
    %2529 = vmatpush1.bf16.msra.mxu0 0
    %2530 = vmatprep.subr.bf16.mxu0 0
    %2531 = vmatpush1.bf16.msra.mxu0 0
    %2532 = vmatprep.subr.bf16.mxu0 0
    %2533 = vmatpush1.bf16.msra.mxu0 0
    %2534 = vmatprep.subr.bf16.mxu0 0
    %2535 = vmatpush1.bf16.msra.mxu0 0
    %2536 = vmatprep.subr.bf16.mxu0 0
    %2537 = vmatpush1.bf16.msra.mxu0 0
    %2538 = vmatprep.subr.bf16.mxu0 0
    %2539 = vmatpush1.bf16.msra.mxu0 0
    %2540 = vmatprep.mubr.bf16.mxu0 0
    %2541 = vmatmul.mubr.bf16.gmra.mrb[0].mxu0 %v431
    %v2542 = vpop.f32.mrb[0].mxu0
    %v2543 = vadd.f32 %v2494, %v2542
    %v2544 = vpop.f32.mrb[0].mxu0
    %v2545 = vpop.f32.mrb[0].mxu0
    %v2546 = vadd.f32 %v2494, %v2545
    %v2547 = vpop.f32.mrb[0].mxu0
    %2548 = vmatprep.mubr.bf16.mxu0 0
    %2549 = vmatmul.mubr.bf16.gmra.mrb[0].mxu0 %v434
    %v2550 = vpop.f32.mrb[0].mxu0
    %v2551 = vadd.f32 %v2494, %v2550
    %v2552 = vpop.f32.mrb[0].mxu0
    %v2553 = vpop.f32.mrb[0].mxu0
    %v2554 = vadd.f32 %v2494, %v2553
    %v2555 = vpop.f32.mrb[0].mxu0
    %2556 = vdwg.mxu0
    %v2557 = vmul.f32 %v2096, %v2543
    %v2558 = vmul.f32 %v2098, %v2546
    %v2559 = vmul.f32 %v2100, %v2551
    %v2560 = vmul.f32 %v2102, %v2554
    %v2561 = vadd.f32 %v2481, %v2557
    %v2562 = vadd.f32 %v2482, %v2558
    %v2563 = vadd.f32 %v2483, %v2559
    %v2564 = vadd.f32 %v2484, %v2560
    %v2565 = vtanh.pop %v2561
    %v2566 = vtanh.pop %v2562
    %v2567 = vtanh.pop %v2563
    %v2568 = vtanh.pop %v2564
    %v2569 = vsub.f32 1.0, %v2337
    %v2570 = vsub.f32 1.0, %v2339
    %v2571 = vsub.f32 1.0, %v2341
    %v2572 = vsub.f32 1.0, %v2343
    %v2573 = vmul.f32 %v2569, %v2565
    %v2574 = vmul.f32 %v2570, %v2566
    %v2575 = vmul.f32 %v2571, %v2567
    %v2576 = vmul.f32 %v2572, %v2568
    %v2577 = vmul.f32 %v2337, %v400
    %v2578 = vmul.f32 %v2339, %v401
    %v2579 = vmul.f32 %v2341, %v402
    %v2580 = vmul.f32 %v2343, %v403
    %v2581 = vadd.f32 %v2573, %v2577
    %v2582 = vadd.f32 %v2574, %v2578
    %v2583 = vadd.f32 %v2575, %v2579
    %v2584 = vadd.f32 %v2576, %v2580
    %2585 = vst.msk [vmem:[#allocation41] sm:$0xff] %vm429, %v2581
    %2586 = vst.msk [vmem:[#allocation41 + $0x8] sm:$0xff] %vm429, %v2582
    %2587 = vst.msk [vmem:[#allocation41 + $0x10] sm:$0xff] %vm429, %v2583
    %2588 = vst.msk [vmem:[#allocation41 + $0x18] sm:$0xff] %vm429, %v2584
    // Predicated region
    $region202: #{conv_nmp_block.1} parent=1 // pred_check
      _
    $region203: #{conv_nmp_block.1} parent=1 // pred_check_branch
      %2590 = sbr.rel (0) target = $region205
    $region204: #{conv_nmp_block.1} parent=1 // pred_region
      %s2592 = ssub.s32 512, 512
      %2593 = vsyncadd [#allocation4], %s2592
      %s2594 = sshll.u32 [#allocation41], 4
      %s2595 = int_to_ptr.vmem [resolvable:$true] %s2594
      %2600 = dma.vmem_to_hbm [thread:$0]  %s2595, 512, %s25, [#allocation4], 128, 128, 8
    $region205: #{conv_nmp_block.1} parent=1 // pred_fallthru
      _
    // Predicated region
    $region206: #{conv_nmp_block.1} parent=1 // pred_check
      _
    $region207: #{conv_nmp_block.1} parent=1 // pred_check_branch
      %2602 = sbr.rel (0) target = $region209
    $region208: #{conv_nmp_block.1} parent=1 // pred_region
      %2603 = dma.done [#allocation4], 512
    $region209: #{conv_nmp_block.1} parent=1 // pred_fallthru
      _
    %2604 = vsyncpa [#allocation3], 1
    %2605 = vsyncpa [#allocation6], 1
    %2606 = vsyncpa [#allocation9], 1
    %2607 = vsyncpa [#allocation12], 1
    %2608 = vsyncpa [#allocation15], 1
    %2609 = vsyncpa [#allocation18], 1
    %2610 = vsyncpa [#allocation21], 1
    %2611 = vsyncpa [#allocation24], 1
    %2612 = vsyncpa [#allocation27], 1
    %2613 = vsyncpa [#allocation30], 1
    %2614 = vsyncpa [#allocation33], 1
    %2615 = vsyncpa [#allocation36], 1
    %2616 = vsyncpa [#allocation39], 1
    %2617 = vsyncpa [#allocation4], 1

</llo_original>
